<compile_context>
chip_gen: v7x
topology: tpu7x:2x2x1
jax: 0.10.0
libtpu: 0.0.40
codegen_flags: <defaults>
</compile_context>

<pallas_src>
import functools

import jax
import jax.numpy as jnp
from jax import lax
from jax.experimental import pallas as pl
from jax.experimental.pallas import tpu as pltpu


def _round_up(x, m):
    return ((x + m - 1) // m) * m


# --------------------------------------------------------------------------- #
# Fused kernel: XW precompute -> LSTM recurrence -> vocab projection
# --------------------------------------------------------------------------- #
def _char_decoder_kernel(x_ref, h0_ref, c0_ref, wih_ref, whh_ref, b_ref,
                         wproj_ref, bproj_ref,
                         scores_ref, lasth_ref, lastc_ref,
                         xw_sc, hid_sc, h_sc, c_sc,
                         *, seq_len, t_blk, b_blk, h_pad):
    t = pl.program_id(1)                       # time-block index (inner, "arbitrary")

    @pl.when(t == 0)
    def _():
        h_sc[...] = h0_ref[...]                # f32 carry init (new batch block too)
        c_sc[...] = c0_ref[...]

    # ---- hoisted input projection: one big MXU matmul per time block (bias folded) ----
    x2d = x_ref[...].reshape(t_blk * b_blk, x_ref.shape[-1])          # bf16
    xw = (jnp.dot(x2d, wih_ref[...], preferred_element_type=jnp.float32)
          + b_ref[...])                                               # f32 (T*B, 4H)
    xw_sc[...] = xw.reshape(t_blk, b_blk, 4 * h_pad)

    whh = whh_ref[...]                         # (H_pad, 4*H_pad) bf16, resident
    t0 = t * t_blk

    def step(i, carry):
        h, c = carry                           # f32 (b_blk, H_pad)
        gates = xw_sc[i] + jnp.dot(h.astype(jnp.bfloat16), whh,
                                   preferred_element_type=jnp.float32)
        # Lane-aligned gate slices (each gate block starts at a multiple of H_pad).
        i_g = jax.nn.sigmoid(gates[:, 0 * h_pad:1 * h_pad])
        f_g = jax.nn.sigmoid(gates[:, 1 * h_pad:2 * h_pad])
        g_g = jnp.tanh(gates[:, 2 * h_pad:3 * h_pad])
        o_g = jax.nn.sigmoid(gates[:, 3 * h_pad:4 * h_pad])
        c_new = f_g * c + i_g * g_g
        h_new = o_g * jnp.tanh(c_new)
        hid_sc[i] = h_new.astype(hid_sc.dtype)
        # Freeze the carry past the true sequence length (time padding).
        valid = (t0 + i) < seq_len
        h = jnp.where(valid, h_new, h)
        c = jnp.where(valid, c_new, c)
        return (h, c)

    unroll = True if t_blk <= 16 else 4        # keep vreg pressure in check
    h, c = lax.fori_loop(0, t_blk, step, (h_sc[...], c_sc[...]), unroll=unroll)
    h_sc[...] = h
    c_sc[...] = c

    @pl.when(t == pl.num_programs(1) - 1)      # write resident outputs once
    def _():
        lasth_ref[...] = h
        lastc_ref[...] = c

    # ---- fused vocab projection: lane-dense MXU matmul on the whole hidden slab ----
    hid2d = hid_sc[...].reshape(t_blk * b_blk, h_pad)                 # bf16
    scores = (jnp.dot(hid2d, wproj_ref[...], preferred_element_type=jnp.float32)
              + bproj_ref[...])
    scores_ref[...] = scores.reshape(t_blk, b_blk, scores_ref.shape[-1])


# --------------------------------------------------------------------------- #
# Wrapper
# --------------------------------------------------------------------------- #
def char_decoder_forward(input_ids, params, dec_hidden=None, *,
                         time_block=128, batch_blocks=1):
    """Pallas equivalent of CharDecoder.forward.

    input_ids: int32 (length, batch)
    dec_hidden: optional tuple (h0, c0), each (1, batch, hidden)
    returns: (scores (length, batch, vocab), (last_h (1,B,H), last_c (1,B,H)))

    batch_blocks: keep 1 on v5e/v6e (single TensorCore); 2 for v7x megacore.
    """
    L, B = input_ids.shape
    H = params["hidden_size"]
    V = params["vocab_size"]
    E_pad = params["emb_pad"].shape[1]
    H_pad = params["w_hh_t"].shape[0]
    V_pad = params["w_proj_t"].shape[1]

    # ---- batch blocking: bf16 native tile wants sublane multiples of 16 ----
    nb = max(1, int(batch_blocks))
    b16 = _round_up(B, 16)
    b_blk = _round_up(-(-b16 // nb), 16)
    B_pad = nb * b_blk

    # ---- time blocking (amortize ~600-cycle per-grid-step overhead) ----
    t_blk = max(1, min(time_block, L))
    L_pad = _round_up(L, t_blk)
    nt = L_pad // t_blk

    # ---- embedding lookup (glue; padding_idx row of emb is already zero) ----
    X = jnp.take(params["emb_pad"], input_ids, axis=0)        # (L, B, E_pad) bf16
    X = jnp.pad(X, ((0, L_pad - L), (0, B_pad - B), (0, 0)))

    h0 = jnp.zeros((B_pad, H_pad), jnp.float32)
    c0 = jnp.zeros((B_pad, H_pad), jnp.float32)
    if dec_hidden is not None:
        h0 = h0.at[:B, :H].set(dec_hidden[0].reshape(B, H).astype(jnp.float32))
        c0 = c0.at[:B, :H].set(dec_hidden[1].reshape(B, H).astype(jnp.float32))

    # ---- VMEM budget derived from actual buffer sizes (v7x: 64 MiB/TC) ----
    x_bytes = t_blk * b_blk * E_pad * 2
    sc_bytes = t_blk * b_blk * V_pad * 4
    w_bytes = (E_pad * 4 * H_pad * 2 + H_pad * 4 * H_pad * 2 + 4 * H_pad * 4
               + H_pad * V_pad * 2 + V_pad * 4)
    carry_io = 4 * b_blk * H_pad * 4
    scratch = (t_blk * b_blk * 4 * H_pad * 4 + t_blk * b_blk * H_pad * 2
               + 2 * b_blk * H_pad * 4)
    vmem_limit = min(96 * 2**20,
                     max(16 * 2**20,
                         int(2 * (x_bytes + sc_bytes + w_bytes + carry_io)
                             + scratch + 4 * 2**20)))

    grid_spec = pltpu.PrefetchScalarGridSpec(
        num_scalar_prefetch=0,
        grid=(nb, nt),
        in_specs=[
            pl.BlockSpec((t_blk, b_blk, E_pad), lambda b, t: (t, b, 0)),   # X block
            pl.BlockSpec((b_blk, H_pad), lambda b, t: (b, 0)),             # h0
            pl.BlockSpec((b_blk, H_pad), lambda b, t: (b, 0)),             # c0
            pl.BlockSpec((E_pad, 4 * H_pad), lambda b, t: (0, 0)),         # W_ih^T
            pl.BlockSpec((H_pad, 4 * H_pad), lambda b, t: (0, 0)),         # W_hh^T
            pl.BlockSpec((1, 4 * H_pad), lambda b, t: (0, 0)),             # b_ih+b_hh
            pl.BlockSpec((H_pad, V_pad), lambda b, t: (0, 0)),             # W_proj^T
            pl.BlockSpec((1, V_pad), lambda b, t: (0, 0)),                 # b_proj
        ],
        out_specs=[
            pl.BlockSpec((t_blk, b_blk, V_pad), lambda b, t: (t, b, 0)),   # scores
            pl.BlockSpec((b_blk, H_pad), lambda b, t: (b, 0)),             # last_h
            pl.BlockSpec((b_blk, H_pad), lambda b, t: (b, 0)),             # last_c
        ],
        scratch_shapes=[
            pltpu.VMEM((t_blk, b_blk, 4 * H_pad), jnp.float32),            # XW + bias
            pltpu.VMEM((t_blk, b_blk, H_pad), jnp.bfloat16),               # hidden slab
            pltpu.VMEM((b_blk, H_pad), jnp.float32),                       # h carry
            pltpu.VMEM((b_blk, H_pad), jnp.float32),                       # c carry
        ],
    )

    scores_pad, last_h, last_c = pl.pallas_call(
        functools.partial(_char_decoder_kernel, seq_len=L, t_blk=t_blk,
                          b_blk=b_blk, h_pad=H_pad),
        out_shape=(
            jax.ShapeDtypeStruct((L_pad, B_pad, V_pad), jnp.float32),
            jax.ShapeDtypeStruct((B_pad, H_pad), jnp.float32),
            jax.ShapeDtypeStruct((B_pad, H_pad), jnp.float32),
        ),
        grid_spec=grid_spec,
        compiler_params=pltpu.CompilerParams(
            dimension_semantics=("parallel", "arbitrary"),
            vmem_limit_bytes=vmem_limit,
        ),
    )(X, h0, c0, params["w_ih_t"], params["w_hh_t"], params["b_gates"],
      params["w_proj_t"], params["b_proj"])

    scores = scores_pad[:L, :B, :V]
    return scores, (last_h[:B, :H][None], last_c[:B, :H][None])


# --------------------------------------------------------------------------- #
# Parameters (PyTorch-layout randoms, packed/padded/bf16 for the kernel)
# --------------------------------------------------------------------------- #
def make_params(key, vocab_size, char_embedding_size, hidden_size, pad_idx=0):
    ks = jax.random.split(key, 7)
    scale = 0.1
    E, H, V = char_embedding_size, hidden_size, vocab_size
    emb = scale * jax.random.normal(ks[0], (V, E), jnp.float32)
    emb = emb.at[pad_idx].set(0.0)                                  # padding_idx row
    w_ih = scale * jax.random.normal(ks[1], (4 * H, E), jnp.float32)  # PyTorch layout
    w_hh = scale * jax.random.normal(ks[2], (4 * H, H), jnp.float32)
    b_ih = scale * jax.random.normal(ks[3], (4 * H,), jnp.float32)
    b_hh = scale * jax.random.normal(ks[4], (4 * H,), jnp.float32)
    w_proj = scale * jax.random.normal(ks[5], (V, H), jnp.float32)
    b_proj = scale * jax.random.normal(ks[6], (V,), jnp.float32)

    E_pad = _round_up(E, 128)
    H_pad = _round_up(H, 128)
    V_pad = _round_up(V, 128)

    # Gate k (PyTorch order i,f,g,o) occupies lane-aligned columns [k*H_pad, k*H_pad+H).
    w_ih_t = jnp.zeros((E_pad, 4 * H_pad), jnp.float32)
    w_hh_t = jnp.zeros((H_pad, 4 * H_pad), jnp.float32)
    b_gates = jnp.zeros((1, 4 * H_pad), jnp.float32)
    for k in range(4):
        w_ih_t = w_ih_t.at[:E, k * H_pad:k * H_pad + H].set(w_ih[k * H:(k + 1) * H].T)
        w_hh_t = w_hh_t.at[:H, k * H_pad:k * H_pad + H].set(w_hh[k * H:(k + 1) * H].T)
        b_gates = b_gates.at[0, k * H_pad:k * H_pad + H].set(
            b_ih[k * H:(k + 1) * H] + b_hh[k * H:(k + 1) * H])

    emb_pad = jnp.zeros((V, E_pad), jnp.float32).at[:, :E].set(emb)
    w_proj_t = jnp.zeros((H_pad, V_pad), jnp.float32).at[:H, :V].set(w_proj.T)
    b_proj_p = jnp.zeros((1, V_pad), jnp.float32).at[0, :V].set(b_proj)

    return {
        # kernel-ready (padded; MXU operands pre-cast to bf16)
        "emb_pad": emb_pad.astype(jnp.bfloat16),
        "w_ih_t": w_ih_t.astype(jnp.bfloat16),
        "w_hh_t": w_hh_t.astype(jnp.bfloat16),
        "b_gates": b_gates,
        "w_proj_t": w_proj_t.astype(jnp.bfloat16),
        "b_proj": b_proj_p,
        "hidden_size": H,
        "vocab_size": V,
        "embed_size": E,
        # raw f32 copies for the pure-JAX reference
        "raw": {"emb": emb, "w_ih": w_ih, "w_hh": w_hh, "b_ih": b_ih,
                "b_hh": b_hh, "w_proj": w_proj, "b_proj": b_proj},
    }


# --------------------------------------------------------------------------- #
# Pure-JAX reference (PyTorch nn.LSTM + Linear semantics, bf16 MXU inputs mirrored)
# --------------------------------------------------------------------------- #
def _reference_forward(input_ids, params, dec_hidden=None):
    raw = params["raw"]
    L, B = input_ids.shape
    H = params["hidden_size"]
    V = params["vocab_size"]
    X = jnp.take(raw["emb"], input_ids, axis=0)
    w_ih_t = raw["w_ih"].T.astype(jnp.bfloat16)
    w_hh_t = raw["w_hh"].T.astype(jnp.bfloat16)
    bias = raw["b_ih"] + raw["b_hh"]
    if dec_hidden is None:
        h = jnp.zeros((B, H), jnp.float32)
        c = jnp.zeros((B, H), jnp.float32)
    else:
        h = dec_hidden[0].reshape(B, H).astype(jnp.float32)
        c = dec_hidden[1].reshape(B, H).astype(jnp.float32)

    def step(carry, x_t):
        h, c = carry
        gates = (jnp.dot(x_t.astype(jnp.bfloat16), w_ih_t,
                         preferred_element_type=jnp.float32)
                 + jnp.dot(h.astype(jnp.bfloat16), w_hh_t,
                           preferred_element_type=jnp.float32)
                 + bias)
        i = jax.nn.sigmoid(gates[:, 0 * H:1 * H])
        f = jax.nn.sigmoid(gates[:, 1 * H:2 * H])
        g = jnp.tanh(gates[:, 2 * H:3 * H])
        o = jax.nn.sigmoid(gates[:, 3 * H:4 * H])
        c = f * c + i * g
        h = o * jnp.tanh(c)
        return (h, c), h

    (h, c), hidden = jax.lax.scan(step, (h, c), X)
    s = jnp.dot(hidden.astype(jnp.bfloat16).reshape(-1, H),
                raw["w_proj"].T.astype(jnp.bfloat16),
                preferred_element_type=jnp.float32).reshape(L, B, V) + raw["b_proj"]
    return s, (h[None], c[None])


if __name__ == "__main__":
    LENGTH, BATCH = 8, 4
    HIDDEN, EMBED, VOCAB = 32, 50, 30
    PAD_IDX = 0

    key = jax.random.PRNGKey(0)
    k_par, k_inp, k_h, k_c = jax.random.split(key, 4)

    params = make_params(k_par, VOCAB, EMBED, HIDDEN, pad_idx=PAD_IDX)
    input_ids = jax.random.randint(k_inp, (LENGTH, BATCH), 0, VOCAB, dtype=jnp.int32)
    dec_hidden = (0.1 * jax.random.normal(k_h, (1, BATCH, HIDDEN), jnp.float32),
                  0.1 * jax.random.normal(k_c, (1, BATCH, HIDDEN), jnp.float32))

    scores, (last_h, last_c) = char_decoder_forward(input_ids, params, dec_hidden)
    jax.block_until_ready((scores, last_h, last_c))

    ref_s, (ref_h, ref_c) = _reference_forward(input_ids, params, dec_hidden)
    assert scores.shape == (LENGTH, BATCH, VOCAB)
    assert last_h.shape == (1, BATCH, HIDDEN) and last_c.shape == (1, BATCH, HIDDEN)
    assert jnp.allclose(scores, ref_s, atol=2e-3, rtol=2e-3)
    assert jnp.allclose(last_h, ref_h, atol=2e-3, rtol=2e-3)
    assert jnp.allclose(last_c, ref_c, atol=2e-3, rtol=2e-3)

    print("KERNEL_OK")
</pallas_src>

<mosaic_0001>
module attributes {stable_mosaic.version = 11 : i64} {
  func.func @_char_decoder_kernel(%arg0: i32, %arg1: i32, %arg2: memref<8x16x128xbf16, #tpu.memory_space<vmem>>, %arg3: memref<16x128xf32, #tpu.memory_space<vmem>>, %arg4: memref<16x128xf32, #tpu.memory_space<vmem>>, %arg5: memref<128x512xbf16, #tpu.memory_space<vmem>>, %arg6: memref<128x512xbf16, #tpu.memory_space<vmem>>, %arg7: memref<1x512xf32, #tpu.memory_space<vmem>>, %arg8: memref<128x128xbf16, #tpu.memory_space<vmem>>, %arg9: memref<1x128xf32, #tpu.memory_space<vmem>>, %arg10: memref<8x16x128xf32, #tpu.memory_space<vmem>>, %arg11: memref<16x128xf32, #tpu.memory_space<vmem>>, %arg12: memref<16x128xf32, #tpu.memory_space<vmem>>, %arg13: memref<8x16x512xf32, #tpu.memory_space<vmem>>, %arg14: memref<8x16x128xbf16, #tpu.memory_space<vmem>>, %arg15: memref<16x128xf32, #tpu.memory_space<vmem>>, %arg16: memref<16x128xf32, #tpu.memory_space<vmem>>) attributes {dimension_semantics = [#tpu.dimension_semantics<parallel>, #tpu.dimension_semantics<arbitrary>], iteration_bounds = array<i64: 1, 1>, scalar_prefetch = 0 : i64, scratch_operands = 4 : i64, tpu.core_type = #tpu.core_type<tc>, window_params = [{transform_indices = @transform_0, window_bounds = array<i64: 8, 16, 128>}, {transform_indices = @transform_1, window_bounds = array<i64: 16, 128>}, {transform_indices = @transform_2, window_bounds = array<i64: 16, 128>}, {pipeline_mode = #tpu.pipeline_mode<synchronous>, transform_indices = @transform_3, window_bounds = array<i64: 128, 512>}, {pipeline_mode = #tpu.pipeline_mode<synchronous>, transform_indices = @transform_4, window_bounds = array<i64: 128, 512>}, {pipeline_mode = #tpu.pipeline_mode<synchronous>, transform_indices = @transform_5, window_bounds = array<i64: 1, 512>}, {pipeline_mode = #tpu.pipeline_mode<synchronous>, transform_indices = @transform_6, window_bounds = array<i64: 128, 128>}, {pipeline_mode = #tpu.pipeline_mode<synchronous>, transform_indices = @transform_7, window_bounds = array<i64: 1, 128>}, {transform_indices = @transform_8, window_bounds = array<i64: 8, 16, 128>}, {transform_indices = @transform_9, window_bounds = array<i64: 16, 128>}, {transform_indices = @transform_10, window_bounds = array<i64: 16, 128>}]} {
    %c0_i32 = arith.constant 0 : i32
    %0 = arith.cmpi eq, %arg1, %c0_i32 : i32
    %1 = arith.extui %0 : i1 to i32
    %c0_i32_0 = arith.constant 0 : i32
    %2 = arith.cmpi ne, %1, %c0_i32_0 : i32
    scf.if %2 {
      %c0_107 = arith.constant 0 : index
      %c0_108 = arith.constant 0 : index
      %350 = vector.load %arg3[%c0_107, %c0_108] : memref<16x128xf32, #tpu.memory_space<vmem>>, vector<16x128xf32>
      %c0_109 = arith.constant 0 : index
      %c0_110 = arith.constant 0 : index
      %351 = vector.load %arg15[%c0_109, %c0_110] : memref<16x128xf32, #tpu.memory_space<vmem>>, vector<16x128xf32>
      tpu.vector_store %arg15[%c0_109, %c0_110], %350 {strides = array<i32>} : memref<16x128xf32, #tpu.memory_space<vmem>>, vector<16x128xf32>,
      %c0_111 = arith.constant 0 : index
      %c0_112 = arith.constant 0 : index
      %352 = vector.load %arg4[%c0_111, %c0_112] : memref<16x128xf32, #tpu.memory_space<vmem>>, vector<16x128xf32>
      %c0_113 = arith.constant 0 : index
      %c0_114 = arith.constant 0 : index
      %353 = vector.load %arg16[%c0_113, %c0_114] : memref<16x128xf32, #tpu.memory_space<vmem>>, vector<16x128xf32>
      tpu.vector_store %arg16[%c0_113, %c0_114], %352 {strides = array<i32>} : memref<16x128xf32, #tpu.memory_space<vmem>>, vector<16x128xf32>,
    } else {
    }
    %c0 = arith.constant 0 : index
    %c0_1 = arith.constant 0 : index
    %c0_2 = arith.constant 0 : index
    %3 = vector.load %arg2[%c0, %c0_1, %c0_2] : memref<8x16x128xbf16, #tpu.memory_space<vmem>>, vector<8x16x128xbf16>
    %4 = vector.shape_cast %3 : vector<8x16x128xbf16> to vector<128x128xbf16>
    %c0_3 = arith.constant 0 : index
    %c0_4 = arith.constant 0 : index
    %5 = vector.load %arg5[%c0_3, %c0_4] : memref<128x512xbf16, #tpu.memory_space<vmem>>, vector<128x512xbf16>
    %cst = arith.constant dense<0.000000e+00> : vector<128x512xf32>
    %6 = tpu.matmul %4, %5, %cst {dimension_numbers = #tpu.dot_dimension_numbers<[1], [0], [0], [1], [0, 0, 1, 1], [], []>} : vector<128x128xbf16>, vector<128x512xbf16>, vector<128x512xf32> -> vector<128x512xf32>
    %c0_5 = arith.constant 0 : index
    %c0_6 = arith.constant 0 : index
    %7 = vector.load %arg7[%c0_5, %c0_6] : memref<1x512xf32, #tpu.memory_space<vmem>>, vector<1x512xf32>
    %8 = vector.broadcast %7 : vector<1x512xf32> to vector<128x512xf32>
    %9 = arith.addf %6, %8 : vector<128x512xf32>
    %10 = vector.shape_cast %9 : vector<128x512xf32> to vector<8x16x512xf32>
    %c0_7 = arith.constant 0 : index
    %c0_8 = arith.constant 0 : index
    %c0_9 = arith.constant 0 : index
    %11 = vector.load %arg13[%c0_7, %c0_8, %c0_9] : memref<8x16x512xf32, #tpu.memory_space<vmem>>, vector<8x16x512xf32>
    tpu.vector_store %arg13[%c0_7, %c0_8, %c0_9], %10 {strides = array<i32>} : memref<8x16x512xf32, #tpu.memory_space<vmem>>, vector<8x16x512xf32>,
    %c0_10 = arith.constant 0 : index
    %c0_11 = arith.constant 0 : index
    %12 = vector.load %arg6[%c0_10, %c0_11] : memref<128x512xbf16, #tpu.memory_space<vmem>>, vector<128x512xbf16>
    %c8_i32 = arith.constant 8 : i32
    %13 = arith.muli %arg1, %c8_i32 : i32
    %c0_12 = arith.constant 0 : index
    %c0_13 = arith.constant 0 : index
    %14 = vector.load %arg15[%c0_12, %c0_13] : memref<16x128xf32, #tpu.memory_space<vmem>>, vector<16x128xf32>
    %c0_14 = arith.constant 0 : index
    %c0_15 = arith.constant 0 : index
    %15 = vector.load %arg16[%c0_14, %c0_15] : memref<16x128xf32, #tpu.memory_space<vmem>>, vector<16x128xf32>
    %c0_i32_16 = arith.constant 0 : i32
    %16 = arith.index_cast %c0_i32_16 : i32 to index
    %c0_17 = arith.constant 0 : index
    %c0_18 = arith.constant 0 : index
    %17 = vector.load %arg13[%16, %c0_17, %c0_18] : memref<8x16x512xf32, #tpu.memory_space<vmem>>, vector<1x16x512xf32>
    %18 = vector.shape_cast %17 : vector<1x16x512xf32> to vector<16x512xf32>
    %19 = arith.truncf %14 : vector<16x128xf32> to vector<16x128xbf16>
    %cst_19 = arith.constant dense<0.000000e+00> : vector<16x512xf32>
    %20 = tpu.matmul %19, %12, %cst_19 {dimension_numbers = #tpu.dot_dimension_numbers<[1], [0], [0], [1], [0, 0, 1, 1], [], []>} : vector<16x128xbf16>, vector<128x512xbf16>, vector<16x512xf32> -> vector<16x512xf32>
    %21 = arith.addf %18, %20 : vector<16x512xf32>
    %22 = vector.extract_strided_slice %21 {offsets = [0, 0], sizes = [16, 128], strides = [1, 1]} : vector<16x512xf32> to vector<16x128xf32>
    %23 = arith.negf %22 : vector<16x128xf32>
    %24 = math.exp %23 : vector<16x128xf32>
    %cst_20 = arith.constant 1.000000e+00 : f32
    %25 = vector.broadcast %cst_20 : f32 to vector<16x128xf32>
    %26 = arith.addf %25, %24 : vector<16x128xf32>
    %27 = arith.divf %25, %26 : vector<16x128xf32>
    %28 = vector.extract_strided_slice %21 {offsets = [0, 128], sizes = [16, 128], strides = [1, 1]} : vector<16x512xf32> to vector<16x128xf32>
    %29 = arith.negf %28 : vector<16x128xf32>
    %30 = math.exp %29 : vector<16x128xf32>
    %cst_21 = arith.constant 1.000000e+00 : f32
    %31 = vector.broadcast %cst_21 : f32 to vector<16x128xf32>
    %32 = arith.addf %31, %30 : vector<16x128xf32>
    %33 = arith.divf %31, %32 : vector<16x128xf32>
    %34 = vector.extract_strided_slice %21 {offsets = [0, 256], sizes = [16, 128], strides = [1, 1]} : vector<16x512xf32> to vector<16x128xf32>
    %35 = math.tanh %34 : vector<16x128xf32>
    %36 = vector.extract_strided_slice %21 {offsets = [0, 384], sizes = [16, 128], strides = [1, 1]} : vector<16x512xf32> to vector<16x128xf32>
    %37 = arith.negf %36 : vector<16x128xf32>
    %38 = math.exp %37 : vector<16x128xf32>
    %cst_22 = arith.constant 1.000000e+00 : f32
    %39 = vector.broadcast %cst_22 : f32 to vector<16x128xf32>
    %40 = arith.addf %39, %38 : vector<16x128xf32>
    %41 = arith.divf %39, %40 : vector<16x128xf32>
    %42 = arith.mulf %33, %15 : vector<16x128xf32>
    %43 = arith.mulf %27, %35 : vector<16x128xf32>
    %44 = arith.addf %42, %43 : vector<16x128xf32>
    %45 = math.tanh %44 : vector<16x128xf32>
    %46 = arith.mulf %41, %45 : vector<16x128xf32>
    %47 = arith.truncf %46 : vector<16x128xf32> to vector<16x128xbf16>
    %48 = arith.index_cast %c0_i32_16 : i32 to index
    %c0_23 = arith.constant 0 : index
    %c0_24 = arith.constant 0 : index
    %49 = vector.load %arg14[%48, %c0_23, %c0_24] : memref<8x16x128xbf16, #tpu.memory_space<vmem>>, vector<1x16x128xbf16>
    %50 = vector.shape_cast %49 : vector<1x16x128xbf16> to vector<16x128xbf16>
    %51 = vector.shape_cast %47 : vector<16x128xbf16> to vector<1x16x128xbf16>
    tpu.vector_store %arg14[%48, %c0_23, %c0_24], %51 {strides = array<i32>} : memref<8x16x128xbf16, #tpu.memory_space<vmem>>, vector<1x16x128xbf16>,
    %52 = arith.addi %13, %c0_i32_16 : i32
    %c8_i32_25 = arith.constant 8 : i32
    %53 = arith.cmpi slt, %52, %c8_i32_25 : i32
    %54 = arith.select %53, %46, %14 : vector<16x128xf32>
    %55 = arith.select %53, %44, %15 : vector<16x128xf32>
    %c1_i32 = arith.constant 1 : i32
    %56 = arith.index_cast %c1_i32 : i32 to index
    %c0_26 = arith.constant 0 : index
    %c0_27 = arith.constant 0 : index
    %57 = vector.load %arg13[%56, %c0_26, %c0_27] : memref<8x16x512xf32, #tpu.memory_space<vmem>>, vector<1x16x512xf32>
    %58 = vector.shape_cast %57 : vector<1x16x512xf32> to vector<16x512xf32>
    %59 = arith.truncf %54 : vector<16x128xf32> to vector<16x128xbf16>
    %cst_28 = arith.constant dense<0.000000e+00> : vector<16x512xf32>
    %60 = tpu.matmul %59, %12, %cst_28 {dimension_numbers = #tpu.dot_dimension_numbers<[1], [0], [0], [1], [0, 0, 1, 1], [], []>} : vector<16x128xbf16>, vector<128x512xbf16>, vector<16x512xf32> -> vector<16x512xf32>
    %61 = arith.addf %58, %60 : vector<16x512xf32>
    %62 = vector.extract_strided_slice %61 {offsets = [0, 0], sizes = [16, 128], strides = [1, 1]} : vector<16x512xf32> to vector<16x128xf32>
    %63 = arith.negf %62 : vector<16x128xf32>
    %64 = math.exp %63 : vector<16x128xf32>
    %cst_29 = arith.constant 1.000000e+00 : f32
    %65 = vector.broadcast %cst_29 : f32 to vector<16x128xf32>
    %66 = arith.addf %65, %64 : vector<16x128xf32>
    %67 = arith.divf %65, %66 : vector<16x128xf32>
    %68 = vector.extract_strided_slice %61 {offsets = [0, 128], sizes = [16, 128], strides = [1, 1]} : vector<16x512xf32> to vector<16x128xf32>
    %69 = arith.negf %68 : vector<16x128xf32>
    %70 = math.exp %69 : vector<16x128xf32>
    %cst_30 = arith.constant 1.000000e+00 : f32
    %71 = vector.broadcast %cst_30 : f32 to vector<16x128xf32>
    %72 = arith.addf %71, %70 : vector<16x128xf32>
    %73 = arith.divf %71, %72 : vector<16x128xf32>
    %74 = vector.extract_strided_slice %61 {offsets = [0, 256], sizes = [16, 128], strides = [1, 1]} : vector<16x512xf32> to vector<16x128xf32>
    %75 = math.tanh %74 : vector<16x128xf32>
    %76 = vector.extract_strided_slice %61 {offsets = [0, 384], sizes = [16, 128], strides = [1, 1]} : vector<16x512xf32> to vector<16x128xf32>
    %77 = arith.negf %76 : vector<16x128xf32>
    %78 = math.exp %77 : vector<16x128xf32>
    %cst_31 = arith.constant 1.000000e+00 : f32
    %79 = vector.broadcast %cst_31 : f32 to vector<16x128xf32>
    %80 = arith.addf %79, %78 : vector<16x128xf32>
    %81 = arith.divf %79, %80 : vector<16x128xf32>
    %82 = arith.mulf %73, %55 : vector<16x128xf32>
    %83 = arith.mulf %67, %75 : vector<16x128xf32>
    %84 = arith.addf %82, %83 : vector<16x128xf32>
    %85 = math.tanh %84 : vector<16x128xf32>
    %86 = arith.mulf %81, %85 : vector<16x128xf32>
    %87 = arith.truncf %86 : vector<16x128xf32> to vector<16x128xbf16>
    %88 = arith.index_cast %c1_i32 : i32 to index
    %c0_32 = arith.constant 0 : index
    %c0_33 = arith.constant 0 : index
    %89 = vector.load %arg14[%88, %c0_32, %c0_33] : memref<8x16x128xbf16, #tpu.memory_space<vmem>>, vector<1x16x128xbf16>
    %90 = vector.shape_cast %89 : vector<1x16x128xbf16> to vector<16x128xbf16>
    %91 = vector.shape_cast %87 : vector<16x128xbf16> to vector<1x16x128xbf16>
    tpu.vector_store %arg14[%88, %c0_32, %c0_33], %91 {strides = array<i32>} : memref<8x16x128xbf16, #tpu.memory_space<vmem>>, vector<1x16x128xbf16>,
    %92 = arith.addi %13, %c1_i32 : i32
    %c8_i32_34 = arith.constant 8 : i32
    %93 = arith.cmpi slt, %92, %c8_i32_34 : i32
    %94 = arith.select %93, %86, %54 : vector<16x128xf32>
    %95 = arith.select %93, %84, %55 : vector<16x128xf32>
    %c2_i32 = arith.constant 2 : i32
    %96 = arith.index_cast %c2_i32 : i32 to index
    %c0_35 = arith.constant 0 : index
    %c0_36 = arith.constant 0 : index
    %97 = vector.load %arg13[%96, %c0_35, %c0_36] : memref<8x16x512xf32, #tpu.memory_space<vmem>>, vector<1x16x512xf32>
    %98 = vector.shape_cast %97 : vector<1x16x512xf32> to vector<16x512xf32>
    %99 = arith.truncf %94 : vector<16x128xf32> to vector<16x128xbf16>
    %cst_37 = arith.constant dense<0.000000e+00> : vector<16x512xf32>
    %100 = tpu.matmul %99, %12, %cst_37 {dimension_numbers = #tpu.dot_dimension_numbers<[1], [0], [0], [1], [0, 0, 1, 1], [], []>} : vector<16x128xbf16>, vector<128x512xbf16>, vector<16x512xf32> -> vector<16x512xf32>
    %101 = arith.addf %98, %100 : vector<16x512xf32>
    %102 = vector.extract_strided_slice %101 {offsets = [0, 0], sizes = [16, 128], strides = [1, 1]} : vector<16x512xf32> to vector<16x128xf32>
    %103 = arith.negf %102 : vector<16x128xf32>
    %104 = math.exp %103 : vector<16x128xf32>
    %cst_38 = arith.constant 1.000000e+00 : f32
    %105 = vector.broadcast %cst_38 : f32 to vector<16x128xf32>
    %106 = arith.addf %105, %104 : vector<16x128xf32>
    %107 = arith.divf %105, %106 : vector<16x128xf32>
    %108 = vector.extract_strided_slice %101 {offsets = [0, 128], sizes = [16, 128], strides = [1, 1]} : vector<16x512xf32> to vector<16x128xf32>
    %109 = arith.negf %108 : vector<16x128xf32>
    %110 = math.exp %109 : vector<16x128xf32>
    %cst_39 = arith.constant 1.000000e+00 : f32
    %111 = vector.broadcast %cst_39 : f32 to vector<16x128xf32>
    %112 = arith.addf %111, %110 : vector<16x128xf32>
    %113 = arith.divf %111, %112 : vector<16x128xf32>
    %114 = vector.extract_strided_slice %101 {offsets = [0, 256], sizes = [16, 128], strides = [1, 1]} : vector<16x512xf32> to vector<16x128xf32>
    %115 = math.tanh %114 : vector<16x128xf32>
    %116 = vector.extract_strided_slice %101 {offsets = [0, 384], sizes = [16, 128], strides = [1, 1]} : vector<16x512xf32> to vector<16x128xf32>
    %117 = arith.negf %116 : vector<16x128xf32>
    %118 = math.exp %117 : vector<16x128xf32>
    %cst_40 = arith.constant 1.000000e+00 : f32
    %119 = vector.broadcast %cst_40 : f32 to vector<16x128xf32>
    %120 = arith.addf %119, %118 : vector<16x128xf32>
    %121 = arith.divf %119, %120 : vector<16x128xf32>
    %122 = arith.mulf %113, %95 : vector<16x128xf32>
    %123 = arith.mulf %107, %115 : vector<16x128xf32>
    %124 = arith.addf %122, %123 : vector<16x128xf32>
    %125 = math.tanh %124 : vector<16x128xf32>
    %126 = arith.mulf %121, %125 : vector<16x128xf32>
    %127 = arith.truncf %126 : vector<16x128xf32> to vector<16x128xbf16>
    %128 = arith.index_cast %c2_i32 : i32 to index
    %c0_41 = arith.constant 0 : index
    %c0_42 = arith.constant 0 : index
    %129 = vector.load %arg14[%128, %c0_41, %c0_42] : memref<8x16x128xbf16, #tpu.memory_space<vmem>>, vector<1x16x128xbf16>
    %130 = vector.shape_cast %129 : vector<1x16x128xbf16> to vector<16x128xbf16>
    %131 = vector.shape_cast %127 : vector<16x128xbf16> to vector<1x16x128xbf16>
    tpu.vector_store %arg14[%128, %c0_41, %c0_42], %131 {strides = array<i32>} : memref<8x16x128xbf16, #tpu.memory_space<vmem>>, vector<1x16x128xbf16>,
    %132 = arith.addi %13, %c2_i32 : i32
    %c8_i32_43 = arith.constant 8 : i32
    %133 = arith.cmpi slt, %132, %c8_i32_43 : i32
    %134 = arith.select %133, %126, %94 : vector<16x128xf32>
    %135 = arith.select %133, %124, %95 : vector<16x128xf32>
    %c3_i32 = arith.constant 3 : i32
    %136 = arith.index_cast %c3_i32 : i32 to index
    %c0_44 = arith.constant 0 : index
    %c0_45 = arith.constant 0 : index
    %137 = vector.load %arg13[%136, %c0_44, %c0_45] : memref<8x16x512xf32, #tpu.memory_space<vmem>>, vector<1x16x512xf32>
    %138 = vector.shape_cast %137 : vector<1x16x512xf32> to vector<16x512xf32>
    %139 = arith.truncf %134 : vector<16x128xf32> to vector<16x128xbf16>
    %cst_46 = arith.constant dense<0.000000e+00> : vector<16x512xf32>
    %140 = tpu.matmul %139, %12, %cst_46 {dimension_numbers = #tpu.dot_dimension_numbers<[1], [0], [0], [1], [0, 0, 1, 1], [], []>} : vector<16x128xbf16>, vector<128x512xbf16>, vector<16x512xf32> -> vector<16x512xf32>
    %141 = arith.addf %138, %140 : vector<16x512xf32>
    %142 = vector.extract_strided_slice %141 {offsets = [0, 0], sizes = [16, 128], strides = [1, 1]} : vector<16x512xf32> to vector<16x128xf32>
    %143 = arith.negf %142 : vector<16x128xf32>
    %144 = math.exp %143 : vector<16x128xf32>
    %cst_47 = arith.constant 1.000000e+00 : f32
    %145 = vector.broadcast %cst_47 : f32 to vector<16x128xf32>
    %146 = arith.addf %145, %144 : vector<16x128xf32>
    %147 = arith.divf %145, %146 : vector<16x128xf32>
    %148 = vector.extract_strided_slice %141 {offsets = [0, 128], sizes = [16, 128], strides = [1, 1]} : vector<16x512xf32> to vector<16x128xf32>
    %149 = arith.negf %148 : vector<16x128xf32>
    %150 = math.exp %149 : vector<16x128xf32>
    %cst_48 = arith.constant 1.000000e+00 : f32
    %151 = vector.broadcast %cst_48 : f32 to vector<16x128xf32>
    %152 = arith.addf %151, %150 : vector<16x128xf32>
    %153 = arith.divf %151, %152 : vector<16x128xf32>
    %154 = vector.extract_strided_slice %141 {offsets = [0, 256], sizes = [16, 128], strides = [1, 1]} : vector<16x512xf32> to vector<16x128xf32>
    %155 = math.tanh %154 : vector<16x128xf32>
    %156 = vector.extract_strided_slice %141 {offsets = [0, 384], sizes = [16, 128], strides = [1, 1]} : vector<16x512xf32> to vector<16x128xf32>
    %157 = arith.negf %156 : vector<16x128xf32>
    %158 = math.exp %157 : vector<16x128xf32>
    %cst_49 = arith.constant 1.000000e+00 : f32
    %159 = vector.broadcast %cst_49 : f32 to vector<16x128xf32>
    %160 = arith.addf %159, %158 : vector<16x128xf32>
    %161 = arith.divf %159, %160 : vector<16x128xf32>
    %162 = arith.mulf %153, %135 : vector<16x128xf32>
    %163 = arith.mulf %147, %155 : vector<16x128xf32>
    %164 = arith.addf %162, %163 : vector<16x128xf32>
    %165 = math.tanh %164 : vector<16x128xf32>
    %166 = arith.mulf %161, %165 : vector<16x128xf32>
    %167 = arith.truncf %166 : vector<16x128xf32> to vector<16x128xbf16>
    %168 = arith.index_cast %c3_i32 : i32 to index
    %c0_50 = arith.constant 0 : index
    %c0_51 = arith.constant 0 : index
    %169 = vector.load %arg14[%168, %c0_50, %c0_51] : memref<8x16x128xbf16, #tpu.memory_space<vmem>>, vector<1x16x128xbf16>
    %170 = vector.shape_cast %169 : vector<1x16x128xbf16> to vector<16x128xbf16>
    %171 = vector.shape_cast %167 : vector<16x128xbf16> to vector<1x16x128xbf16>
    tpu.vector_store %arg14[%168, %c0_50, %c0_51], %171 {strides = array<i32>} : memref<8x16x128xbf16, #tpu.memory_space<vmem>>, vector<1x16x128xbf16>,
    %172 = arith.addi %13, %c3_i32 : i32
    %c8_i32_52 = arith.constant 8 : i32
    %173 = arith.cmpi slt, %172, %c8_i32_52 : i32
    %174 = arith.select %173, %166, %134 : vector<16x128xf32>
    %175 = arith.select %173, %164, %135 : vector<16x128xf32>
    %c4_i32 = arith.constant 4 : i32
    %176 = arith.index_cast %c4_i32 : i32 to index
    %c0_53 = arith.constant 0 : index
    %c0_54 = arith.constant 0 : index
    %177 = vector.load %arg13[%176, %c0_53, %c0_54] : memref<8x16x512xf32, #tpu.memory_space<vmem>>, vector<1x16x512xf32>
    %178 = vector.shape_cast %177 : vector<1x16x512xf32> to vector<16x512xf32>
    %179 = arith.truncf %174 : vector<16x128xf32> to vector<16x128xbf16>
    %cst_55 = arith.constant dense<0.000000e+00> : vector<16x512xf32>
    %180 = tpu.matmul %179, %12, %cst_55 {dimension_numbers = #tpu.dot_dimension_numbers<[1], [0], [0], [1], [0, 0, 1, 1], [], []>} : vector<16x128xbf16>, vector<128x512xbf16>, vector<16x512xf32> -> vector<16x512xf32>
    %181 = arith.addf %178, %180 : vector<16x512xf32>
    %182 = vector.extract_strided_slice %181 {offsets = [0, 0], sizes = [16, 128], strides = [1, 1]} : vector<16x512xf32> to vector<16x128xf32>
    %183 = arith.negf %182 : vector<16x128xf32>
    %184 = math.exp %183 : vector<16x128xf32>
    %cst_56 = arith.constant 1.000000e+00 : f32
    %185 = vector.broadcast %cst_56 : f32 to vector<16x128xf32>
    %186 = arith.addf %185, %184 : vector<16x128xf32>
    %187 = arith.divf %185, %186 : vector<16x128xf32>
    %188 = vector.extract_strided_slice %181 {offsets = [0, 128], sizes = [16, 128], strides = [1, 1]} : vector<16x512xf32> to vector<16x128xf32>
    %189 = arith.negf %188 : vector<16x128xf32>
    %190 = math.exp %189 : vector<16x128xf32>
    %cst_57 = arith.constant 1.000000e+00 : f32
    %191 = vector.broadcast %cst_57 : f32 to vector<16x128xf32>
    %192 = arith.addf %191, %190 : vector<16x128xf32>
    %193 = arith.divf %191, %192 : vector<16x128xf32>
    %194 = vector.extract_strided_slice %181 {offsets = [0, 256], sizes = [16, 128], strides = [1, 1]} : vector<16x512xf32> to vector<16x128xf32>
    %195 = math.tanh %194 : vector<16x128xf32>
    %196 = vector.extract_strided_slice %181 {offsets = [0, 384], sizes = [16, 128], strides = [1, 1]} : vector<16x512xf32> to vector<16x128xf32>
    %197 = arith.negf %196 : vector<16x128xf32>
    %198 = math.exp %197 : vector<16x128xf32>
    %cst_58 = arith.constant 1.000000e+00 : f32
    %199 = vector.broadcast %cst_58 : f32 to vector<16x128xf32>
    %200 = arith.addf %199, %198 : vector<16x128xf32>
    %201 = arith.divf %199, %200 : vector<16x128xf32>
    %202 = arith.mulf %193, %175 : vector<16x128xf32>
    %203 = arith.mulf %187, %195 : vector<16x128xf32>
    %204 = arith.addf %202, %203 : vector<16x128xf32>
    %205 = math.tanh %204 : vector<16x128xf32>
    %206 = arith.mulf %201, %205 : vector<16x128xf32>
    %207 = arith.truncf %206 : vector<16x128xf32> to vector<16x128xbf16>
    %208 = arith.index_cast %c4_i32 : i32 to index
    %c0_59 = arith.constant 0 : index
    %c0_60 = arith.constant 0 : index
    %209 = vector.load %arg14[%208, %c0_59, %c0_60] : memref<8x16x128xbf16, #tpu.memory_space<vmem>>, vector<1x16x128xbf16>
    %210 = vector.shape_cast %209 : vector<1x16x128xbf16> to vector<16x128xbf16>
    %211 = vector.shape_cast %207 : vector<16x128xbf16> to vector<1x16x128xbf16>
    tpu.vector_store %arg14[%208, %c0_59, %c0_60], %211 {strides = array<i32>} : memref<8x16x128xbf16, #tpu.memory_space<vmem>>, vector<1x16x128xbf16>,
    %212 = arith.addi %13, %c4_i32 : i32
    %c8_i32_61 = arith.constant 8 : i32
    %213 = arith.cmpi slt, %212, %c8_i32_61 : i32
    %214 = arith.select %213, %206, %174 : vector<16x128xf32>
    %215 = arith.select %213, %204, %175 : vector<16x128xf32>
    %c5_i32 = arith.constant 5 : i32
    %216 = arith.index_cast %c5_i32 : i32 to index
    %c0_62 = arith.constant 0 : index
    %c0_63 = arith.constant 0 : index
    %217 = vector.load %arg13[%216, %c0_62, %c0_63] : memref<8x16x512xf32, #tpu.memory_space<vmem>>, vector<1x16x512xf32>
    %218 = vector.shape_cast %217 : vector<1x16x512xf32> to vector<16x512xf32>
    %219 = arith.truncf %214 : vector<16x128xf32> to vector<16x128xbf16>
    %cst_64 = arith.constant dense<0.000000e+00> : vector<16x512xf32>
    %220 = tpu.matmul %219, %12, %cst_64 {dimension_numbers = #tpu.dot_dimension_numbers<[1], [0], [0], [1], [0, 0, 1, 1], [], []>} : vector<16x128xbf16>, vector<128x512xbf16>, vector<16x512xf32> -> vector<16x512xf32>
    %221 = arith.addf %218, %220 : vector<16x512xf32>
    %222 = vector.extract_strided_slice %221 {offsets = [0, 0], sizes = [16, 128], strides = [1, 1]} : vector<16x512xf32> to vector<16x128xf32>
    %223 = arith.negf %222 : vector<16x128xf32>
    %224 = math.exp %223 : vector<16x128xf32>
    %cst_65 = arith.constant 1.000000e+00 : f32
    %225 = vector.broadcast %cst_65 : f32 to vector<16x128xf32>
    %226 = arith.addf %225, %224 : vector<16x128xf32>
    %227 = arith.divf %225, %226 : vector<16x128xf32>
    %228 = vector.extract_strided_slice %221 {offsets = [0, 128], sizes = [16, 128], strides = [1, 1]} : vector<16x512xf32> to vector<16x128xf32>
    %229 = arith.negf %228 : vector<16x128xf32>
    %230 = math.exp %229 : vector<16x128xf32>
    %cst_66 = arith.constant 1.000000e+00 : f32
    %231 = vector.broadcast %cst_66 : f32 to vector<16x128xf32>
    %232 = arith.addf %231, %230 : vector<16x128xf32>
    %233 = arith.divf %231, %232 : vector<16x128xf32>
    %234 = vector.extract_strided_slice %221 {offsets = [0, 256], sizes = [16, 128], strides = [1, 1]} : vector<16x512xf32> to vector<16x128xf32>
    %235 = math.tanh %234 : vector<16x128xf32>
    %236 = vector.extract_strided_slice %221 {offsets = [0, 384], sizes = [16, 128], strides = [1, 1]} : vector<16x512xf32> to vector<16x128xf32>
    %237 = arith.negf %236 : vector<16x128xf32>
    %238 = math.exp %237 : vector<16x128xf32>
    %cst_67 = arith.constant 1.000000e+00 : f32
    %239 = vector.broadcast %cst_67 : f32 to vector<16x128xf32>
    %240 = arith.addf %239, %238 : vector<16x128xf32>
    %241 = arith.divf %239, %240 : vector<16x128xf32>
    %242 = arith.mulf %233, %215 : vector<16x128xf32>
    %243 = arith.mulf %227, %235 : vector<16x128xf32>
    %244 = arith.addf %242, %243 : vector<16x128xf32>
    %245 = math.tanh %244 : vector<16x128xf32>
    %246 = arith.mulf %241, %245 : vector<16x128xf32>
    %247 = arith.truncf %246 : vector<16x128xf32> to vector<16x128xbf16>
    %248 = arith.index_cast %c5_i32 : i32 to index
    %c0_68 = arith.constant 0 : index
    %c0_69 = arith.constant 0 : index
    %249 = vector.load %arg14[%248, %c0_68, %c0_69] : memref<8x16x128xbf16, #tpu.memory_space<vmem>>, vector<1x16x128xbf16>
    %250 = vector.shape_cast %249 : vector<1x16x128xbf16> to vector<16x128xbf16>
    %251 = vector.shape_cast %247 : vector<16x128xbf16> to vector<1x16x128xbf16>
    tpu.vector_store %arg14[%248, %c0_68, %c0_69], %251 {strides = array<i32>} : memref<8x16x128xbf16, #tpu.memory_space<vmem>>, vector<1x16x128xbf16>,
    %252 = arith.addi %13, %c5_i32 : i32
    %c8_i32_70 = arith.constant 8 : i32
    %253 = arith.cmpi slt, %252, %c8_i32_70 : i32
    %254 = arith.select %253, %246, %214 : vector<16x128xf32>
    %255 = arith.select %253, %244, %215 : vector<16x128xf32>
    %c6_i32 = arith.constant 6 : i32
    %256 = arith.index_cast %c6_i32 : i32 to index
    %c0_71 = arith.constant 0 : index
    %c0_72 = arith.constant 0 : index
    %257 = vector.load %arg13[%256, %c0_71, %c0_72] : memref<8x16x512xf32, #tpu.memory_space<vmem>>, vector<1x16x512xf32>
    %258 = vector.shape_cast %257 : vector<1x16x512xf32> to vector<16x512xf32>
    %259 = arith.truncf %254 : vector<16x128xf32> to vector<16x128xbf16>
    %cst_73 = arith.constant dense<0.000000e+00> : vector<16x512xf32>
    %260 = tpu.matmul %259, %12, %cst_73 {dimension_numbers = #tpu.dot_dimension_numbers<[1], [0], [0], [1], [0, 0, 1, 1], [], []>} : vector<16x128xbf16>, vector<128x512xbf16>, vector<16x512xf32> -> vector<16x512xf32>
    %261 = arith.addf %258, %260 : vector<16x512xf32>
    %262 = vector.extract_strided_slice %261 {offsets = [0, 0], sizes = [16, 128], strides = [1, 1]} : vector<16x512xf32> to vector<16x128xf32>
    %263 = arith.negf %262 : vector<16x128xf32>
    %264 = math.exp %263 : vector<16x128xf32>
    %cst_74 = arith.constant 1.000000e+00 : f32
    %265 = vector.broadcast %cst_74 : f32 to vector<16x128xf32>
    %266 = arith.addf %265, %264 : vector<16x128xf32>
    %267 = arith.divf %265, %266 : vector<16x128xf32>
    %268 = vector.extract_strided_slice %261 {offsets = [0, 128], sizes = [16, 128], strides = [1, 1]} : vector<16x512xf32> to vector<16x128xf32>
    %269 = arith.negf %268 : vector<16x128xf32>
    %270 = math.exp %269 : vector<16x128xf32>
    %cst_75 = arith.constant 1.000000e+00 : f32
    %271 = vector.broadcast %cst_75 : f32 to vector<16x128xf32>
    %272 = arith.addf %271, %270 : vector<16x128xf32>
    %273 = arith.divf %271, %272 : vector<16x128xf32>
    %274 = vector.extract_strided_slice %261 {offsets = [0, 256], sizes = [16, 128], strides = [1, 1]} : vector<16x512xf32> to vector<16x128xf32>
    %275 = math.tanh %274 : vector<16x128xf32>
    %276 = vector.extract_strided_slice %261 {offsets = [0, 384], sizes = [16, 128], strides = [1, 1]} : vector<16x512xf32> to vector<16x128xf32>
    %277 = arith.negf %276 : vector<16x128xf32>
    %278 = math.exp %277 : vector<16x128xf32>
    %cst_76 = arith.constant 1.000000e+00 : f32
    %279 = vector.broadcast %cst_76 : f32 to vector<16x128xf32>
    %280 = arith.addf %279, %278 : vector<16x128xf32>
    %281 = arith.divf %279, %280 : vector<16x128xf32>
    %282 = arith.mulf %273, %255 : vector<16x128xf32>
    %283 = arith.mulf %267, %275 : vector<16x128xf32>
    %284 = arith.addf %282, %283 : vector<16x128xf32>
    %285 = math.tanh %284 : vector<16x128xf32>
    %286 = arith.mulf %281, %285 : vector<16x128xf32>
    %287 = arith.truncf %286 : vector<16x128xf32> to vector<16x128xbf16>
    %288 = arith.index_cast %c6_i32 : i32 to index
    %c0_77 = arith.constant 0 : index
    %c0_78 = arith.constant 0 : index
    %289 = vector.load %arg14[%288, %c0_77, %c0_78] : memref<8x16x128xbf16, #tpu.memory_space<vmem>>, vector<1x16x128xbf16>
    %290 = vector.shape_cast %289 : vector<1x16x128xbf16> to vector<16x128xbf16>
    %291 = vector.shape_cast %287 : vector<16x128xbf16> to vector<1x16x128xbf16>
    tpu.vector_store %arg14[%288, %c0_77, %c0_78], %291 {strides = array<i32>} : memref<8x16x128xbf16, #tpu.memory_space<vmem>>, vector<1x16x128xbf16>,
    %292 = arith.addi %13, %c6_i32 : i32
    %c8_i32_79 = arith.constant 8 : i32
    %293 = arith.cmpi slt, %292, %c8_i32_79 : i32
    %294 = arith.select %293, %286, %254 : vector<16x128xf32>
    %295 = arith.select %293, %284, %255 : vector<16x128xf32>
    %c7_i32 = arith.constant 7 : i32
    %296 = arith.index_cast %c7_i32 : i32 to index
    %c0_80 = arith.constant 0 : index
    %c0_81 = arith.constant 0 : index
    %297 = vector.load %arg13[%296, %c0_80, %c0_81] : memref<8x16x512xf32, #tpu.memory_space<vmem>>, vector<1x16x512xf32>
    %298 = vector.shape_cast %297 : vector<1x16x512xf32> to vector<16x512xf32>
    %299 = arith.truncf %294 : vector<16x128xf32> to vector<16x128xbf16>
    %cst_82 = arith.constant dense<0.000000e+00> : vector<16x512xf32>
    %300 = tpu.matmul %299, %12, %cst_82 {dimension_numbers = #tpu.dot_dimension_numbers<[1], [0], [0], [1], [0, 0, 1, 1], [], []>} : vector<16x128xbf16>, vector<128x512xbf16>, vector<16x512xf32> -> vector<16x512xf32>
    %301 = arith.addf %298, %300 : vector<16x512xf32>
    %302 = vector.extract_strided_slice %301 {offsets = [0, 0], sizes = [16, 128], strides = [1, 1]} : vector<16x512xf32> to vector<16x128xf32>
    %303 = arith.negf %302 : vector<16x128xf32>
    %304 = math.exp %303 : vector<16x128xf32>
    %cst_83 = arith.constant 1.000000e+00 : f32
    %305 = vector.broadcast %cst_83 : f32 to vector<16x128xf32>
    %306 = arith.addf %305, %304 : vector<16x128xf32>
    %307 = arith.divf %305, %306 : vector<16x128xf32>
    %308 = vector.extract_strided_slice %301 {offsets = [0, 128], sizes = [16, 128], strides = [1, 1]} : vector<16x512xf32> to vector<16x128xf32>
    %309 = arith.negf %308 : vector<16x128xf32>
    %310 = math.exp %309 : vector<16x128xf32>
    %cst_84 = arith.constant 1.000000e+00 : f32
    %311 = vector.broadcast %cst_84 : f32 to vector<16x128xf32>
    %312 = arith.addf %311, %310 : vector<16x128xf32>
    %313 = arith.divf %311, %312 : vector<16x128xf32>
    %314 = vector.extract_strided_slice %301 {offsets = [0, 256], sizes = [16, 128], strides = [1, 1]} : vector<16x512xf32> to vector<16x128xf32>
    %315 = math.tanh %314 : vector<16x128xf32>
    %316 = vector.extract_strided_slice %301 {offsets = [0, 384], sizes = [16, 128], strides = [1, 1]} : vector<16x512xf32> to vector<16x128xf32>
    %317 = arith.negf %316 : vector<16x128xf32>
    %318 = math.exp %317 : vector<16x128xf32>
    %cst_85 = arith.constant 1.000000e+00 : f32
    %319 = vector.broadcast %cst_85 : f32 to vector<16x128xf32>
    %320 = arith.addf %319, %318 : vector<16x128xf32>
    %321 = arith.divf %319, %320 : vector<16x128xf32>
    %322 = arith.mulf %313, %295 : vector<16x128xf32>
    %323 = arith.mulf %307, %315 : vector<16x128xf32>
    %324 = arith.addf %322, %323 : vector<16x128xf32>
    %325 = math.tanh %324 : vector<16x128xf32>
    %326 = arith.mulf %321, %325 : vector<16x128xf32>
    %327 = arith.truncf %326 : vector<16x128xf32> to vector<16x128xbf16>
    %328 = arith.index_cast %c7_i32 : i32 to index
    %c0_86 = arith.constant 0 : index
    %c0_87 = arith.constant 0 : index
    %329 = vector.load %arg14[%328, %c0_86, %c0_87] : memref<8x16x128xbf16, #tpu.memory_space<vmem>>, vector<1x16x128xbf16>
    %330 = vector.shape_cast %329 : vector<1x16x128xbf16> to vector<16x128xbf16>
    %331 = vector.shape_cast %327 : vector<16x128xbf16> to vector<1x16x128xbf16>
    tpu.vector_store %arg14[%328, %c0_86, %c0_87], %331 {strides = array<i32>} : memref<8x16x128xbf16, #tpu.memory_space<vmem>>, vector<1x16x128xbf16>,
    %332 = arith.addi %13, %c7_i32 : i32
    %c8_i32_88 = arith.constant 8 : i32
    %333 = arith.cmpi slt, %332, %c8_i32_88 : i32
    %334 = arith.select %333, %326, %294 : vector<16x128xf32>
    %335 = arith.select %333, %324, %295 : vector<16x128xf32>
    %c8_i32_89 = arith.constant 8 : i32
    %c0_90 = arith.constant 0 : index
    %c0_91 = arith.constant 0 : index
    %336 = vector.load %arg15[%c0_90, %c0_91] : memref<16x128xf32, #tpu.memory_space<vmem>>, vector<16x128xf32>
    tpu.vector_store %arg15[%c0_90, %c0_91], %334 {strides = array<i32>} : memref<16x128xf32, #tpu.memory_space<vmem>>, vector<16x128xf32>,
    %c0_92 = arith.constant 0 : index
    %c0_93 = arith.constant 0 : index
    %337 = vector.load %arg16[%c0_92, %c0_93] : memref<16x128xf32, #tpu.memory_space<vmem>>, vector<16x128xf32>
    tpu.vector_store %arg16[%c0_92, %c0_93], %335 {strides = array<i32>} : memref<16x128xf32, #tpu.memory_space<vmem>>, vector<16x128xf32>,
    %c0_i32_94 = arith.constant 0 : i32
    %338 = arith.cmpi eq, %arg1, %c0_i32_94 : i32
    %339 = arith.extui %338 : i1 to i32
    %c0_i32_95 = arith.constant 0 : i32
    %340 = arith.cmpi ne, %339, %c0_i32_95 : i32
    scf.if %340 {
      %c0_107 = arith.constant 0 : index
      %c0_108 = arith.constant 0 : index
      %350 = vector.load %arg11[%c0_107, %c0_108] : memref<16x128xf32, #tpu.memory_space<vmem>>, vector<16x128xf32>
      tpu.vector_store %arg11[%c0_107, %c0_108], %334 {strides = array<i32>} : memref<16x128xf32, #tpu.memory_space<vmem>>, vector<16x128xf32>,
      %c0_109 = arith.constant 0 : index
      %c0_110 = arith.constant 0 : index
      %351 = vector.load %arg12[%c0_109, %c0_110] : memref<16x128xf32, #tpu.memory_space<vmem>>, vector<16x128xf32>
      tpu.vector_store %arg12[%c0_109, %c0_110], %335 {strides = array<i32>} : memref<16x128xf32, #tpu.memory_space<vmem>>, vector<16x128xf32>,
    } else {
    }
    %c0_96 = arith.constant 0 : index
    %c0_97 = arith.constant 0 : index
    %c0_98 = arith.constant 0 : index
    %341 = vector.load %arg14[%c0_96, %c0_97, %c0_98] : memref<8x16x128xbf16, #tpu.memory_space<vmem>>, vector<8x16x128xbf16>
    %342 = vector.shape_cast %341 : vector<8x16x128xbf16> to vector<128x128xbf16>
    %c0_99 = arith.constant 0 : index
    %c0_100 = arith.constant 0 : index
    %343 = vector.load %arg8[%c0_99, %c0_100] : memref<128x128xbf16, #tpu.memory_space<vmem>>, vector<128x128xbf16>
    %cst_101 = arith.constant dense<0.000000e+00> : vector<128x128xf32>
    %344 = tpu.matmul %342, %343, %cst_101 {dimension_numbers = #tpu.dot_dimension_numbers<[1], [0], [0], [1], [0, 0, 1, 1], [], []>} : vector<128x128xbf16>, vector<128x128xbf16>, vector<128x128xf32> -> vector<128x128xf32>
    %c0_102 = arith.constant 0 : index
    %c0_103 = arith.constant 0 : index
    %345 = vector.load %arg9[%c0_102, %c0_103] : memref<1x128xf32, #tpu.memory_space<vmem>>, vector<1x128xf32>
    %346 = vector.broadcast %345 : vector<1x128xf32> to vector<128x128xf32>
    %347 = arith.addf %344, %346 : vector<128x128xf32>
    %348 = vector.shape_cast %347 : vector<128x128xf32> to vector<8x16x128xf32>
    %c0_104 = arith.constant 0 : index
    %c0_105 = arith.constant 0 : index
    %c0_106 = arith.constant 0 : index
    %349 = vector.load %arg10[%c0_104, %c0_105, %c0_106] : memref<8x16x128xf32, #tpu.memory_space<vmem>>, vector<8x16x128xf32>
    tpu.vector_store %arg10[%c0_104, %c0_105, %c0_106], %348 {strides = array<i32>} : memref<8x16x128xf32, #tpu.memory_space<vmem>>, vector<8x16x128xf32>,
    return
  }
  func.func @transform_0(%arg0: i32, %arg1: i32) -> (i32, i32, i32) {
    %c0_i32 = arith.constant 0 : i32
    %c0_i32_0 = arith.constant 0 : i32
    return %arg1, %arg0, %c0_i32 : i32, i32, i32
  }
  func.func @transform_1(%arg0: i32, %arg1: i32) -> (i32, i32) {
    %c0_i32 = arith.constant 0 : i32
    %c0_i32_0 = arith.constant 0 : i32
    return %arg0, %c0_i32 : i32, i32
  }
  func.func @transform_2(%arg0: i32, %arg1: i32) -> (i32, i32) {
    %c0_i32 = arith.constant 0 : i32
    %c0_i32_0 = arith.constant 0 : i32
    return %arg0, %c0_i32 : i32, i32
  }
  func.func @transform_3(%arg0: i32, %arg1: i32) -> (i32, i32) {
    %c0_i32 = arith.constant 0 : i32
    %c0_i32_0 = arith.constant 0 : i32
    %c0_i32_1 = arith.constant 0 : i32
    return %c0_i32, %c0_i32_0 : i32, i32
  }
  func.func @transform_4(%arg0: i32, %arg1: i32) -> (i32, i32) {
    %c0_i32 = arith.constant 0 : i32
    %c0_i32_0 = arith.constant 0 : i32
    %c0_i32_1 = arith.constant 0 : i32
    return %c0_i32, %c0_i32_0 : i32, i32
  }
  func.func @transform_5(%arg0: i32, %arg1: i32) -> (i32, i32) {
    %c0_i32 = arith.constant 0 : i32
    %c0_i32_0 = arith.constant 0 : i32
    %c0_i32_1 = arith.constant 0 : i32
    return %c0_i32, %c0_i32_0 : i32, i32
  }
  func.func @transform_6(%arg0: i32, %arg1: i32) -> (i32, i32) {
    %c0_i32 = arith.constant 0 : i32
    %c0_i32_0 = arith.constant 0 : i32
    %c0_i32_1 = arith.constant 0 : i32
    return %c0_i32, %c0_i32_0 : i32, i32
  }
  func.func @transform_7(%arg0: i32, %arg1: i32) -> (i32, i32) {
    %c0_i32 = arith.constant 0 : i32
    %c0_i32_0 = arith.constant 0 : i32
    %c0_i32_1 = arith.constant 0 : i32
    return %c0_i32, %c0_i32_0 : i32, i32
  }
  func.func @transform_8(%arg0: i32, %arg1: i32) -> (i32, i32, i32) {
    %c0_i32 = arith.constant 0 : i32
    %c0_i32_0 = arith.constant 0 : i32
    return %arg1, %arg0, %c0_i32 : i32, i32, i32
  }
  func.func @transform_9(%arg0: i32, %arg1: i32) -> (i32, i32) {
    %c0_i32 = arith.constant 0 : i32
    %c0_i32_0 = arith.constant 0 : i32
    return %arg0, %c0_i32 : i32, i32
  }
  func.func @transform_10(%arg0: i32, %arg1: i32) -> (i32, i32) {
    %c0_i32 = arith.constant 0 : i32
    %c0_i32_0 = arith.constant 0 : i32
    return %arg0, %c0_i32 : i32, i32
  }
}

</mosaic_0001>

<llo_original>
// kernel: tpu_custom_call.1
$region0: #{tpu_custom_call.1}
  #allocation0 [shape = 'u32[]', space=smem, size = 0x4, offset = 0x4, fixed_abs, tag = 'smem constant byte address 0x4 - core index']
  #allocation1 [shape = 'u32[144,128]{1,0:T(1,128)}', space=vmem, size = 0x12000, scoped, tag = 'internal scratch']
  #allocation2 [shape = 'f32[8,16,512]{2,1,0:T(8,128)}', space=vmem, size = 0x40000, scoped, tag = 'scratch operand']
  #allocation3 [shape = 'bf16[8,16,128]{2,1,0:T(16,128)(2,1)}', space=vmem, size = 0x8000, scoped, tag = 'scratch operand']
  #allocation4 [shape = 'f32[16,128]{1,0:T(8,128)}', space=vmem, size = 0x2000, scoped, tag = 'scratch operand']
  #allocation5 [shape = 'f32[16,128]{1,0:T(8,128)}', space=vmem, size = 0x2000, scoped, tag = 'scratch operand']
  %s0 = inlined_call_operand.hbm [shape: bf16[8,16,128], index: 0, kind: input, shape index: {}]
  %s1 = inlined_call_operand.hbm [shape: f32[16,128], index: 1, kind: input, shape index: {}]
  %s2 = inlined_call_operand.hbm [shape: f32[16,128], index: 2, kind: input, shape index: {}]
  %s3 = inlined_call_operand.hbm [shape: bf16[128,512], index: 3, kind: input, shape index: {}]
  %s4 = inlined_call_operand.hbm [shape: bf16[128,512], index: 4, kind: input, shape index: {}]
  %s5 = inlined_call_operand.vmem [shape: f32[1,512], index: 5, kind: input, shape index: {}]
  %s6 = inlined_call_operand.hbm [shape: bf16[128,128], index: 6, kind: input, shape index: {}]
  %s7 = inlined_call_operand.vmem [shape: f32[1,128], index: 7, kind: input, shape index: {}]
  %s8 = inlined_call_operand.hbm [shape: f32[8,16,128], index: 8, kind: output, shape index: {0}]
  %s9 = inlined_call_operand.hbm [shape: f32[16,128], index: 9, kind: output, shape index: {1}]
  %s10 = inlined_call_operand.hbm [shape: f32[16,128], index: 10, kind: output, shape index: {2}]
  %11 = xla_tuple %s8, %s9, %s10
  %s12 = sld [smem:[#allocation0]]
  $region90: #{tpu_custom_call.1} parent=0
    _
  %s14 = ssub.s32 1, %s12
  %s15 = scalar_select 0, %s14, %s12
  $region1: #{tpu_custom_call.1} parent=0
    #allocation6 [shape = 'u8[32768]{0}', space=vmem, size = 0x8000, scoped, tag = 'input window, operand 0, single buffered']
    #allocation7 [shape = 's32[1]{0}', space=sflag, size = 0x4, scoped, tag = 'scoped memory for tpu_custom_call.1']
    #allocation8 [shape = 's32[1]{0}', space=sflag, size = 0x4, scoped, tag = 'scoped memory for tpu_custom_call.1']
    #allocation9 [shape = 'u8[8192]{0}', space=vmem, size = 0x2000, scoped, tag = 'input window, operand 1, single buffered']
    #allocation10 [shape = 's32[1]{0}', space=sflag, size = 0x4, scoped, tag = 'scoped memory for tpu_custom_call.1']
    #allocation11 [shape = 'u8[8192]{0}', space=vmem, size = 0x2000, scoped, tag = 'input window, operand 2, single buffered']
    #allocation12 [shape = 'u8[131072]{0}', space=vmem, size = 0x20000, scoped, tag = 'input window, operand 3, single buffered']
    #allocation13 [shape = 's32[1]{0}', space=sflag, size = 0x4, scoped, tag = 'scoped memory for tpu_custom_call.1']
    #allocation14 [shape = 'u8[131072]{0}', space=vmem, size = 0x20000, scoped, tag = 'input window, operand 4, single buffered']
    #allocation15 [shape = 'u8[32768]{0}', space=vmem, size = 0x8000, scoped, tag = 'input window, operand 6, single buffered']
    #allocation16 [shape = 's32[1]{0}', space=sflag, size = 0x4, scoped, tag = 'scoped memory for tpu_custom_call.1']
    #allocation17 [shape = 'u8[65536]{0}', space=vmem, size = 0x10000, scoped, tag = 'output window, operand 0, single buffered']
    #allocation18 [shape = 'u8[8192]{0}', space=vmem, size = 0x2000, scoped, tag = 'output window, operand 1, single buffered']
    #allocation19 [shape = 's32[1]{0}', space=sflag, size = 0x4, scoped, tag = 'scoped memory for tpu_custom_call.1']
    #allocation20 [shape = 'u8[8192]{0}', space=vmem, size = 0x2000, scoped, tag = 'output window, operand 2, single buffered']
    %16 = vsyncpa [#allocation7], 0
    %17 = vsyncpa [#allocation10], 0
    %18 = vsyncpa [#allocation13], 0
    %19 = vsyncpa [#allocation16], 0
    %20 = vsyncpa [#allocation8], 0
    %21 = vsyncpa [#allocation19], 0
    // Predicated region
    $region2: #{tpu_custom_call.1} parent=1 // pred_check
      _
    $region3: #{tpu_custom_call.1} parent=1 // pred_check_branch
      %23 = sbr.rel (0) target = $region5
    $region4: #{tpu_custom_call.1} parent=1 // pred_region
      %s25 = ssub.s32 1024, 1024
      %26 = vsyncadd [#allocation7], %s25
      %s27 = sshll.u32 [#allocation6], 4
      %s28 = int_to_ptr.vmem [resolvable:$true] %s27
      %33 = dma.hbm_to_vmem [thread:$0]  %s0, 1024, %s28, [#allocation7], 64, 64, 4
    $region5: #{tpu_custom_call.1} parent=1 // pred_fallthru
      _
    // Predicated region
    $region6: #{tpu_custom_call.1} parent=1 // pred_check
      _
    $region7: #{tpu_custom_call.1} parent=1 // pred_check_branch
      %35 = sbr.rel (0) target = $region9
    $region8: #{tpu_custom_call.1} parent=1 // pred_region
      %s37 = ssub.s32 256, 256
      %38 = vsyncadd [#allocation10], %s37
      %s39 = sshll.u32 [#allocation9], 4
      %s40 = int_to_ptr.vmem [resolvable:$true] %s39
      %45 = dma.hbm_to_vmem [thread:$0]  %s1, 256, %s40, [#allocation10], 128, 128, 8
    $region9: #{tpu_custom_call.1} parent=1 // pred_fallthru
      _
    // Predicated region
    $region10: #{tpu_custom_call.1} parent=1 // pred_check
      _
    $region11: #{tpu_custom_call.1} parent=1 // pred_check_branch
      %47 = sbr.rel (0) target = $region13
    $region12: #{tpu_custom_call.1} parent=1 // pred_region
      %s49 = ssub.s32 256, 256
      %50 = vsyncadd [#allocation10], %s49
      %s51 = sshll.u32 [#allocation11], 4
      %s52 = int_to_ptr.vmem [resolvable:$true] %s51
      %57 = dma.hbm_to_vmem [thread:$0]  %s2, 256, %s52, [#allocation10], 128, 128, 8
    $region13: #{tpu_custom_call.1} parent=1 // pred_fallthru
      _
    // Predicated region
    $region14: #{tpu_custom_call.1} parent=1 // pred_check
      _
    $region15: #{tpu_custom_call.1} parent=1 // pred_check_branch
      %59 = sbr.rel (0) target = $region17
    $region16: #{tpu_custom_call.1} parent=1 // pred_region
      %s61 = ssub.s32 4096, 4096
      %62 = vsyncadd [#allocation13], %s61
      %s63 = sshll.u32 [#allocation12], 4
      %s64 = int_to_ptr.vmem [resolvable:$true] %s63
      %69 = dma.hbm_to_vmem [thread:$0]  %s3, 4096, %s64, [#allocation13], 256, 256, 16
    $region17: #{tpu_custom_call.1} parent=1 // pred_fallthru
      _
    // Predicated region
    $region18: #{tpu_custom_call.1} parent=1 // pred_check
      _
    $region19: #{tpu_custom_call.1} parent=1 // pred_check_branch
      %71 = sbr.rel (0) target = $region21
    $region20: #{tpu_custom_call.1} parent=1 // pred_region
      %s73 = ssub.s32 4096, 4096
      %74 = vsyncadd [#allocation13], %s73
      %s75 = sshll.u32 [#allocation14], 4
      %s76 = int_to_ptr.vmem [resolvable:$true] %s75
      %81 = dma.hbm_to_vmem [thread:$0]  %s4, 4096, %s76, [#allocation13], 256, 256, 16
    $region21: #{tpu_custom_call.1} parent=1 // pred_fallthru
      _
    // Predicated region
    $region22: #{tpu_custom_call.1} parent=1 // pred_check
      _
    $region23: #{tpu_custom_call.1} parent=1 // pred_check_branch
      %83 = sbr.rel (0) target = $region25
    $region24: #{tpu_custom_call.1} parent=1 // pred_region
      _
    $region25: #{tpu_custom_call.1} parent=1 // pred_fallthru
      _
    // Predicated region
    $region26: #{tpu_custom_call.1} parent=1 // pred_check
      _
    $region27: #{tpu_custom_call.1} parent=1 // pred_check_branch
      %85 = sbr.rel (0) target = $region29
    $region28: #{tpu_custom_call.1} parent=1 // pred_region
      %s87 = ssub.s32 1024, 1024
      %88 = vsyncadd [#allocation16], %s87
      %s89 = sshll.u32 [#allocation15], 4
      %s90 = int_to_ptr.vmem [resolvable:$true] %s89
      %95 = dma.hbm_to_vmem [thread:$0]  %s6, 1024, %s90, [#allocation16], 64, 64, 4
    $region29: #{tpu_custom_call.1} parent=1 // pred_fallthru
      _
    // Predicated region
    $region30: #{tpu_custom_call.1} parent=1 // pred_check
      _
    $region31: #{tpu_custom_call.1} parent=1 // pred_check_branch
      %97 = sbr.rel (0) target = $region33
    $region32: #{tpu_custom_call.1} parent=1 // pred_region
      _
    $region33: #{tpu_custom_call.1} parent=1 // pred_fallthru
      _
    // Predicated region
    $region34: #{tpu_custom_call.1} parent=1 // pred_check
      _
    $region35: #{tpu_custom_call.1} parent=1 // pred_check_branch
      %99 = sbr.rel (0) target = $region37
    $region36: #{tpu_custom_call.1} parent=1 // pred_region
      %100 = dma.done [#allocation7], 1024
    $region37: #{tpu_custom_call.1} parent=1 // pred_fallthru
      _
    // Predicated region
    $region38: #{tpu_custom_call.1} parent=1 // pred_check
      _
    $region39: #{tpu_custom_call.1} parent=1 // pred_check_branch
      %102 = sbr.rel (0) target = $region41
    $region40: #{tpu_custom_call.1} parent=1 // pred_region
      %103 = dma.done [#allocation10], 256
    $region41: #{tpu_custom_call.1} parent=1 // pred_fallthru
      _
    // Predicated region
    $region42: #{tpu_custom_call.1} parent=1 // pred_check
      _
    $region43: #{tpu_custom_call.1} parent=1 // pred_check_branch
      %105 = sbr.rel (0) target = $region45
    $region44: #{tpu_custom_call.1} parent=1 // pred_region
      %106 = dma.done [#allocation10], 256
    $region45: #{tpu_custom_call.1} parent=1 // pred_fallthru
      _
    // Predicated region
    $region46: #{tpu_custom_call.1} parent=1 // pred_check
      _
    $region47: #{tpu_custom_call.1} parent=1 // pred_check_branch
      %108 = sbr.rel (0) target = $region49
    $region48: #{tpu_custom_call.1} parent=1 // pred_region
      %109 = dma.done [#allocation13], 4096
    $region49: #{tpu_custom_call.1} parent=1 // pred_fallthru
      _
    // Predicated region
    $region50: #{tpu_custom_call.1} parent=1 // pred_check
      _
    $region51: #{tpu_custom_call.1} parent=1 // pred_check_branch
      %111 = sbr.rel (0) target = $region53
    $region52: #{tpu_custom_call.1} parent=1 // pred_region
      %112 = dma.done [#allocation13], 4096
    $region53: #{tpu_custom_call.1} parent=1 // pred_fallthru
      _
    // Predicated region
    $region54: #{tpu_custom_call.1} parent=1 // pred_check
      _
    $region55: #{tpu_custom_call.1} parent=1 // pred_check_branch
      %114 = sbr.rel (0) target = $region57
    $region56: #{tpu_custom_call.1} parent=1 // pred_region
      %115 = dma.done [#allocation16], 1024
    $region57: #{tpu_custom_call.1} parent=1 // pred_fallthru
      _
    %p117 = scmp.eq.s32.totalorder 0, 0
    // Predicated region
    $region58: #{tpu_custom_call.1} parent=1 // pred_check
      %p118 = pneg %p117
    $region59: #{tpu_custom_call.1} parent=1 // pred_check_branch
      %120 = sbr.rel (%p118) target = $region61
    $region60: #{tpu_custom_call.1} parent=1 // pred_region
      %v121 = vld [vmem:[#allocation9] sm:$0xff]
      %v122 = vld [vmem:[#allocation9 + $0x8] sm:$0xff]
      %123 = vst [vmem:[#allocation4] sm:$0xff] %v121
      %124 = vst [vmem:[#allocation4 + $0x8] sm:$0xff] %v122
      %v125 = vld [vmem:[#allocation11] sm:$0xff]
      %v126 = vld [vmem:[#allocation11 + $0x8] sm:$0xff]
      %127 = vst [vmem:[#allocation5] sm:$0xff] %v125
      %128 = vst [vmem:[#allocation5 + $0x8] sm:$0xff] %v126
    $region61: #{tpu_custom_call.1} parent=1 // pred_fallthru
      _
    %v129 = vld [vmem:[#allocation6] sm:$0xf]
    %v130 = vld [vmem:[#allocation6 + $0x4] sm:$0xf]
    %v131 = vld [vmem:[#allocation6 + $0x8] sm:$0xf]
    %v132 = vld [vmem:[#allocation6 + $0xc] sm:$0xf]
    %v133 = vld [vmem:[#allocation6 + $0x10] sm:$0xf]
    %v134 = vld [vmem:[#allocation6 + $0x14] sm:$0xf]
    %v135 = vld [vmem:[#allocation6 + $0x18] sm:$0xf]
    %v136 = vld [vmem:[#allocation6 + $0x1c] sm:$0xf]
    %v137 = vld [vmem:[#allocation6 + $0x20] sm:$0xf]
    %v138 = vld [vmem:[#allocation6 + $0x24] sm:$0xf]
    %v139 = vld [vmem:[#allocation6 + $0x28] sm:$0xf]
    %v140 = vld [vmem:[#allocation6 + $0x2c] sm:$0xf]
    %v141 = vld [vmem:[#allocation6 + $0x30] sm:$0xf]
    %v142 = vld [vmem:[#allocation6 + $0x34] sm:$0xf]
    %v143 = vld [vmem:[#allocation6 + $0x38] sm:$0xf]
    %v144 = vld [vmem:[#allocation6 + $0x3c] sm:$0xf]
    %v145 = vld [vmem:[#allocation12] sm:$0xff]
    %v146 = vld [vmem:[#allocation12 + $0x8] sm:$0xff]
    %v147 = vld [vmem:[#allocation12 + $0x10] sm:$0xff]
    %v148 = vld [vmem:[#allocation12 + $0x18] sm:$0xff]
    %v149 = vld [vmem:[#allocation12 + $0x20] sm:$0xff]
    %v150 = vld [vmem:[#allocation12 + $0x28] sm:$0xff]
    %v151 = vld [vmem:[#allocation12 + $0x30] sm:$0xff]
    %v152 = vld [vmem:[#allocation12 + $0x38] sm:$0xff]
    %v153 = vld [vmem:[#allocation12 + $0x40] sm:$0xff]
    %v154 = vld [vmem:[#allocation12 + $0x48] sm:$0xff]
    %v155 = vld [vmem:[#allocation12 + $0x50] sm:$0xff]
    %v156 = vld [vmem:[#allocation12 + $0x58] sm:$0xff]
    %v157 = vld [vmem:[#allocation12 + $0x60] sm:$0xff]
    %v158 = vld [vmem:[#allocation12 + $0x68] sm:$0xff]
    %v159 = vld [vmem:[#allocation12 + $0x70] sm:$0xff]
    %v160 = vld [vmem:[#allocation12 + $0x78] sm:$0xff]
    %v161 = vld [vmem:[#allocation12 + $0x80] sm:$0xff]
    %v162 = vld [vmem:[#allocation12 + $0x88] sm:$0xff]
    %v163 = vld [vmem:[#allocation12 + $0x90] sm:$0xff]
    %v164 = vld [vmem:[#allocation12 + $0x98] sm:$0xff]
    %v165 = vld [vmem:[#allocation12 + $0xa0] sm:$0xff]
    %v166 = vld [vmem:[#allocation12 + $0xa8] sm:$0xff]
    %v167 = vld [vmem:[#allocation12 + $0xb0] sm:$0xff]
    %v168 = vld [vmem:[#allocation12 + $0xb8] sm:$0xff]
    %v169 = vld [vmem:[#allocation12 + $0xc0] sm:$0xff]
    %v170 = vld [vmem:[#allocation12 + $0xc8] sm:$0xff]
    %v171 = vld [vmem:[#allocation12 + $0xd0] sm:$0xff]
    %v172 = vld [vmem:[#allocation12 + $0xd8] sm:$0xff]
    %v173 = vld [vmem:[#allocation12 + $0xe0] sm:$0xff]
    %v174 = vld [vmem:[#allocation12 + $0xe8] sm:$0xff]
    %v175 = vld [vmem:[#allocation12 + $0xf0] sm:$0xff]
    %v176 = vld [vmem:[#allocation12 + $0xf8] sm:$0xff]
    %v177 = vld [vmem:[%s5] sm:$0xf]
    %v179 = vlaneseq
    %v180 = vshrl.u32 %v179, 7
    %v181 = vsub.s32 0, %v180
    %v182 = vrot.slane %v177, %v181
    %v183 = vlaneseq
    %v184 = vshrl.u32 %v183, 7
    %v185 = vsub.s32 1, %v184
    %v186 = vrot.slane %v177, %v185
    %v187 = vlaneseq
    %v188 = vshrl.u32 %v187, 7
    %v189 = vsub.s32 2, %v188
    %v190 = vrot.slane %v177, %v189
    %v191 = vlaneseq
    %v192 = vshrl.u32 %v191, 7
    %v193 = vsub.s32 3, %v192
    %v194 = vrot.slane %v177, %v193
    %v215 = vunpack.c.l.b16 %v129
    %v216 = vunpack.c.l.b16 %v130
    %v217 = vunpack.c.l.b16 %v131
    %v218 = vunpack.c.l.b16 %v132
    %v219 = vunpack.c.l.b16 %v133
    %v220 = vunpack.c.l.b16 %v134
    %v221 = vunpack.c.l.b16 %v135
    %v222 = vunpack.c.l.b16 %v136
    %v223 = vunpack.c.l.b16 %v137
    %v224 = vunpack.c.l.b16 %v138
    %v225 = vunpack.c.l.b16 %v139
    %v226 = vunpack.c.l.b16 %v140
    %v227 = vunpack.c.l.b16 %v141
    %v228 = vunpack.c.l.b16 %v142
    %v229 = vunpack.c.l.b16 %v143
    %v230 = vunpack.c.l.b16 %v144
    %v231 = vpack.c.b16 %v216, %v215
    %v232 = vpack.c.b16 %v218, %v217
    %v233 = vpack.c.b16 %v220, %v219
    %v234 = vpack.c.b16 %v222, %v221
    %v235 = vpack.c.b16 %v224, %v223
    %v236 = vpack.c.b16 %v226, %v225
    %v237 = vpack.c.b16 %v228, %v227
    %v238 = vpack.c.b16 %v230, %v229
    %v279 = vunpack.c.l.b16 %v145
    %v280 = vunpack.c.h.b16 %v145
    %v281 = vunpack.c.l.b16 %v146
    %v282 = vunpack.c.h.b16 %v146
    %v283 = vunpack.c.l.b16 %v147
    %v284 = vunpack.c.h.b16 %v147
    %v285 = vunpack.c.l.b16 %v148
    %v286 = vunpack.c.h.b16 %v148
    %v287 = vunpack.c.l.b16 %v149
    %v288 = vunpack.c.h.b16 %v149
    %v289 = vunpack.c.l.b16 %v150
    %v290 = vunpack.c.h.b16 %v150
    %v291 = vunpack.c.l.b16 %v151
    %v292 = vunpack.c.h.b16 %v151
    %v293 = vunpack.c.l.b16 %v152
    %v294 = vunpack.c.h.b16 %v152
    %v295 = vunpack.c.l.b16 %v153
    %v296 = vunpack.c.h.b16 %v153
    %v297 = vunpack.c.l.b16 %v154
    %v298 = vunpack.c.h.b16 %v154
    %v299 = vunpack.c.l.b16 %v155
    %v300 = vunpack.c.h.b16 %v155
    %v301 = vunpack.c.l.b16 %v156
    %v302 = vunpack.c.h.b16 %v156
    %v303 = vunpack.c.l.b16 %v157
    %v304 = vunpack.c.h.b16 %v157
    %v305 = vunpack.c.l.b16 %v158
    %v306 = vunpack.c.h.b16 %v158
    %v307 = vunpack.c.l.b16 %v159
    %v308 = vunpack.c.h.b16 %v159
    %v309 = vunpack.c.l.b16 %v160
    %v310 = vunpack.c.h.b16 %v160
    %v311 = vunpack.c.l.b16 %v161
    %v312 = vunpack.c.h.b16 %v161
    %v313 = vunpack.c.l.b16 %v162
    %v314 = vunpack.c.h.b16 %v162
    %v315 = vunpack.c.l.b16 %v163
    %v316 = vunpack.c.h.b16 %v163
    %v317 = vunpack.c.l.b16 %v164
    %v318 = vunpack.c.h.b16 %v164
    %v319 = vunpack.c.l.b16 %v165
    %v320 = vunpack.c.h.b16 %v165
    %v321 = vunpack.c.l.b16 %v166
    %v322 = vunpack.c.h.b16 %v166
    %v323 = vunpack.c.l.b16 %v167
    %v324 = vunpack.c.h.b16 %v167
    %v325 = vunpack.c.l.b16 %v168
    %v326 = vunpack.c.h.b16 %v168
    %v327 = vunpack.c.l.b16 %v169
    %v328 = vunpack.c.h.b16 %v169
    %v329 = vunpack.c.l.b16 %v170
    %v330 = vunpack.c.h.b16 %v170
    %v331 = vunpack.c.l.b16 %v171
    %v332 = vunpack.c.h.b16 %v171
    %v333 = vunpack.c.l.b16 %v172
    %v334 = vunpack.c.h.b16 %v172
    %v335 = vunpack.c.l.b16 %v173
    %v336 = vunpack.c.h.b16 %v173
    %v337 = vunpack.c.l.b16 %v174
    %v338 = vunpack.c.h.b16 %v174
    %v339 = vunpack.c.l.b16 %v175
    %v340 = vunpack.c.h.b16 %v175
    %v341 = vunpack.c.l.b16 %v176
    %v342 = vunpack.c.h.b16 %v176
    %v343 = vpack.c.b16 %v283, %v279
    %v344 = vpack.c.b16 %v284, %v280
    %v345 = vpack.c.b16 %v285, %v281
    %v346 = vpack.c.b16 %v286, %v282
    %v347 = vpack.c.b16 %v291, %v287
    %v348 = vpack.c.b16 %v292, %v288
    %v349 = vpack.c.b16 %v293, %v289
    %v350 = vpack.c.b16 %v294, %v290
    %v351 = vpack.c.b16 %v299, %v295
    %v352 = vpack.c.b16 %v300, %v296
    %v353 = vpack.c.b16 %v301, %v297
    %v354 = vpack.c.b16 %v302, %v298
    %v355 = vpack.c.b16 %v307, %v303
    %v356 = vpack.c.b16 %v308, %v304
    %v357 = vpack.c.b16 %v309, %v305
    %v358 = vpack.c.b16 %v310, %v306
    %v359 = vpack.c.b16 %v315, %v311
    %v360 = vpack.c.b16 %v316, %v312
    %v361 = vpack.c.b16 %v317, %v313
    %v362 = vpack.c.b16 %v318, %v314
    %v363 = vpack.c.b16 %v323, %v319
    %v364 = vpack.c.b16 %v324, %v320
    %v365 = vpack.c.b16 %v325, %v321
    %v366 = vpack.c.b16 %v326, %v322
    %v367 = vpack.c.b16 %v331, %v327
    %v368 = vpack.c.b16 %v332, %v328
    %v369 = vpack.c.b16 %v333, %v329
    %v370 = vpack.c.b16 %v334, %v330
    %v371 = vpack.c.b16 %v339, %v335
    %v372 = vpack.c.b16 %v340, %v336
    %v373 = vpack.c.b16 %v341, %v337
    %v374 = vpack.c.b16 %v342, %v338
    %407 = vmatprep.subr.bf16.mxu0 %v344
    %408 = vmatpush1.bf16.msra.mxu0 %v343
    %409 = vmatprep.subr.bf16.mxu0 %v348
    %410 = vmatpush1.bf16.msra.mxu0 %v347
    %411 = vmatprep.subr.bf16.mxu0 %v352
    %412 = vmatpush1.bf16.msra.mxu0 %v351
    %413 = vmatprep.subr.bf16.mxu0 %v356
    %414 = vmatpush1.bf16.msra.mxu0 %v355
    %415 = vmatprep.subr.bf16.mxu0 %v360
    %416 = vmatpush1.bf16.msra.mxu0 %v359
    %417 = vmatprep.subr.bf16.mxu0 %v364
    %418 = vmatpush1.bf16.msra.mxu0 %v363
    %419 = vmatprep.subr.bf16.mxu0 %v368
    %420 = vmatpush1.bf16.msra.mxu0 %v367
    %421 = vmatprep.subr.bf16.mxu0 %v372
    %422 = vmatpush1.bf16.msra.mxu0 %v371
    %423 = vmatprep.subr.bf16.mxu0 0
    %424 = vmatpush1.bf16.msra.mxu0 0
    %425 = vmatprep.subr.bf16.mxu0 0
    %426 = vmatpush1.bf16.msra.mxu0 0
    %427 = vmatprep.subr.bf16.mxu0 0
    %428 = vmatpush1.bf16.msra.mxu0 0
    %429 = vmatprep.subr.bf16.mxu0 0
    %430 = vmatpush1.bf16.msra.mxu0 0
    %431 = vmatprep.subr.bf16.mxu0 0
    %432 = vmatpush1.bf16.msra.mxu0 0
    %433 = vmatprep.subr.bf16.mxu0 0
    %434 = vmatpush1.bf16.msra.mxu0 0
    %435 = vmatprep.subr.bf16.mxu0 0
    %436 = vmatpush1.bf16.msra.mxu0 0
    %437 = vmatprep.subr.bf16.mxu0 0
    %438 = vmatpush1.bf16.msra.mxu0 0
    %439 = vmatprep.mubr.bf16.mxu0 0
    %440 = vmatmul.mubr.bf16.gmra.mrb[0].mxu0 %v231
    %v441 = vpop.f32.mrb[0].mxu0
    %v442 = vadd.f32 %v182, %v441
    %v443 = vpop.f32.mrb[0].mxu0
    %v444 = vadd.f32 %v186, %v443
    %v445 = vpop.f32.mrb[0].mxu0
    %v446 = vadd.f32 %v182, %v445
    %v447 = vpop.f32.mrb[0].mxu0
    %v448 = vadd.f32 %v186, %v447
    %449 = vmatprep.mubr.bf16.mxu0 0
    %450 = vmatmul.mubr.bf16.gmra.mrb[0].mxu0 %v232
    %v451 = vpop.f32.mrb[0].mxu0
    %v452 = vadd.f32 %v182, %v451
    %v453 = vpop.f32.mrb[0].mxu0
    %v454 = vadd.f32 %v186, %v453
    %v455 = vpop.f32.mrb[0].mxu0
    %v456 = vadd.f32 %v182, %v455
    %v457 = vpop.f32.mrb[0].mxu0
    %v458 = vadd.f32 %v186, %v457
    %459 = vmatprep.mubr.bf16.mxu0 0
    %460 = vmatmul.mubr.bf16.gmra.mrb[0].mxu0 %v233
    %v461 = vpop.f32.mrb[0].mxu0
    %v462 = vadd.f32 %v182, %v461
    %v463 = vpop.f32.mrb[0].mxu0
    %v464 = vadd.f32 %v186, %v463
    %v465 = vpop.f32.mrb[0].mxu0
    %v466 = vadd.f32 %v182, %v465
    %v467 = vpop.f32.mrb[0].mxu0
    %v468 = vadd.f32 %v186, %v467
    %469 = vmatprep.mubr.bf16.mxu0 0
    %470 = vmatmul.mubr.bf16.gmra.mrb[0].mxu0 %v234
    %v471 = vpop.f32.mrb[0].mxu0
    %v472 = vadd.f32 %v182, %v471
    %v473 = vpop.f32.mrb[0].mxu0
    %v474 = vadd.f32 %v186, %v473
    %v475 = vpop.f32.mrb[0].mxu0
    %v476 = vadd.f32 %v182, %v475
    %v477 = vpop.f32.mrb[0].mxu0
    %v478 = vadd.f32 %v186, %v477
    %479 = vmatprep.mubr.bf16.mxu0 0
    %480 = vmatmul.mubr.bf16.gmra.mrb[0].mxu0 %v235
    %v481 = vpop.f32.mrb[0].mxu0
    %v482 = vadd.f32 %v182, %v481
    %v483 = vpop.f32.mrb[0].mxu0
    %v484 = vadd.f32 %v186, %v483
    %v485 = vpop.f32.mrb[0].mxu0
    %v486 = vadd.f32 %v182, %v485
    %v487 = vpop.f32.mrb[0].mxu0
    %v488 = vadd.f32 %v186, %v487
    %489 = vmatprep.mubr.bf16.mxu0 0
    %490 = vmatmul.mubr.bf16.gmra.mrb[0].mxu0 %v236
    %v491 = vpop.f32.mrb[0].mxu0
    %v492 = vadd.f32 %v182, %v491
    %v493 = vpop.f32.mrb[0].mxu0
    %v494 = vadd.f32 %v186, %v493
    %v495 = vpop.f32.mrb[0].mxu0
    %v496 = vadd.f32 %v182, %v495
    %v497 = vpop.f32.mrb[0].mxu0
    %v498 = vadd.f32 %v186, %v497
    %499 = vmatprep.mubr.bf16.mxu0 0
    %500 = vmatmul.mubr.bf16.gmra.mrb[0].mxu0 %v237
    %v501 = vpop.f32.mrb[0].mxu0
    %v502 = vadd.f32 %v182, %v501
    %v503 = vpop.f32.mrb[0].mxu0
    %v504 = vadd.f32 %v186, %v503
    %v505 = vpop.f32.mrb[0].mxu0
    %v506 = vadd.f32 %v182, %v505
    %v507 = vpop.f32.mrb[0].mxu0
    %v508 = vadd.f32 %v186, %v507
    %509 = vmatprep.mubr.bf16.mxu0 0
    %510 = vmatmul.mubr.bf16.gmra.mrb[0].mxu0 %v238
    %v511 = vpop.f32.mrb[0].mxu0
    %v512 = vadd.f32 %v182, %v511
    %v513 = vpop.f32.mrb[0].mxu0
    %v514 = vadd.f32 %v186, %v513
    %v515 = vpop.f32.mrb[0].mxu0
    %v516 = vadd.f32 %v182, %v515
    %v517 = vpop.f32.mrb[0].mxu0
    %v518 = vadd.f32 %v186, %v517
    %519 = vdwg.mxu0
    %520 = vmatprep.subr.bf16.mxu0 %v346
    %521 = vmatpush1.bf16.msra.mxu0 %v345
    %522 = vmatprep.subr.bf16.mxu0 %v350
    %523 = vmatpush1.bf16.msra.mxu0 %v349
    %524 = vmatprep.subr.bf16.mxu0 %v354
    %525 = vmatpush1.bf16.msra.mxu0 %v353
    %526 = vmatprep.subr.bf16.mxu0 %v358
    %527 = vmatpush1.bf16.msra.mxu0 %v357
    %528 = vmatprep.subr.bf16.mxu0 %v362
    %529 = vmatpush1.bf16.msra.mxu0 %v361
    %530 = vmatprep.subr.bf16.mxu0 %v366
    %531 = vmatpush1.bf16.msra.mxu0 %v365
    %532 = vmatprep.subr.bf16.mxu0 %v370
    %533 = vmatpush1.bf16.msra.mxu0 %v369
    %534 = vmatprep.subr.bf16.mxu0 %v374
    %535 = vmatpush1.bf16.msra.mxu0 %v373
    %536 = vmatprep.subr.bf16.mxu0 0
    %537 = vmatpush1.bf16.msra.mxu0 0
    %538 = vmatprep.subr.bf16.mxu0 0
    %539 = vmatpush1.bf16.msra.mxu0 0
    %540 = vmatprep.subr.bf16.mxu0 0
    %541 = vmatpush1.bf16.msra.mxu0 0
    %542 = vmatprep.subr.bf16.mxu0 0
    %543 = vmatpush1.bf16.msra.mxu0 0
    %544 = vmatprep.subr.bf16.mxu0 0
    %545 = vmatpush1.bf16.msra.mxu0 0
    %546 = vmatprep.subr.bf16.mxu0 0
    %547 = vmatpush1.bf16.msra.mxu0 0
    %548 = vmatprep.subr.bf16.mxu0 0
    %549 = vmatpush1.bf16.msra.mxu0 0
    %550 = vmatprep.subr.bf16.mxu0 0
    %551 = vmatpush1.bf16.msra.mxu0 0
    %552 = vmatprep.mubr.bf16.mxu0 0
    %553 = vmatmul.mubr.bf16.gmra.mrb[0].mxu0 %v231
    %v554 = vpop.f32.mrb[0].mxu0
    %v555 = vadd.f32 %v190, %v554
    %v556 = vpop.f32.mrb[0].mxu0
    %v557 = vadd.f32 %v194, %v556
    %v558 = vpop.f32.mrb[0].mxu0
    %v559 = vadd.f32 %v190, %v558
    %v560 = vpop.f32.mrb[0].mxu0
    %v561 = vadd.f32 %v194, %v560
    %562 = vmatprep.mubr.bf16.mxu0 0
    %563 = vmatmul.mubr.bf16.gmra.mrb[0].mxu0 %v232
    %v564 = vpop.f32.mrb[0].mxu0
    %v565 = vadd.f32 %v190, %v564
    %v566 = vpop.f32.mrb[0].mxu0
    %v567 = vadd.f32 %v194, %v566
    %v568 = vpop.f32.mrb[0].mxu0
    %v569 = vadd.f32 %v190, %v568
    %v570 = vpop.f32.mrb[0].mxu0
    %v571 = vadd.f32 %v194, %v570
    %572 = vmatprep.mubr.bf16.mxu0 0
    %573 = vmatmul.mubr.bf16.gmra.mrb[0].mxu0 %v233
    %v574 = vpop.f32.mrb[0].mxu0
    %v575 = vadd.f32 %v190, %v574
    %v576 = vpop.f32.mrb[0].mxu0
    %v577 = vadd.f32 %v194, %v576
    %v578 = vpop.f32.mrb[0].mxu0
    %v579 = vadd.f32 %v190, %v578
    %v580 = vpop.f32.mrb[0].mxu0
    %v581 = vadd.f32 %v194, %v580
    %582 = vmatprep.mubr.bf16.mxu0 0
    %583 = vmatmul.mubr.bf16.gmra.mrb[0].mxu0 %v234
    %v584 = vpop.f32.mrb[0].mxu0
    %v585 = vadd.f32 %v190, %v584
    %v586 = vpop.f32.mrb[0].mxu0
    %v587 = vadd.f32 %v194, %v586
    %v588 = vpop.f32.mrb[0].mxu0
    %v589 = vadd.f32 %v190, %v588
    %v590 = vpop.f32.mrb[0].mxu0
    %v591 = vadd.f32 %v194, %v590
    %592 = vmatprep.mubr.bf16.mxu0 0
    %593 = vmatmul.mubr.bf16.gmra.mrb[0].mxu0 %v235
    %v594 = vpop.f32.mrb[0].mxu0
    %v595 = vadd.f32 %v190, %v594
    %v596 = vpop.f32.mrb[0].mxu0
    %v597 = vadd.f32 %v194, %v596
    %v598 = vpop.f32.mrb[0].mxu0
    %v599 = vadd.f32 %v190, %v598
    %v600 = vpop.f32.mrb[0].mxu0
    %v601 = vadd.f32 %v194, %v600
    %602 = vmatprep.mubr.bf16.mxu0 0
    %603 = vmatmul.mubr.bf16.gmra.mrb[0].mxu0 %v236
    %v604 = vpop.f32.mrb[0].mxu0
    %v605 = vadd.f32 %v190, %v604
    %v606 = vpop.f32.mrb[0].mxu0
    %v607 = vadd.f32 %v194, %v606
    %v608 = vpop.f32.mrb[0].mxu0
    %v609 = vadd.f32 %v190, %v608
    %v610 = vpop.f32.mrb[0].mxu0
    %v611 = vadd.f32 %v194, %v610
    %612 = vmatprep.mubr.bf16.mxu0 0
    %613 = vmatmul.mubr.bf16.gmra.mrb[0].mxu0 %v237
    %v614 = vpop.f32.mrb[0].mxu0
    %v615 = vadd.f32 %v190, %v614
    %v616 = vpop.f32.mrb[0].mxu0
    %v617 = vadd.f32 %v194, %v616
    %v618 = vpop.f32.mrb[0].mxu0
    %v619 = vadd.f32 %v190, %v618
    %v620 = vpop.f32.mrb[0].mxu0
    %v621 = vadd.f32 %v194, %v620
    %622 = vmatprep.mubr.bf16.mxu0 0
    %623 = vmatmul.mubr.bf16.gmra.mrb[0].mxu0 %v238
    %v624 = vpop.f32.mrb[0].mxu0
    %v625 = vadd.f32 %v190, %v624
    %v626 = vpop.f32.mrb[0].mxu0
    %v627 = vadd.f32 %v194, %v626
    %v628 = vpop.f32.mrb[0].mxu0
    %v629 = vadd.f32 %v190, %v628
    %v630 = vpop.f32.mrb[0].mxu0
    %v631 = vadd.f32 %v194, %v630
    %632 = vdwg.mxu0
    %633 = vst [vmem:[#allocation2] sm:$0xff] %v442
    %634 = vst [vmem:[#allocation2 + $0x8] sm:$0xff] %v444
    %635 = vst [vmem:[#allocation2 + $0x10] sm:$0xff] %v555
    %636 = vst [vmem:[#allocation2 + $0x18] sm:$0xff] %v557
    %637 = vst [vmem:[#allocation2 + $0x20] sm:$0xff] %v446
    %638 = vst [vmem:[#allocation2 + $0x28] sm:$0xff] %v448
    %639 = vst [vmem:[#allocation2 + $0x30] sm:$0xff] %v559
    %640 = vst [vmem:[#allocation2 + $0x38] sm:$0xff] %v561
    %641 = vst [vmem:[#allocation2 + $0x40] sm:$0xff] %v452
    %642 = vst [vmem:[#allocation2 + $0x48] sm:$0xff] %v454
    %643 = vst [vmem:[#allocation2 + $0x50] sm:$0xff] %v565
    %644 = vst [vmem:[#allocation2 + $0x58] sm:$0xff] %v567
    %645 = vst [vmem:[#allocation2 + $0x60] sm:$0xff] %v456
    %646 = vst [vmem:[#allocation2 + $0x68] sm:$0xff] %v458
    %647 = vst [vmem:[#allocation2 + $0x70] sm:$0xff] %v569
    %648 = vst [vmem:[#allocation2 + $0x78] sm:$0xff] %v571
    %649 = vst [vmem:[#allocation2 + $0x80] sm:$0xff] %v462
    %650 = vst [vmem:[#allocation2 + $0x88] sm:$0xff] %v464
    %651 = vst [vmem:[#allocation2 + $0x90] sm:$0xff] %v575
    %652 = vst [vmem:[#allocation2 + $0x98] sm:$0xff] %v577
    %653 = vst [vmem:[#allocation2 + $0xa0] sm:$0xff] %v466
    %654 = vst [vmem:[#allocation2 + $0xa8] sm:$0xff] %v468
    %655 = vst [vmem:[#allocation2 + $0xb0] sm:$0xff] %v579
    %656 = vst [vmem:[#allocation2 + $0xb8] sm:$0xff] %v581
    %657 = vst [vmem:[#allocation2 + $0xc0] sm:$0xff] %v472
    %658 = vst [vmem:[#allocation2 + $0xc8] sm:$0xff] %v474
    %659 = vst [vmem:[#allocation2 + $0xd0] sm:$0xff] %v585
    %660 = vst [vmem:[#allocation2 + $0xd8] sm:$0xff] %v587
    %661 = vst [vmem:[#allocation2 + $0xe0] sm:$0xff] %v476
    %662 = vst [vmem:[#allocation2 + $0xe8] sm:$0xff] %v478
    %663 = vst [vmem:[#allocation2 + $0xf0] sm:$0xff] %v589
    %664 = vst [vmem:[#allocation2 + $0xf8] sm:$0xff] %v591
    %665 = vst [vmem:[#allocation2 + $0x100] sm:$0xff] %v482
    %666 = vst [vmem:[#allocation2 + $0x108] sm:$0xff] %v484
    %667 = vst [vmem:[#allocation2 + $0x110] sm:$0xff] %v595
    %668 = vst [vmem:[#allocation2 + $0x118] sm:$0xff] %v597
    %669 = vst [vmem:[#allocation2 + $0x120] sm:$0xff] %v486
    %670 = vst [vmem:[#allocation2 + $0x128] sm:$0xff] %v488
    %671 = vst [vmem:[#allocation2 + $0x130] sm:$0xff] %v599
    %672 = vst [vmem:[#allocation2 + $0x138] sm:$0xff] %v601
    %673 = vst [vmem:[#allocation2 + $0x140] sm:$0xff] %v492
    %674 = vst [vmem:[#allocation2 + $0x148] sm:$0xff] %v494
    %675 = vst [vmem:[#allocation2 + $0x150] sm:$0xff] %v605
    %676 = vst [vmem:[#allocation2 + $0x158] sm:$0xff] %v607
    %677 = vst [vmem:[#allocation2 + $0x160] sm:$0xff] %v496
    %678 = vst [vmem:[#allocation2 + $0x168] sm:$0xff] %v498
    %679 = vst [vmem:[#allocation2 + $0x170] sm:$0xff] %v609
    %680 = vst [vmem:[#allocation2 + $0x178] sm:$0xff] %v611
    %681 = vst [vmem:[#allocation2 + $0x180] sm:$0xff] %v502
    %682 = vst [vmem:[#allocation2 + $0x188] sm:$0xff] %v504
    %683 = vst [vmem:[#allocation2 + $0x190] sm:$0xff] %v615
    %684 = vst [vmem:[#allocation2 + $0x198] sm:$0xff] %v617
    %685 = vst [vmem:[#allocation2 + $0x1a0] sm:$0xff] %v506
    %686 = vst [vmem:[#allocation2 + $0x1a8] sm:$0xff] %v508
    %687 = vst [vmem:[#allocation2 + $0x1b0] sm:$0xff] %v619
    %688 = vst [vmem:[#allocation2 + $0x1b8] sm:$0xff] %v621
    %689 = vst [vmem:[#allocation2 + $0x1c0] sm:$0xff] %v512
    %690 = vst [vmem:[#allocation2 + $0x1c8] sm:$0xff] %v514
    %691 = vst [vmem:[#allocation2 + $0x1d0] sm:$0xff] %v625
    %692 = vst [vmem:[#allocation2 + $0x1d8] sm:$0xff] %v627
    %693 = vst [vmem:[#allocation2 + $0x1e0] sm:$0xff] %v516
    %694 = vst [vmem:[#allocation2 + $0x1e8] sm:$0xff] %v518
    %695 = vst [vmem:[#allocation2 + $0x1f0] sm:$0xff] %v629
    %696 = vst [vmem:[#allocation2 + $0x1f8] sm:$0xff] %v631
    %v697 = vld [vmem:[#allocation14] sm:$0xff]
    %v698 = vld [vmem:[#allocation14 + $0x8] sm:$0xff]
    %v699 = vld [vmem:[#allocation14 + $0x10] sm:$0xff]
    %v700 = vld [vmem:[#allocation14 + $0x18] sm:$0xff]
    %v701 = vld [vmem:[#allocation14 + $0x20] sm:$0xff]
    %v702 = vld [vmem:[#allocation14 + $0x28] sm:$0xff]
    %v703 = vld [vmem:[#allocation14 + $0x30] sm:$0xff]
    %v704 = vld [vmem:[#allocation14 + $0x38] sm:$0xff]
    %v705 = vld [vmem:[#allocation14 + $0x40] sm:$0xff]
    %v706 = vld [vmem:[#allocation14 + $0x48] sm:$0xff]
    %v707 = vld [vmem:[#allocation14 + $0x50] sm:$0xff]
    %v708 = vld [vmem:[#allocation14 + $0x58] sm:$0xff]
    %v709 = vld [vmem:[#allocation14 + $0x60] sm:$0xff]
    %v710 = vld [vmem:[#allocation14 + $0x68] sm:$0xff]
    %v711 = vld [vmem:[#allocation14 + $0x70] sm:$0xff]
    %v712 = vld [vmem:[#allocation14 + $0x78] sm:$0xff]
    %v713 = vld [vmem:[#allocation14 + $0x80] sm:$0xff]
    %v714 = vld [vmem:[#allocation14 + $0x88] sm:$0xff]
    %v715 = vld [vmem:[#allocation14 + $0x90] sm:$0xff]
    %v716 = vld [vmem:[#allocation14 + $0x98] sm:$0xff]
    %v717 = vld [vmem:[#allocation14 + $0xa0] sm:$0xff]
    %v718 = vld [vmem:[#allocation14 + $0xa8] sm:$0xff]
    %v719 = vld [vmem:[#allocation14 + $0xb0] sm:$0xff]
    %v720 = vld [vmem:[#allocation14 + $0xb8] sm:$0xff]
    %v721 = vld [vmem:[#allocation14 + $0xc0] sm:$0xff]
    %v722 = vld [vmem:[#allocation14 + $0xc8] sm:$0xff]
    %v723 = vld [vmem:[#allocation14 + $0xd0] sm:$0xff]
    %v724 = vld [vmem:[#allocation14 + $0xd8] sm:$0xff]
    %v725 = vld [vmem:[#allocation14 + $0xe0] sm:$0xff]
    %v726 = vld [vmem:[#allocation14 + $0xe8] sm:$0xff]
    %v727 = vld [vmem:[#allocation14 + $0xf0] sm:$0xff]
    %v728 = vld [vmem:[#allocation14 + $0xf8] sm:$0xff]
    %s729 = smul.u32 0, 8
    %v730 = vld [vmem:[#allocation4] sm:$0xff]
    %v731 = vld [vmem:[#allocation4 + $0x8] sm:$0xff]
    %v732 = vld [vmem:[#allocation5] sm:$0xff]
    %v733 = vld [vmem:[#allocation5 + $0x8] sm:$0xff]
    %v734 = vld [vmem:[#allocation2] sm:$0xff]
    %v735 = vld [vmem:[#allocation2 + $0x8] sm:$0xff]
    %v736 = vld [vmem:[#allocation2 + $0x10] sm:$0xff]
    %v737 = vld [vmem:[#allocation2 + $0x18] sm:$0xff]
    %v738 = vld [vmem:[#allocation2 + $0x20] sm:$0xff]
    %v739 = vld [vmem:[#allocation2 + $0x28] sm:$0xff]
    %v740 = vld [vmem:[#allocation2 + $0x30] sm:$0xff]
    %v741 = vld [vmem:[#allocation2 + $0x38] sm:$0xff]
    %v742 = vpack.c.bf16 %v731, %v730
    %v775 = vunpack.c.l.b16 %v697
    %v776 = vunpack.c.h.b16 %v697
    %v777 = vunpack.c.l.b16 %v698
    %v778 = vunpack.c.h.b16 %v698
    %v779 = vunpack.c.l.b16 %v699
    %v780 = vunpack.c.h.b16 %v699
    %v781 = vunpack.c.l.b16 %v700
    %v782 = vunpack.c.h.b16 %v700
    %v783 = vunpack.c.l.b16 %v701
    %v784 = vunpack.c.h.b16 %v701
    %v785 = vunpack.c.l.b16 %v702
    %v786 = vunpack.c.h.b16 %v702
    %v787 = vunpack.c.l.b16 %v703
    %v788 = vunpack.c.h.b16 %v703
    %v789 = vunpack.c.l.b16 %v704
    %v790 = vunpack.c.h.b16 %v704
    %v791 = vunpack.c.l.b16 %v705
    %v792 = vunpack.c.h.b16 %v705
    %v793 = vunpack.c.l.b16 %v706
    %v794 = vunpack.c.h.b16 %v706
    %v795 = vunpack.c.l.b16 %v707
    %v796 = vunpack.c.h.b16 %v707
    %v797 = vunpack.c.l.b16 %v708
    %v798 = vunpack.c.h.b16 %v708
    %v799 = vunpack.c.l.b16 %v709
    %v800 = vunpack.c.h.b16 %v709
    %v801 = vunpack.c.l.b16 %v710
    %v802 = vunpack.c.h.b16 %v710
    %v803 = vunpack.c.l.b16 %v711
    %v804 = vunpack.c.h.b16 %v711
    %v805 = vunpack.c.l.b16 %v712
    %v806 = vunpack.c.h.b16 %v712
    %v807 = vunpack.c.l.b16 %v713
    %v808 = vunpack.c.h.b16 %v713
    %v809 = vunpack.c.l.b16 %v714
    %v810 = vunpack.c.h.b16 %v714
    %v811 = vunpack.c.l.b16 %v715
    %v812 = vunpack.c.h.b16 %v715
    %v813 = vunpack.c.l.b16 %v716
    %v814 = vunpack.c.h.b16 %v716
    %v815 = vunpack.c.l.b16 %v717
    %v816 = vunpack.c.h.b16 %v717
    %v817 = vunpack.c.l.b16 %v718
    %v818 = vunpack.c.h.b16 %v718
    %v819 = vunpack.c.l.b16 %v719
    %v820 = vunpack.c.h.b16 %v719
    %v821 = vunpack.c.l.b16 %v720
    %v822 = vunpack.c.h.b16 %v720
    %v823 = vunpack.c.l.b16 %v721
    %v824 = vunpack.c.h.b16 %v721
    %v825 = vunpack.c.l.b16 %v722
    %v826 = vunpack.c.h.b16 %v722
    %v827 = vunpack.c.l.b16 %v723
    %v828 = vunpack.c.h.b16 %v723
    %v829 = vunpack.c.l.b16 %v724
    %v830 = vunpack.c.h.b16 %v724
    %v831 = vunpack.c.l.b16 %v725
    %v832 = vunpack.c.h.b16 %v725
    %v833 = vunpack.c.l.b16 %v726
    %v834 = vunpack.c.h.b16 %v726
    %v835 = vunpack.c.l.b16 %v727
    %v836 = vunpack.c.h.b16 %v727
    %v837 = vunpack.c.l.b16 %v728
    %v838 = vunpack.c.h.b16 %v728
    %v839 = vpack.c.b16 %v779, %v775
    %v840 = vpack.c.b16 %v780, %v776
    %v841 = vpack.c.b16 %v781, %v777
    %v842 = vpack.c.b16 %v782, %v778
    %v843 = vpack.c.b16 %v787, %v783
    %v844 = vpack.c.b16 %v788, %v784
    %v845 = vpack.c.b16 %v789, %v785
    %v846 = vpack.c.b16 %v790, %v786
    %v847 = vpack.c.b16 %v795, %v791
    %v848 = vpack.c.b16 %v796, %v792
    %v849 = vpack.c.b16 %v797, %v793
    %v850 = vpack.c.b16 %v798, %v794
    %v851 = vpack.c.b16 %v803, %v799
    %v852 = vpack.c.b16 %v804, %v800
    %v853 = vpack.c.b16 %v805, %v801
    %v854 = vpack.c.b16 %v806, %v802
    %v855 = vpack.c.b16 %v811, %v807
    %v856 = vpack.c.b16 %v812, %v808
    %v857 = vpack.c.b16 %v813, %v809
    %v858 = vpack.c.b16 %v814, %v810
    %v859 = vpack.c.b16 %v819, %v815
    %v860 = vpack.c.b16 %v820, %v816
    %v861 = vpack.c.b16 %v821, %v817
    %v862 = vpack.c.b16 %v822, %v818
    %v863 = vpack.c.b16 %v827, %v823
    %v864 = vpack.c.b16 %v828, %v824
    %v865 = vpack.c.b16 %v829, %v825
    %v866 = vpack.c.b16 %v830, %v826
    %v867 = vpack.c.b16 %v835, %v831
    %v868 = vpack.c.b16 %v836, %v832
    %v869 = vpack.c.b16 %v837, %v833
    %v870 = vpack.c.b16 %v838, %v834
    %903 = vmatprep.subr.bf16.mxu0 %v840
    %904 = vmatpush1.bf16.msra.mxu0 %v839
    %905 = vmatprep.subr.bf16.mxu0 %v844
    %906 = vmatpush1.bf16.msra.mxu0 %v843
    %907 = vmatprep.subr.bf16.mxu0 %v848
    %908 = vmatpush1.bf16.msra.mxu0 %v847
    %909 = vmatprep.subr.bf16.mxu0 %v852
    %910 = vmatpush1.bf16.msra.mxu0 %v851
    %911 = vmatprep.subr.bf16.mxu0 %v856
    %912 = vmatpush1.bf16.msra.mxu0 %v855
    %913 = vmatprep.subr.bf16.mxu0 %v860
    %914 = vmatpush1.bf16.msra.mxu0 %v859
    %915 = vmatprep.subr.bf16.mxu0 %v864
    %916 = vmatpush1.bf16.msra.mxu0 %v863
    %917 = vmatprep.subr.bf16.mxu0 %v868
    %918 = vmatpush1.bf16.msra.mxu0 %v867
    %919 = vmatprep.subr.bf16.mxu0 0
    %920 = vmatpush1.bf16.msra.mxu0 0
    %921 = vmatprep.subr.bf16.mxu0 0
    %922 = vmatpush1.bf16.msra.mxu0 0
    %923 = vmatprep.subr.bf16.mxu0 0
    %924 = vmatpush1.bf16.msra.mxu0 0
    %925 = vmatprep.subr.bf16.mxu0 0
    %926 = vmatpush1.bf16.msra.mxu0 0
    %927 = vmatprep.subr.bf16.mxu0 0
    %928 = vmatpush1.bf16.msra.mxu0 0
    %929 = vmatprep.subr.bf16.mxu0 0
    %930 = vmatpush1.bf16.msra.mxu0 0
    %931 = vmatprep.subr.bf16.mxu0 0
    %932 = vmatpush1.bf16.msra.mxu0 0
    %933 = vmatprep.subr.bf16.mxu0 0
    %934 = vmatpush1.bf16.msra.mxu0 0
    %935 = vmatprep.mubr.bf16.mxu0 0
    %936 = vmatmul.mubr.bf16.gmra.mrb[0].mxu0 %v742
    %v937 = vpop.f32.mrb[0].mxu0
    %v938 = vadd.f32 0.0, %v937
    %v939 = vpop.f32.mrb[0].mxu0
    %v940 = vadd.f32 0.0, %v939
    %v941 = vpop.f32.mrb[0].mxu0
    %v942 = vadd.f32 0.0, %v941
    %v943 = vpop.f32.mrb[0].mxu0
    %v944 = vadd.f32 0.0, %v943
    %945 = vdwg.mxu0
    %946 = vmatprep.subr.bf16.mxu0 %v842
    %947 = vmatpush1.bf16.msra.mxu0 %v841
    %948 = vmatprep.subr.bf16.mxu0 %v846
    %949 = vmatpush1.bf16.msra.mxu0 %v845
    %950 = vmatprep.subr.bf16.mxu0 %v850
    %951 = vmatpush1.bf16.msra.mxu0 %v849
    %952 = vmatprep.subr.bf16.mxu0 %v854
    %953 = vmatpush1.bf16.msra.mxu0 %v853
    %954 = vmatprep.subr.bf16.mxu0 %v858
    %955 = vmatpush1.bf16.msra.mxu0 %v857
    %956 = vmatprep.subr.bf16.mxu0 %v862
    %957 = vmatpush1.bf16.msra.mxu0 %v861
    %958 = vmatprep.subr.bf16.mxu0 %v866
    %959 = vmatpush1.bf16.msra.mxu0 %v865
    %960 = vmatprep.subr.bf16.mxu0 %v870
    %961 = vmatpush1.bf16.msra.mxu0 %v869
    %962 = vmatprep.subr.bf16.mxu0 0
    %963 = vmatpush1.bf16.msra.mxu0 0
    %964 = vmatprep.subr.bf16.mxu0 0
    %965 = vmatpush1.bf16.msra.mxu0 0
    %966 = vmatprep.subr.bf16.mxu0 0
    %967 = vmatpush1.bf16.msra.mxu0 0
    %968 = vmatprep.subr.bf16.mxu0 0
    %969 = vmatpush1.bf16.msra.mxu0 0
    %970 = vmatprep.subr.bf16.mxu0 0
    %971 = vmatpush1.bf16.msra.mxu0 0
    %972 = vmatprep.subr.bf16.mxu0 0
    %973 = vmatpush1.bf16.msra.mxu0 0
    %974 = vmatprep.subr.bf16.mxu0 0
    %975 = vmatpush1.bf16.msra.mxu0 0
    %976 = vmatprep.subr.bf16.mxu0 0
    %977 = vmatpush1.bf16.msra.mxu0 0
    %978 = vmatprep.mubr.bf16.mxu0 0
    %979 = vmatmul.mubr.bf16.gmra.mrb[0].mxu0 %v742
    %v980 = vpop.f32.mrb[0].mxu0
    %v981 = vadd.f32 0.0, %v980
    %v982 = vpop.f32.mrb[0].mxu0
    %v983 = vadd.f32 0.0, %v982
    %v984 = vpop.f32.mrb[0].mxu0
    %v985 = vadd.f32 0.0, %v984
    %v986 = vpop.f32.mrb[0].mxu0
    %v987 = vadd.f32 0.0, %v986
    %988 = vdwg.mxu0
    %v989 = vadd.f32 %v734, %v938
    %v990 = vadd.f32 %v735, %v940
    %v991 = vadd.f32 %v736, %v981
    %v992 = vadd.f32 %v737, %v983
    %v993 = vadd.f32 %v738, %v942
    %v994 = vadd.f32 %v739, %v944
    %v995 = vadd.f32 %v740, %v985
    %v996 = vadd.f32 %v741, %v987
    %v997 = vxor.u32 %v989, 2147483648
    %v998 = vxor.u32 %v993, 2147483648
    %v999 = vmul.f32 %v997, 1.442695
    %v1000 = vpow.pop %v999
    %v1001 = vmul.f32 %v998, 1.442695
    %v1002 = vpow.pop %v1001
    %v1003 = vadd.f32 %v1000, 1.0
    %v1004 = vadd.f32 %v1002, 1.0
    %v1005 = vrcp.pop %v1003
    %v1006 = vmul.f32 1.0, %v1005
    %v1007 = vrcp.pop %v1004
    %v1008 = vmul.f32 1.0, %v1007
    %v1009 = vxor.u32 %v990, 2147483648
    %v1010 = vxor.u32 %v994, 2147483648
    %v1011 = vmul.f32 %v1009, 1.442695
    %v1012 = vpow.pop %v1011
    %v1013 = vmul.f32 %v1010, 1.442695
    %v1014 = vpow.pop %v1013
    %v1015 = vadd.f32 %v1012, 1.0
    %v1016 = vadd.f32 %v1014, 1.0
    %v1017 = vrcp.pop %v1015
    %v1018 = vmul.f32 1.0, %v1017
    %v1019 = vrcp.pop %v1016
    %v1020 = vmul.f32 1.0, %v1019
    %v1021 = vtanh.pop %v991
    %v1022 = vtanh.pop %v995
    %v1023 = vxor.u32 %v992, 2147483648
    %v1024 = vxor.u32 %v996, 2147483648
    %v1025 = vmul.f32 %v1023, 1.442695
    %v1026 = vpow.pop %v1025
    %v1027 = vmul.f32 %v1024, 1.442695
    %v1028 = vpow.pop %v1027
    %v1029 = vadd.f32 %v1026, 1.0
    %v1030 = vadd.f32 %v1028, 1.0
    %v1031 = vrcp.pop %v1029
    %v1032 = vmul.f32 1.0, %v1031
    %v1033 = vrcp.pop %v1030
    %v1034 = vmul.f32 1.0, %v1033
    %v1035 = vmul.f32 %v1018, %v732
    %v1036 = vmul.f32 %v1020, %v733
    %v1037 = vmul.f32 %v1006, %v1021
    %v1038 = vmul.f32 %v1008, %v1022
    %v1039 = vadd.f32 %v1035, %v1037
    %v1040 = vadd.f32 %v1036, %v1038
    %v1041 = vtanh.pop %v1039
    %v1042 = vtanh.pop %v1040
    %v1043 = vmul.f32 %v1032, %v1041
    %v1044 = vmul.f32 %v1034, %v1042
    %v1045 = vpack.c.bf16 %v1044, %v1043
    %1046 = vst [vmem:[#allocation3] sm:$0xff] %v1045
    %p1047 = scmp.lt.s32.totalorder %s729, 8
    %s1048 = scalar_select %p1047, 1, 0
    %v1049 = vstv %s1048
    %vm1050 = vcmp.eq.s32.totalorder %v1049, 1
    %v1051 = vsel %vm1050, %v1043, %v730
    %v1052 = vsel %vm1050, %v1044, %v731
    %v1053 = vsel %vm1050, %v1039, %v732
    %v1054 = vsel %vm1050, %v1040, %v733
    %s1055 = scalar_lea.vmem [#allocation2], 64
    %v1056 = vld [vmem:[%s1055] sm:$0xff]
    %v1057 = vld [vmem:[%s1055 + $0x8] sm:$0xff]
    %v1058 = vld [vmem:[%s1055 + $0x10] sm:$0xff]
    %v1059 = vld [vmem:[%s1055 + $0x18] sm:$0xff]
    %v1060 = vld [vmem:[%s1055 + $0x20] sm:$0xff]
    %v1061 = vld [vmem:[%s1055 + $0x28] sm:$0xff]
    %v1062 = vld [vmem:[%s1055 + $0x30] sm:$0xff]
    %v1063 = vld [vmem:[%s1055 + $0x38] sm:$0xff]
    %v1064 = vpack.c.bf16 %v1052, %v1051
    %1065 = vmatprep.subr.bf16.mxu0 %v840
    %1066 = vmatpush1.bf16.msra.mxu0 %v839
    %1067 = vmatprep.subr.bf16.mxu0 %v844
    %1068 = vmatpush1.bf16.msra.mxu0 %v843
    %1069 = vmatprep.subr.bf16.mxu0 %v848
    %1070 = vmatpush1.bf16.msra.mxu0 %v847
    %1071 = vmatprep.subr.bf16.mxu0 %v852
    %1072 = vmatpush1.bf16.msra.mxu0 %v851
    %1073 = vmatprep.subr.bf16.mxu0 %v856
    %1074 = vmatpush1.bf16.msra.mxu0 %v855
    %1075 = vmatprep.subr.bf16.mxu0 %v860
    %1076 = vmatpush1.bf16.msra.mxu0 %v859
    %1077 = vmatprep.subr.bf16.mxu0 %v864
    %1078 = vmatpush1.bf16.msra.mxu0 %v863
    %1079 = vmatprep.subr.bf16.mxu0 %v868
    %1080 = vmatpush1.bf16.msra.mxu0 %v867
    %1081 = vmatprep.subr.bf16.mxu0 0
    %1082 = vmatpush1.bf16.msra.mxu0 0
    %1083 = vmatprep.subr.bf16.mxu0 0
    %1084 = vmatpush1.bf16.msra.mxu0 0
    %1085 = vmatprep.subr.bf16.mxu0 0
    %1086 = vmatpush1.bf16.msra.mxu0 0
    %1087 = vmatprep.subr.bf16.mxu0 0
    %1088 = vmatpush1.bf16.msra.mxu0 0
    %1089 = vmatprep.subr.bf16.mxu0 0
    %1090 = vmatpush1.bf16.msra.mxu0 0
    %1091 = vmatprep.subr.bf16.mxu0 0
    %1092 = vmatpush1.bf16.msra.mxu0 0
    %1093 = vmatprep.subr.bf16.mxu0 0
    %1094 = vmatpush1.bf16.msra.mxu0 0
    %1095 = vmatprep.subr.bf16.mxu0 0
    %1096 = vmatpush1.bf16.msra.mxu0 0
    %1097 = vmatprep.mubr.bf16.mxu0 0
    %1098 = vmatmul.mubr.bf16.gmra.mrb[0].mxu0 %v1064
    %v1099 = vpop.f32.mrb[0].mxu0
    %v1100 = vadd.f32 0.0, %v1099
    %v1101 = vpop.f32.mrb[0].mxu0
    %v1102 = vadd.f32 0.0, %v1101
    %v1103 = vpop.f32.mrb[0].mxu0
    %v1104 = vadd.f32 0.0, %v1103
    %v1105 = vpop.f32.mrb[0].mxu0
    %v1106 = vadd.f32 0.0, %v1105
    %1107 = vdwg.mxu0
    %1108 = vmatprep.subr.bf16.mxu0 %v842
    %1109 = vmatpush1.bf16.msra.mxu0 %v841
    %1110 = vmatprep.subr.bf16.mxu0 %v846
    %1111 = vmatpush1.bf16.msra.mxu0 %v845
    %1112 = vmatprep.subr.bf16.mxu0 %v850
    %1113 = vmatpush1.bf16.msra.mxu0 %v849
    %1114 = vmatprep.subr.bf16.mxu0 %v854
    %1115 = vmatpush1.bf16.msra.mxu0 %v853
    %1116 = vmatprep.subr.bf16.mxu0 %v858
    %1117 = vmatpush1.bf16.msra.mxu0 %v857
    %1118 = vmatprep.subr.bf16.mxu0 %v862
    %1119 = vmatpush1.bf16.msra.mxu0 %v861
    %1120 = vmatprep.subr.bf16.mxu0 %v866
    %1121 = vmatpush1.bf16.msra.mxu0 %v865
    %1122 = vmatprep.subr.bf16.mxu0 %v870
    %1123 = vmatpush1.bf16.msra.mxu0 %v869
    %1124 = vmatprep.subr.bf16.mxu0 0
    %1125 = vmatpush1.bf16.msra.mxu0 0
    %1126 = vmatprep.subr.bf16.mxu0 0
    %1127 = vmatpush1.bf16.msra.mxu0 0
    %1128 = vmatprep.subr.bf16.mxu0 0
    %1129 = vmatpush1.bf16.msra.mxu0 0
    %1130 = vmatprep.subr.bf16.mxu0 0
    %1131 = vmatpush1.bf16.msra.mxu0 0
    %1132 = vmatprep.subr.bf16.mxu0 0
    %1133 = vmatpush1.bf16.msra.mxu0 0
    %1134 = vmatprep.subr.bf16.mxu0 0
    %1135 = vmatpush1.bf16.msra.mxu0 0
    %1136 = vmatprep.subr.bf16.mxu0 0
    %1137 = vmatpush1.bf16.msra.mxu0 0
    %1138 = vmatprep.subr.bf16.mxu0 0
    %1139 = vmatpush1.bf16.msra.mxu0 0
    %1140 = vmatprep.mubr.bf16.mxu0 0
    %1141 = vmatmul.mubr.bf16.gmra.mrb[0].mxu0 %v1064
    %v1142 = vpop.f32.mrb[0].mxu0
    %v1143 = vadd.f32 0.0, %v1142
    %v1144 = vpop.f32.mrb[0].mxu0
    %v1145 = vadd.f32 0.0, %v1144
    %v1146 = vpop.f32.mrb[0].mxu0
    %v1147 = vadd.f32 0.0, %v1146
    %v1148 = vpop.f32.mrb[0].mxu0
    %v1149 = vadd.f32 0.0, %v1148
    %1150 = vdwg.mxu0
    %v1151 = vadd.f32 %v1056, %v1100
    %v1152 = vadd.f32 %v1057, %v1102
    %v1153 = vadd.f32 %v1058, %v1143
    %v1154 = vadd.f32 %v1059, %v1145
    %v1155 = vadd.f32 %v1060, %v1104
    %v1156 = vadd.f32 %v1061, %v1106
    %v1157 = vadd.f32 %v1062, %v1147
    %v1158 = vadd.f32 %v1063, %v1149
    %v1159 = vxor.u32 %v1151, 2147483648
    %v1160 = vxor.u32 %v1155, 2147483648
    %v1161 = vmul.f32 %v1159, 1.442695
    %v1162 = vpow.pop %v1161
    %v1163 = vmul.f32 %v1160, 1.442695
    %v1164 = vpow.pop %v1163
    %v1165 = vadd.f32 %v1162, 1.0
    %v1166 = vadd.f32 %v1164, 1.0
    %v1167 = vrcp.pop %v1165
    %v1168 = vmul.f32 1.0, %v1167
    %v1169 = vrcp.pop %v1166
    %v1170 = vmul.f32 1.0, %v1169
    %v1171 = vxor.u32 %v1152, 2147483648
    %v1172 = vxor.u32 %v1156, 2147483648
    %v1173 = vmul.f32 %v1171, 1.442695
    %v1174 = vpow.pop %v1173
    %v1175 = vmul.f32 %v1172, 1.442695
    %v1176 = vpow.pop %v1175
    %v1177 = vadd.f32 %v1174, 1.0
    %v1178 = vadd.f32 %v1176, 1.0
    %v1179 = vrcp.pop %v1177
    %v1180 = vmul.f32 1.0, %v1179
    %v1181 = vrcp.pop %v1178
    %v1182 = vmul.f32 1.0, %v1181
    %v1183 = vtanh.pop %v1153
    %v1184 = vtanh.pop %v1157
    %v1185 = vxor.u32 %v1154, 2147483648
    %v1186 = vxor.u32 %v1158, 2147483648
    %v1187 = vmul.f32 %v1185, 1.442695
    %v1188 = vpow.pop %v1187
    %v1189 = vmul.f32 %v1186, 1.442695
    %v1190 = vpow.pop %v1189
    %v1191 = vadd.f32 %v1188, 1.0
    %v1192 = vadd.f32 %v1190, 1.0
    %v1193 = vrcp.pop %v1191
    %v1194 = vmul.f32 1.0, %v1193
    %v1195 = vrcp.pop %v1192
    %v1196 = vmul.f32 1.0, %v1195
    %v1197 = vmul.f32 %v1180, %v1053
    %v1198 = vmul.f32 %v1182, %v1054
    %v1199 = vmul.f32 %v1168, %v1183
    %v1200 = vmul.f32 %v1170, %v1184
    %v1201 = vadd.f32 %v1197, %v1199
    %v1202 = vadd.f32 %v1198, %v1200
    %v1203 = vtanh.pop %v1201
    %v1204 = vtanh.pop %v1202
    %v1205 = vmul.f32 %v1194, %v1203
    %v1206 = vmul.f32 %v1196, %v1204
    %v1207 = vpack.c.bf16 %v1206, %v1205
    %s1208 = scalar_lea.vmem [#allocation3], 8
    %1209 = vst [vmem:[%s1208] sm:$0xff] %v1207
    %s1210 = sadd.s32 %s729, 1
    %p1211 = scmp.lt.s32.totalorder %s1210, 8
    %s1212 = scalar_select %p1211, 1, 0
    %v1213 = vstv %s1212
    %vm1214 = vcmp.eq.s32.totalorder %v1213, 1
    %v1215 = vsel %vm1214, %v1205, %v1051
    %v1216 = vsel %vm1214, %v1206, %v1052
    %v1217 = vsel %vm1214, %v1201, %v1053
    %v1218 = vsel %vm1214, %v1202, %v1054
    %s1219 = scalar_lea.vmem [#allocation2], 128
    %v1220 = vld [vmem:[%s1219] sm:$0xff]
    %v1221 = vld [vmem:[%s1219 + $0x8] sm:$0xff]
    %v1222 = vld [vmem:[%s1219 + $0x10] sm:$0xff]
    %v1223 = vld [vmem:[%s1219 + $0x18] sm:$0xff]
    %v1224 = vld [vmem:[%s1219 + $0x20] sm:$0xff]
    %v1225 = vld [vmem:[%s1219 + $0x28] sm:$0xff]
    %v1226 = vld [vmem:[%s1219 + $0x30] sm:$0xff]
    %v1227 = vld [vmem:[%s1219 + $0x38] sm:$0xff]
    %v1228 = vpack.c.bf16 %v1216, %v1215
    %1229 = vmatprep.subr.bf16.mxu0 %v840
    %1230 = vmatpush1.bf16.msra.mxu0 %v839
    %1231 = vmatprep.subr.bf16.mxu0 %v844
    %1232 = vmatpush1.bf16.msra.mxu0 %v843
    %1233 = vmatprep.subr.bf16.mxu0 %v848
    %1234 = vmatpush1.bf16.msra.mxu0 %v847
    %1235 = vmatprep.subr.bf16.mxu0 %v852
    %1236 = vmatpush1.bf16.msra.mxu0 %v851
    %1237 = vmatprep.subr.bf16.mxu0 %v856
    %1238 = vmatpush1.bf16.msra.mxu0 %v855
    %1239 = vmatprep.subr.bf16.mxu0 %v860
    %1240 = vmatpush1.bf16.msra.mxu0 %v859
    %1241 = vmatprep.subr.bf16.mxu0 %v864
    %1242 = vmatpush1.bf16.msra.mxu0 %v863
    %1243 = vmatprep.subr.bf16.mxu0 %v868
    %1244 = vmatpush1.bf16.msra.mxu0 %v867
    %1245 = vmatprep.subr.bf16.mxu0 0
    %1246 = vmatpush1.bf16.msra.mxu0 0
    %1247 = vmatprep.subr.bf16.mxu0 0
    %1248 = vmatpush1.bf16.msra.mxu0 0
    %1249 = vmatprep.subr.bf16.mxu0 0
    %1250 = vmatpush1.bf16.msra.mxu0 0
    %1251 = vmatprep.subr.bf16.mxu0 0
    %1252 = vmatpush1.bf16.msra.mxu0 0
    %1253 = vmatprep.subr.bf16.mxu0 0
    %1254 = vmatpush1.bf16.msra.mxu0 0
    %1255 = vmatprep.subr.bf16.mxu0 0
    %1256 = vmatpush1.bf16.msra.mxu0 0
    %1257 = vmatprep.subr.bf16.mxu0 0
    %1258 = vmatpush1.bf16.msra.mxu0 0
    %1259 = vmatprep.subr.bf16.mxu0 0
    %1260 = vmatpush1.bf16.msra.mxu0 0
    %1261 = vmatprep.mubr.bf16.mxu0 0
    %1262 = vmatmul.mubr.bf16.gmra.mrb[0].mxu0 %v1228
    %v1263 = vpop.f32.mrb[0].mxu0
    %v1264 = vadd.f32 0.0, %v1263
    %v1265 = vpop.f32.mrb[0].mxu0
    %v1266 = vadd.f32 0.0, %v1265
    %v1267 = vpop.f32.mrb[0].mxu0
    %v1268 = vadd.f32 0.0, %v1267
    %v1269 = vpop.f32.mrb[0].mxu0
    %v1270 = vadd.f32 0.0, %v1269
    %1271 = vdwg.mxu0
    %1272 = vmatprep.subr.bf16.mxu0 %v842
    %1273 = vmatpush1.bf16.msra.mxu0 %v841
    %1274 = vmatprep.subr.bf16.mxu0 %v846
    %1275 = vmatpush1.bf16.msra.mxu0 %v845
    %1276 = vmatprep.subr.bf16.mxu0 %v850
    %1277 = vmatpush1.bf16.msra.mxu0 %v849
    %1278 = vmatprep.subr.bf16.mxu0 %v854
    %1279 = vmatpush1.bf16.msra.mxu0 %v853
    %1280 = vmatprep.subr.bf16.mxu0 %v858
    %1281 = vmatpush1.bf16.msra.mxu0 %v857
    %1282 = vmatprep.subr.bf16.mxu0 %v862
    %1283 = vmatpush1.bf16.msra.mxu0 %v861
    %1284 = vmatprep.subr.bf16.mxu0 %v866
    %1285 = vmatpush1.bf16.msra.mxu0 %v865
    %1286 = vmatprep.subr.bf16.mxu0 %v870
    %1287 = vmatpush1.bf16.msra.mxu0 %v869
    %1288 = vmatprep.subr.bf16.mxu0 0
    %1289 = vmatpush1.bf16.msra.mxu0 0
    %1290 = vmatprep.subr.bf16.mxu0 0
    %1291 = vmatpush1.bf16.msra.mxu0 0
    %1292 = vmatprep.subr.bf16.mxu0 0
    %1293 = vmatpush1.bf16.msra.mxu0 0
    %1294 = vmatprep.subr.bf16.mxu0 0
    %1295 = vmatpush1.bf16.msra.mxu0 0
    %1296 = vmatprep.subr.bf16.mxu0 0
    %1297 = vmatpush1.bf16.msra.mxu0 0
    %1298 = vmatprep.subr.bf16.mxu0 0
    %1299 = vmatpush1.bf16.msra.mxu0 0
    %1300 = vmatprep.subr.bf16.mxu0 0
    %1301 = vmatpush1.bf16.msra.mxu0 0
    %1302 = vmatprep.subr.bf16.mxu0 0
    %1303 = vmatpush1.bf16.msra.mxu0 0
    %1304 = vmatprep.mubr.bf16.mxu0 0
    %1305 = vmatmul.mubr.bf16.gmra.mrb[0].mxu0 %v1228
    %v1306 = vpop.f32.mrb[0].mxu0
    %v1307 = vadd.f32 0.0, %v1306
    %v1308 = vpop.f32.mrb[0].mxu0
    %v1309 = vadd.f32 0.0, %v1308
    %v1310 = vpop.f32.mrb[0].mxu0
    %v1311 = vadd.f32 0.0, %v1310
    %v1312 = vpop.f32.mrb[0].mxu0
    %v1313 = vadd.f32 0.0, %v1312
    %1314 = vdwg.mxu0
    %v1315 = vadd.f32 %v1220, %v1264
    %v1316 = vadd.f32 %v1221, %v1266
    %v1317 = vadd.f32 %v1222, %v1307
    %v1318 = vadd.f32 %v1223, %v1309
    %v1319 = vadd.f32 %v1224, %v1268
    %v1320 = vadd.f32 %v1225, %v1270
    %v1321 = vadd.f32 %v1226, %v1311
    %v1322 = vadd.f32 %v1227, %v1313
    %v1323 = vxor.u32 %v1315, 2147483648
    %v1324 = vxor.u32 %v1319, 2147483648
    %v1325 = vmul.f32 %v1323, 1.442695
    %v1326 = vpow.pop %v1325
    %v1327 = vmul.f32 %v1324, 1.442695
    %v1328 = vpow.pop %v1327
    %v1329 = vadd.f32 %v1326, 1.0
    %v1330 = vadd.f32 %v1328, 1.0
    %v1331 = vrcp.pop %v1329
    %v1332 = vmul.f32 1.0, %v1331
    %v1333 = vrcp.pop %v1330
    %v1334 = vmul.f32 1.0, %v1333
    %v1335 = vxor.u32 %v1316, 2147483648
    %v1336 = vxor.u32 %v1320, 2147483648
    %v1337 = vmul.f32 %v1335, 1.442695
    %v1338 = vpow.pop %v1337
    %v1339 = vmul.f32 %v1336, 1.442695
    %v1340 = vpow.pop %v1339
    %v1341 = vadd.f32 %v1338, 1.0
    %v1342 = vadd.f32 %v1340, 1.0
    %v1343 = vrcp.pop %v1341
    %v1344 = vmul.f32 1.0, %v1343
    %v1345 = vrcp.pop %v1342
    %v1346 = vmul.f32 1.0, %v1345
    %v1347 = vtanh.pop %v1317
    %v1348 = vtanh.pop %v1321
    %v1349 = vxor.u32 %v1318, 2147483648
    %v1350 = vxor.u32 %v1322, 2147483648
    %v1351 = vmul.f32 %v1349, 1.442695
    %v1352 = vpow.pop %v1351
    %v1353 = vmul.f32 %v1350, 1.442695
    %v1354 = vpow.pop %v1353
    %v1355 = vadd.f32 %v1352, 1.0
    %v1356 = vadd.f32 %v1354, 1.0
    %v1357 = vrcp.pop %v1355
    %v1358 = vmul.f32 1.0, %v1357
    %v1359 = vrcp.pop %v1356
    %v1360 = vmul.f32 1.0, %v1359
    %v1361 = vmul.f32 %v1344, %v1217
    %v1362 = vmul.f32 %v1346, %v1218
    %v1363 = vmul.f32 %v1332, %v1347
    %v1364 = vmul.f32 %v1334, %v1348
    %v1365 = vadd.f32 %v1361, %v1363
    %v1366 = vadd.f32 %v1362, %v1364
    %v1367 = vtanh.pop %v1365
    %v1368 = vtanh.pop %v1366
    %v1369 = vmul.f32 %v1358, %v1367
    %v1370 = vmul.f32 %v1360, %v1368
    %v1371 = vpack.c.bf16 %v1370, %v1369
    %s1372 = scalar_lea.vmem [#allocation3], 16
    %1373 = vst [vmem:[%s1372] sm:$0xff] %v1371
    %s1374 = sadd.s32 %s729, 2
    %p1375 = scmp.lt.s32.totalorder %s1374, 8
    %s1376 = scalar_select %p1375, 1, 0
    %v1377 = vstv %s1376
    %vm1378 = vcmp.eq.s32.totalorder %v1377, 1
    %v1379 = vsel %vm1378, %v1369, %v1215
    %v1380 = vsel %vm1378, %v1370, %v1216
    %v1381 = vsel %vm1378, %v1365, %v1217
    %v1382 = vsel %vm1378, %v1366, %v1218
    %s1383 = scalar_lea.vmem [#allocation2], 192
    %v1384 = vld [vmem:[%s1383] sm:$0xff]
    %v1385 = vld [vmem:[%s1383 + $0x8] sm:$0xff]
    %v1386 = vld [vmem:[%s1383 + $0x10] sm:$0xff]
    %v1387 = vld [vmem:[%s1383 + $0x18] sm:$0xff]
    %v1388 = vld [vmem:[%s1383 + $0x20] sm:$0xff]
    %v1389 = vld [vmem:[%s1383 + $0x28] sm:$0xff]
    %v1390 = vld [vmem:[%s1383 + $0x30] sm:$0xff]
    %v1391 = vld [vmem:[%s1383 + $0x38] sm:$0xff]
    %v1392 = vpack.c.bf16 %v1380, %v1379
    %1393 = vmatprep.subr.bf16.mxu0 %v840
    %1394 = vmatpush1.bf16.msra.mxu0 %v839
    %1395 = vmatprep.subr.bf16.mxu0 %v844
    %1396 = vmatpush1.bf16.msra.mxu0 %v843
    %1397 = vmatprep.subr.bf16.mxu0 %v848
    %1398 = vmatpush1.bf16.msra.mxu0 %v847
    %1399 = vmatprep.subr.bf16.mxu0 %v852
    %1400 = vmatpush1.bf16.msra.mxu0 %v851
    %1401 = vmatprep.subr.bf16.mxu0 %v856
    %1402 = vmatpush1.bf16.msra.mxu0 %v855
    %1403 = vmatprep.subr.bf16.mxu0 %v860
    %1404 = vmatpush1.bf16.msra.mxu0 %v859
    %1405 = vmatprep.subr.bf16.mxu0 %v864
    %1406 = vmatpush1.bf16.msra.mxu0 %v863
    %1407 = vmatprep.subr.bf16.mxu0 %v868
    %1408 = vmatpush1.bf16.msra.mxu0 %v867
    %1409 = vmatprep.subr.bf16.mxu0 0
    %1410 = vmatpush1.bf16.msra.mxu0 0
    %1411 = vmatprep.subr.bf16.mxu0 0
    %1412 = vmatpush1.bf16.msra.mxu0 0
    %1413 = vmatprep.subr.bf16.mxu0 0
    %1414 = vmatpush1.bf16.msra.mxu0 0
    %1415 = vmatprep.subr.bf16.mxu0 0
    %1416 = vmatpush1.bf16.msra.mxu0 0
    %1417 = vmatprep.subr.bf16.mxu0 0
    %1418 = vmatpush1.bf16.msra.mxu0 0
    %1419 = vmatprep.subr.bf16.mxu0 0
    %1420 = vmatpush1.bf16.msra.mxu0 0
    %1421 = vmatprep.subr.bf16.mxu0 0
    %1422 = vmatpush1.bf16.msra.mxu0 0
    %1423 = vmatprep.subr.bf16.mxu0 0
    %1424 = vmatpush1.bf16.msra.mxu0 0
    %1425 = vmatprep.mubr.bf16.mxu0 0
    %1426 = vmatmul.mubr.bf16.gmra.mrb[0].mxu0 %v1392
    %v1427 = vpop.f32.mrb[0].mxu0
    %v1428 = vadd.f32 0.0, %v1427
    %v1429 = vpop.f32.mrb[0].mxu0
    %v1430 = vadd.f32 0.0, %v1429
    %v1431 = vpop.f32.mrb[0].mxu0
    %v1432 = vadd.f32 0.0, %v1431
    %v1433 = vpop.f32.mrb[0].mxu0
    %v1434 = vadd.f32 0.0, %v1433
    %1435 = vdwg.mxu0
    %1436 = vmatprep.subr.bf16.mxu0 %v842
    %1437 = vmatpush1.bf16.msra.mxu0 %v841
    %1438 = vmatprep.subr.bf16.mxu0 %v846
    %1439 = vmatpush1.bf16.msra.mxu0 %v845
    %1440 = vmatprep.subr.bf16.mxu0 %v850
    %1441 = vmatpush1.bf16.msra.mxu0 %v849
    %1442 = vmatprep.subr.bf16.mxu0 %v854
    %1443 = vmatpush1.bf16.msra.mxu0 %v853
    %1444 = vmatprep.subr.bf16.mxu0 %v858
    %1445 = vmatpush1.bf16.msra.mxu0 %v857
    %1446 = vmatprep.subr.bf16.mxu0 %v862
    %1447 = vmatpush1.bf16.msra.mxu0 %v861
    %1448 = vmatprep.subr.bf16.mxu0 %v866
    %1449 = vmatpush1.bf16.msra.mxu0 %v865
    %1450 = vmatprep.subr.bf16.mxu0 %v870
    %1451 = vmatpush1.bf16.msra.mxu0 %v869
    %1452 = vmatprep.subr.bf16.mxu0 0
    %1453 = vmatpush1.bf16.msra.mxu0 0
    %1454 = vmatprep.subr.bf16.mxu0 0
    %1455 = vmatpush1.bf16.msra.mxu0 0
    %1456 = vmatprep.subr.bf16.mxu0 0
    %1457 = vmatpush1.bf16.msra.mxu0 0
    %1458 = vmatprep.subr.bf16.mxu0 0
    %1459 = vmatpush1.bf16.msra.mxu0 0
    %1460 = vmatprep.subr.bf16.mxu0 0
    %1461 = vmatpush1.bf16.msra.mxu0 0
    %1462 = vmatprep.subr.bf16.mxu0 0
    %1463 = vmatpush1.bf16.msra.mxu0 0
    %1464 = vmatprep.subr.bf16.mxu0 0
    %1465 = vmatpush1.bf16.msra.mxu0 0
    %1466 = vmatprep.subr.bf16.mxu0 0
    %1467 = vmatpush1.bf16.msra.mxu0 0
    %1468 = vmatprep.mubr.bf16.mxu0 0
    %1469 = vmatmul.mubr.bf16.gmra.mrb[0].mxu0 %v1392
    %v1470 = vpop.f32.mrb[0].mxu0
    %v1471 = vadd.f32 0.0, %v1470
    %v1472 = vpop.f32.mrb[0].mxu0
    %v1473 = vadd.f32 0.0, %v1472
    %v1474 = vpop.f32.mrb[0].mxu0
    %v1475 = vadd.f32 0.0, %v1474
    %v1476 = vpop.f32.mrb[0].mxu0
    %v1477 = vadd.f32 0.0, %v1476
    %1478 = vdwg.mxu0
    %v1479 = vadd.f32 %v1384, %v1428
    %v1480 = vadd.f32 %v1385, %v1430
    %v1481 = vadd.f32 %v1386, %v1471
    %v1482 = vadd.f32 %v1387, %v1473
    %v1483 = vadd.f32 %v1388, %v1432
    %v1484 = vadd.f32 %v1389, %v1434
    %v1485 = vadd.f32 %v1390, %v1475
    %v1486 = vadd.f32 %v1391, %v1477
    %v1487 = vxor.u32 %v1479, 2147483648
    %v1488 = vxor.u32 %v1483, 2147483648
    %v1489 = vmul.f32 %v1487, 1.442695
    %v1490 = vpow.pop %v1489
    %v1491 = vmul.f32 %v1488, 1.442695
    %v1492 = vpow.pop %v1491
    %v1493 = vadd.f32 %v1490, 1.0
    %v1494 = vadd.f32 %v1492, 1.0
    %v1495 = vrcp.pop %v1493
    %v1496 = vmul.f32 1.0, %v1495
    %v1497 = vrcp.pop %v1494
    %v1498 = vmul.f32 1.0, %v1497
    %v1499 = vxor.u32 %v1480, 2147483648
    %v1500 = vxor.u32 %v1484, 2147483648
    %v1501 = vmul.f32 %v1499, 1.442695
    %v1502 = vpow.pop %v1501
    %v1503 = vmul.f32 %v1500, 1.442695
    %v1504 = vpow.pop %v1503
    %v1505 = vadd.f32 %v1502, 1.0
    %v1506 = vadd.f32 %v1504, 1.0
    %v1507 = vrcp.pop %v1505
    %v1508 = vmul.f32 1.0, %v1507
    %v1509 = vrcp.pop %v1506
    %v1510 = vmul.f32 1.0, %v1509
    %v1511 = vtanh.pop %v1481
    %v1512 = vtanh.pop %v1485
    %v1513 = vxor.u32 %v1482, 2147483648
    %v1514 = vxor.u32 %v1486, 2147483648
    %v1515 = vmul.f32 %v1513, 1.442695
    %v1516 = vpow.pop %v1515
    %v1517 = vmul.f32 %v1514, 1.442695
    %v1518 = vpow.pop %v1517
    %v1519 = vadd.f32 %v1516, 1.0
    %v1520 = vadd.f32 %v1518, 1.0
    %v1521 = vrcp.pop %v1519
    %v1522 = vmul.f32 1.0, %v1521
    %v1523 = vrcp.pop %v1520
    %v1524 = vmul.f32 1.0, %v1523
    %v1525 = vmul.f32 %v1508, %v1381
    %v1526 = vmul.f32 %v1510, %v1382
    %v1527 = vmul.f32 %v1496, %v1511
    %v1528 = vmul.f32 %v1498, %v1512
    %v1529 = vadd.f32 %v1525, %v1527
    %v1530 = vadd.f32 %v1526, %v1528
    %v1531 = vtanh.pop %v1529
    %v1532 = vtanh.pop %v1530
    %v1533 = vmul.f32 %v1522, %v1531
    %v1534 = vmul.f32 %v1524, %v1532
    %v1535 = vpack.c.bf16 %v1534, %v1533
    %s1536 = scalar_lea.vmem [#allocation3], 24
    %1537 = vst [vmem:[%s1536] sm:$0xff] %v1535
    %s1538 = sadd.s32 %s729, 3
    %p1539 = scmp.lt.s32.totalorder %s1538, 8
    %s1540 = scalar_select %p1539, 1, 0
    %v1541 = vstv %s1540
    %vm1542 = vcmp.eq.s32.totalorder %v1541, 1
    %v1543 = vsel %vm1542, %v1533, %v1379
    %v1544 = vsel %vm1542, %v1534, %v1380
    %v1545 = vsel %vm1542, %v1529, %v1381
    %v1546 = vsel %vm1542, %v1530, %v1382
    %s1547 = scalar_lea.vmem [#allocation2], 256
    %v1548 = vld [vmem:[%s1547] sm:$0xff]
    %v1549 = vld [vmem:[%s1547 + $0x8] sm:$0xff]
    %v1550 = vld [vmem:[%s1547 + $0x10] sm:$0xff]
    %v1551 = vld [vmem:[%s1547 + $0x18] sm:$0xff]
    %v1552 = vld [vmem:[%s1547 + $0x20] sm:$0xff]
    %v1553 = vld [vmem:[%s1547 + $0x28] sm:$0xff]
    %v1554 = vld [vmem:[%s1547 + $0x30] sm:$0xff]
    %v1555 = vld [vmem:[%s1547 + $0x38] sm:$0xff]
    %v1556 = vpack.c.bf16 %v1544, %v1543
    %1557 = vmatprep.subr.bf16.mxu0 %v840
    %1558 = vmatpush1.bf16.msra.mxu0 %v839
    %1559 = vmatprep.subr.bf16.mxu0 %v844
    %1560 = vmatpush1.bf16.msra.mxu0 %v843
    %1561 = vmatprep.subr.bf16.mxu0 %v848
    %1562 = vmatpush1.bf16.msra.mxu0 %v847
    %1563 = vmatprep.subr.bf16.mxu0 %v852
    %1564 = vmatpush1.bf16.msra.mxu0 %v851
    %1565 = vmatprep.subr.bf16.mxu0 %v856
    %1566 = vmatpush1.bf16.msra.mxu0 %v855
    %1567 = vmatprep.subr.bf16.mxu0 %v860
    %1568 = vmatpush1.bf16.msra.mxu0 %v859
    %1569 = vmatprep.subr.bf16.mxu0 %v864
    %1570 = vmatpush1.bf16.msra.mxu0 %v863
    %1571 = vmatprep.subr.bf16.mxu0 %v868
    %1572 = vmatpush1.bf16.msra.mxu0 %v867
    %1573 = vmatprep.subr.bf16.mxu0 0
    %1574 = vmatpush1.bf16.msra.mxu0 0
    %1575 = vmatprep.subr.bf16.mxu0 0
    %1576 = vmatpush1.bf16.msra.mxu0 0
    %1577 = vmatprep.subr.bf16.mxu0 0
    %1578 = vmatpush1.bf16.msra.mxu0 0
    %1579 = vmatprep.subr.bf16.mxu0 0
    %1580 = vmatpush1.bf16.msra.mxu0 0
    %1581 = vmatprep.subr.bf16.mxu0 0
    %1582 = vmatpush1.bf16.msra.mxu0 0
    %1583 = vmatprep.subr.bf16.mxu0 0
    %1584 = vmatpush1.bf16.msra.mxu0 0
    %1585 = vmatprep.subr.bf16.mxu0 0
    %1586 = vmatpush1.bf16.msra.mxu0 0
    %1587 = vmatprep.subr.bf16.mxu0 0
    %1588 = vmatpush1.bf16.msra.mxu0 0
    %1589 = vmatprep.mubr.bf16.mxu0 0
    %1590 = vmatmul.mubr.bf16.gmra.mrb[0].mxu0 %v1556
    %v1591 = vpop.f32.mrb[0].mxu0
    %v1592 = vadd.f32 0.0, %v1591
    %v1593 = vpop.f32.mrb[0].mxu0
    %v1594 = vadd.f32 0.0, %v1593
    %v1595 = vpop.f32.mrb[0].mxu0
    %v1596 = vadd.f32 0.0, %v1595
    %v1597 = vpop.f32.mrb[0].mxu0
    %v1598 = vadd.f32 0.0, %v1597
    %1599 = vdwg.mxu0
    %1600 = vmatprep.subr.bf16.mxu0 %v842
    %1601 = vmatpush1.bf16.msra.mxu0 %v841
    %1602 = vmatprep.subr.bf16.mxu0 %v846
    %1603 = vmatpush1.bf16.msra.mxu0 %v845
    %1604 = vmatprep.subr.bf16.mxu0 %v850
    %1605 = vmatpush1.bf16.msra.mxu0 %v849
    %1606 = vmatprep.subr.bf16.mxu0 %v854
    %1607 = vmatpush1.bf16.msra.mxu0 %v853
    %1608 = vmatprep.subr.bf16.mxu0 %v858
    %1609 = vmatpush1.bf16.msra.mxu0 %v857
    %1610 = vmatprep.subr.bf16.mxu0 %v862
    %1611 = vmatpush1.bf16.msra.mxu0 %v861
    %1612 = vmatprep.subr.bf16.mxu0 %v866
    %1613 = vmatpush1.bf16.msra.mxu0 %v865
    %1614 = vmatprep.subr.bf16.mxu0 %v870
    %1615 = vmatpush1.bf16.msra.mxu0 %v869
    %1616 = vmatprep.subr.bf16.mxu0 0
    %1617 = vmatpush1.bf16.msra.mxu0 0
    %1618 = vmatprep.subr.bf16.mxu0 0
    %1619 = vmatpush1.bf16.msra.mxu0 0
    %1620 = vmatprep.subr.bf16.mxu0 0
    %1621 = vmatpush1.bf16.msra.mxu0 0
    %1622 = vmatprep.subr.bf16.mxu0 0
    %1623 = vmatpush1.bf16.msra.mxu0 0
    %1624 = vmatprep.subr.bf16.mxu0 0
    %1625 = vmatpush1.bf16.msra.mxu0 0
    %1626 = vmatprep.subr.bf16.mxu0 0
    %1627 = vmatpush1.bf16.msra.mxu0 0
    %1628 = vmatprep.subr.bf16.mxu0 0
    %1629 = vmatpush1.bf16.msra.mxu0 0
    %1630 = vmatprep.subr.bf16.mxu0 0
    %1631 = vmatpush1.bf16.msra.mxu0 0
    %1632 = vmatprep.mubr.bf16.mxu0 0
    %1633 = vmatmul.mubr.bf16.gmra.mrb[0].mxu0 %v1556
    %v1634 = vpop.f32.mrb[0].mxu0
    %v1635 = vadd.f32 0.0, %v1634
    %v1636 = vpop.f32.mrb[0].mxu0
    %v1637 = vadd.f32 0.0, %v1636
    %v1638 = vpop.f32.mrb[0].mxu0
    %v1639 = vadd.f32 0.0, %v1638
    %v1640 = vpop.f32.mrb[0].mxu0
    %v1641 = vadd.f32 0.0, %v1640
    %1642 = vdwg.mxu0
    %v1643 = vadd.f32 %v1548, %v1592
    %v1644 = vadd.f32 %v1549, %v1594
    %v1645 = vadd.f32 %v1550, %v1635
    %v1646 = vadd.f32 %v1551, %v1637
    %v1647 = vadd.f32 %v1552, %v1596
    %v1648 = vadd.f32 %v1553, %v1598
    %v1649 = vadd.f32 %v1554, %v1639
    %v1650 = vadd.f32 %v1555, %v1641
    %v1651 = vxor.u32 %v1643, 2147483648
    %v1652 = vxor.u32 %v1647, 2147483648
    %v1653 = vmul.f32 %v1651, 1.442695
    %v1654 = vpow.pop %v1653
    %v1655 = vmul.f32 %v1652, 1.442695
    %v1656 = vpow.pop %v1655
    %v1657 = vadd.f32 %v1654, 1.0
    %v1658 = vadd.f32 %v1656, 1.0
    %v1659 = vrcp.pop %v1657
    %v1660 = vmul.f32 1.0, %v1659
    %v1661 = vrcp.pop %v1658
    %v1662 = vmul.f32 1.0, %v1661
    %v1663 = vxor.u32 %v1644, 2147483648
    %v1664 = vxor.u32 %v1648, 2147483648
    %v1665 = vmul.f32 %v1663, 1.442695
    %v1666 = vpow.pop %v1665
    %v1667 = vmul.f32 %v1664, 1.442695
    %v1668 = vpow.pop %v1667
    %v1669 = vadd.f32 %v1666, 1.0
    %v1670 = vadd.f32 %v1668, 1.0
    %v1671 = vrcp.pop %v1669
    %v1672 = vmul.f32 1.0, %v1671
    %v1673 = vrcp.pop %v1670
    %v1674 = vmul.f32 1.0, %v1673
    %v1675 = vtanh.pop %v1645
    %v1676 = vtanh.pop %v1649
    %v1677 = vxor.u32 %v1646, 2147483648
    %v1678 = vxor.u32 %v1650, 2147483648
    %v1679 = vmul.f32 %v1677, 1.442695
    %v1680 = vpow.pop %v1679
    %v1681 = vmul.f32 %v1678, 1.442695
    %v1682 = vpow.pop %v1681
    %v1683 = vadd.f32 %v1680, 1.0
    %v1684 = vadd.f32 %v1682, 1.0
    %v1685 = vrcp.pop %v1683
    %v1686 = vmul.f32 1.0, %v1685
    %v1687 = vrcp.pop %v1684
    %v1688 = vmul.f32 1.0, %v1687
    %v1689 = vmul.f32 %v1672, %v1545
    %v1690 = vmul.f32 %v1674, %v1546
    %v1691 = vmul.f32 %v1660, %v1675
    %v1692 = vmul.f32 %v1662, %v1676
    %v1693 = vadd.f32 %v1689, %v1691
    %v1694 = vadd.f32 %v1690, %v1692
    %v1695 = vtanh.pop %v1693
    %v1696 = vtanh.pop %v1694
    %v1697 = vmul.f32 %v1686, %v1695
    %v1698 = vmul.f32 %v1688, %v1696
    %v1699 = vpack.c.bf16 %v1698, %v1697
    %s1700 = scalar_lea.vmem [#allocation3], 32
    %1701 = vst [vmem:[%s1700] sm:$0xff] %v1699
    %s1702 = sadd.s32 %s729, 4
    %p1703 = scmp.lt.s32.totalorder %s1702, 8
    %s1704 = scalar_select %p1703, 1, 0
    %v1705 = vstv %s1704
    %vm1706 = vcmp.eq.s32.totalorder %v1705, 1
    %v1707 = vsel %vm1706, %v1697, %v1543
    %v1708 = vsel %vm1706, %v1698, %v1544
    %v1709 = vsel %vm1706, %v1693, %v1545
    %v1710 = vsel %vm1706, %v1694, %v1546
    %s1711 = scalar_lea.vmem [#allocation2], 320
    %v1712 = vld [vmem:[%s1711] sm:$0xff]
    %v1713 = vld [vmem:[%s1711 + $0x8] sm:$0xff]
    %v1714 = vld [vmem:[%s1711 + $0x10] sm:$0xff]
    %v1715 = vld [vmem:[%s1711 + $0x18] sm:$0xff]
    %v1716 = vld [vmem:[%s1711 + $0x20] sm:$0xff]
    %v1717 = vld [vmem:[%s1711 + $0x28] sm:$0xff]
    %v1718 = vld [vmem:[%s1711 + $0x30] sm:$0xff]
    %v1719 = vld [vmem:[%s1711 + $0x38] sm:$0xff]
    %v1720 = vpack.c.bf16 %v1708, %v1707
    %1721 = vmatprep.subr.bf16.mxu0 %v840
    %1722 = vmatpush1.bf16.msra.mxu0 %v839
    %1723 = vmatprep.subr.bf16.mxu0 %v844
    %1724 = vmatpush1.bf16.msra.mxu0 %v843
    %1725 = vmatprep.subr.bf16.mxu0 %v848
    %1726 = vmatpush1.bf16.msra.mxu0 %v847
    %1727 = vmatprep.subr.bf16.mxu0 %v852
    %1728 = vmatpush1.bf16.msra.mxu0 %v851
    %1729 = vmatprep.subr.bf16.mxu0 %v856
    %1730 = vmatpush1.bf16.msra.mxu0 %v855
    %1731 = vmatprep.subr.bf16.mxu0 %v860
    %1732 = vmatpush1.bf16.msra.mxu0 %v859
    %1733 = vmatprep.subr.bf16.mxu0 %v864
    %1734 = vmatpush1.bf16.msra.mxu0 %v863
    %1735 = vmatprep.subr.bf16.mxu0 %v868
    %1736 = vmatpush1.bf16.msra.mxu0 %v867
    %1737 = vmatprep.subr.bf16.mxu0 0
    %1738 = vmatpush1.bf16.msra.mxu0 0
    %1739 = vmatprep.subr.bf16.mxu0 0
    %1740 = vmatpush1.bf16.msra.mxu0 0
    %1741 = vmatprep.subr.bf16.mxu0 0
    %1742 = vmatpush1.bf16.msra.mxu0 0
    %1743 = vmatprep.subr.bf16.mxu0 0
    %1744 = vmatpush1.bf16.msra.mxu0 0
    %1745 = vmatprep.subr.bf16.mxu0 0
    %1746 = vmatpush1.bf16.msra.mxu0 0
    %1747 = vmatprep.subr.bf16.mxu0 0
    %1748 = vmatpush1.bf16.msra.mxu0 0
    %1749 = vmatprep.subr.bf16.mxu0 0
    %1750 = vmatpush1.bf16.msra.mxu0 0
    %1751 = vmatprep.subr.bf16.mxu0 0
    %1752 = vmatpush1.bf16.msra.mxu0 0
    %1753 = vmatprep.mubr.bf16.mxu0 0
    %1754 = vmatmul.mubr.bf16.gmra.mrb[0].mxu0 %v1720
    %v1755 = vpop.f32.mrb[0].mxu0
    %v1756 = vadd.f32 0.0, %v1755
    %v1757 = vpop.f32.mrb[0].mxu0
    %v1758 = vadd.f32 0.0, %v1757
    %v1759 = vpop.f32.mrb[0].mxu0
    %v1760 = vadd.f32 0.0, %v1759
    %v1761 = vpop.f32.mrb[0].mxu0
    %v1762 = vadd.f32 0.0, %v1761
    %1763 = vdwg.mxu0
    %1764 = vmatprep.subr.bf16.mxu0 %v842
    %1765 = vmatpush1.bf16.msra.mxu0 %v841
    %1766 = vmatprep.subr.bf16.mxu0 %v846
    %1767 = vmatpush1.bf16.msra.mxu0 %v845
    %1768 = vmatprep.subr.bf16.mxu0 %v850
    %1769 = vmatpush1.bf16.msra.mxu0 %v849
    %1770 = vmatprep.subr.bf16.mxu0 %v854
    %1771 = vmatpush1.bf16.msra.mxu0 %v853
    %1772 = vmatprep.subr.bf16.mxu0 %v858
    %1773 = vmatpush1.bf16.msra.mxu0 %v857
    %1774 = vmatprep.subr.bf16.mxu0 %v862
    %1775 = vmatpush1.bf16.msra.mxu0 %v861
    %1776 = vmatprep.subr.bf16.mxu0 %v866
    %1777 = vmatpush1.bf16.msra.mxu0 %v865
    %1778 = vmatprep.subr.bf16.mxu0 %v870
    %1779 = vmatpush1.bf16.msra.mxu0 %v869
    %1780 = vmatprep.subr.bf16.mxu0 0
    %1781 = vmatpush1.bf16.msra.mxu0 0
    %1782 = vmatprep.subr.bf16.mxu0 0
    %1783 = vmatpush1.bf16.msra.mxu0 0
    %1784 = vmatprep.subr.bf16.mxu0 0
    %1785 = vmatpush1.bf16.msra.mxu0 0
    %1786 = vmatprep.subr.bf16.mxu0 0
    %1787 = vmatpush1.bf16.msra.mxu0 0
    %1788 = vmatprep.subr.bf16.mxu0 0
    %1789 = vmatpush1.bf16.msra.mxu0 0
    %1790 = vmatprep.subr.bf16.mxu0 0
    %1791 = vmatpush1.bf16.msra.mxu0 0
    %1792 = vmatprep.subr.bf16.mxu0 0
    %1793 = vmatpush1.bf16.msra.mxu0 0
    %1794 = vmatprep.subr.bf16.mxu0 0
    %1795 = vmatpush1.bf16.msra.mxu0 0
    %1796 = vmatprep.mubr.bf16.mxu0 0
    %1797 = vmatmul.mubr.bf16.gmra.mrb[0].mxu0 %v1720
    %v1798 = vpop.f32.mrb[0].mxu0
    %v1799 = vadd.f32 0.0, %v1798
    %v1800 = vpop.f32.mrb[0].mxu0
    %v1801 = vadd.f32 0.0, %v1800
    %v1802 = vpop.f32.mrb[0].mxu0
    %v1803 = vadd.f32 0.0, %v1802
    %v1804 = vpop.f32.mrb[0].mxu0
    %v1805 = vadd.f32 0.0, %v1804
    %1806 = vdwg.mxu0
    %v1807 = vadd.f32 %v1712, %v1756
    %v1808 = vadd.f32 %v1713, %v1758
    %v1809 = vadd.f32 %v1714, %v1799
    %v1810 = vadd.f32 %v1715, %v1801
    %v1811 = vadd.f32 %v1716, %v1760
    %v1812 = vadd.f32 %v1717, %v1762
    %v1813 = vadd.f32 %v1718, %v1803
    %v1814 = vadd.f32 %v1719, %v1805
    %v1815 = vxor.u32 %v1807, 2147483648
    %v1816 = vxor.u32 %v1811, 2147483648
    %v1817 = vmul.f32 %v1815, 1.442695
    %v1818 = vpow.pop %v1817
    %v1819 = vmul.f32 %v1816, 1.442695
    %v1820 = vpow.pop %v1819
    %v1821 = vadd.f32 %v1818, 1.0
    %v1822 = vadd.f32 %v1820, 1.0
    %v1823 = vrcp.pop %v1821
    %v1824 = vmul.f32 1.0, %v1823
    %v1825 = vrcp.pop %v1822
    %v1826 = vmul.f32 1.0, %v1825
    %v1827 = vxor.u32 %v1808, 2147483648
    %v1828 = vxor.u32 %v1812, 2147483648
    %v1829 = vmul.f32 %v1827, 1.442695
    %v1830 = vpow.pop %v1829
    %v1831 = vmul.f32 %v1828, 1.442695
    %v1832 = vpow.pop %v1831
    %v1833 = vadd.f32 %v1830, 1.0
    %v1834 = vadd.f32 %v1832, 1.0
    %v1835 = vrcp.pop %v1833
    %v1836 = vmul.f32 1.0, %v1835
    %v1837 = vrcp.pop %v1834
    %v1838 = vmul.f32 1.0, %v1837
    %v1839 = vtanh.pop %v1809
    %v1840 = vtanh.pop %v1813
    %v1841 = vxor.u32 %v1810, 2147483648
    %v1842 = vxor.u32 %v1814, 2147483648
    %v1843 = vmul.f32 %v1841, 1.442695
    %v1844 = vpow.pop %v1843
    %v1845 = vmul.f32 %v1842, 1.442695
    %v1846 = vpow.pop %v1845
    %v1847 = vadd.f32 %v1844, 1.0
    %v1848 = vadd.f32 %v1846, 1.0
    %v1849 = vrcp.pop %v1847
    %v1850 = vmul.f32 1.0, %v1849
    %v1851 = vrcp.pop %v1848
    %v1852 = vmul.f32 1.0, %v1851
    %v1853 = vmul.f32 %v1836, %v1709
    %v1854 = vmul.f32 %v1838, %v1710
    %v1855 = vmul.f32 %v1824, %v1839
    %v1856 = vmul.f32 %v1826, %v1840
    %v1857 = vadd.f32 %v1853, %v1855
    %v1858 = vadd.f32 %v1854, %v1856
    %v1859 = vtanh.pop %v1857
    %v1860 = vtanh.pop %v1858
    %v1861 = vmul.f32 %v1850, %v1859
    %v1862 = vmul.f32 %v1852, %v1860
    %v1863 = vpack.c.bf16 %v1862, %v1861
    %s1864 = scalar_lea.vmem [#allocation3], 40
    %1865 = vst [vmem:[%s1864] sm:$0xff] %v1863
    %s1866 = sadd.s32 %s729, 5
    %p1867 = scmp.lt.s32.totalorder %s1866, 8
    %s1868 = scalar_select %p1867, 1, 0
    %v1869 = vstv %s1868
    %vm1870 = vcmp.eq.s32.totalorder %v1869, 1
    %v1871 = vsel %vm1870, %v1861, %v1707
    %v1872 = vsel %vm1870, %v1862, %v1708
    %v1873 = vsel %vm1870, %v1857, %v1709
    %v1874 = vsel %vm1870, %v1858, %v1710
    %s1875 = scalar_lea.vmem [#allocation2], 384
    %v1876 = vld [vmem:[%s1875] sm:$0xff]
    %v1877 = vld [vmem:[%s1875 + $0x8] sm:$0xff]
    %v1878 = vld [vmem:[%s1875 + $0x10] sm:$0xff]
    %v1879 = vld [vmem:[%s1875 + $0x18] sm:$0xff]
    %v1880 = vld [vmem:[%s1875 + $0x20] sm:$0xff]
    %v1881 = vld [vmem:[%s1875 + $0x28] sm:$0xff]
    %v1882 = vld [vmem:[%s1875 + $0x30] sm:$0xff]
    %v1883 = vld [vmem:[%s1875 + $0x38] sm:$0xff]
    %v1884 = vpack.c.bf16 %v1872, %v1871
    %1885 = vmatprep.subr.bf16.mxu0 %v840
    %1886 = vmatpush1.bf16.msra.mxu0 %v839
    %1887 = vmatprep.subr.bf16.mxu0 %v844
    %1888 = vmatpush1.bf16.msra.mxu0 %v843
    %1889 = vmatprep.subr.bf16.mxu0 %v848
    %1890 = vmatpush1.bf16.msra.mxu0 %v847
    %1891 = vmatprep.subr.bf16.mxu0 %v852
    %1892 = vmatpush1.bf16.msra.mxu0 %v851
    %1893 = vmatprep.subr.bf16.mxu0 %v856
    %1894 = vmatpush1.bf16.msra.mxu0 %v855
    %1895 = vmatprep.subr.bf16.mxu0 %v860
    %1896 = vmatpush1.bf16.msra.mxu0 %v859
    %1897 = vmatprep.subr.bf16.mxu0 %v864
    %1898 = vmatpush1.bf16.msra.mxu0 %v863
    %1899 = vmatprep.subr.bf16.mxu0 %v868
    %1900 = vmatpush1.bf16.msra.mxu0 %v867
    %1901 = vmatprep.subr.bf16.mxu0 0
    %1902 = vmatpush1.bf16.msra.mxu0 0
    %1903 = vmatprep.subr.bf16.mxu0 0
    %1904 = vmatpush1.bf16.msra.mxu0 0
    %1905 = vmatprep.subr.bf16.mxu0 0
    %1906 = vmatpush1.bf16.msra.mxu0 0
    %1907 = vmatprep.subr.bf16.mxu0 0
    %1908 = vmatpush1.bf16.msra.mxu0 0
    %1909 = vmatprep.subr.bf16.mxu0 0
    %1910 = vmatpush1.bf16.msra.mxu0 0
    %1911 = vmatprep.subr.bf16.mxu0 0
    %1912 = vmatpush1.bf16.msra.mxu0 0
    %1913 = vmatprep.subr.bf16.mxu0 0
    %1914 = vmatpush1.bf16.msra.mxu0 0
    %1915 = vmatprep.subr.bf16.mxu0 0
    %1916 = vmatpush1.bf16.msra.mxu0 0
    %1917 = vmatprep.mubr.bf16.mxu0 0
    %1918 = vmatmul.mubr.bf16.gmra.mrb[0].mxu0 %v1884
    %v1919 = vpop.f32.mrb[0].mxu0
    %v1920 = vadd.f32 0.0, %v1919
    %v1921 = vpop.f32.mrb[0].mxu0
    %v1922 = vadd.f32 0.0, %v1921
    %v1923 = vpop.f32.mrb[0].mxu0
    %v1924 = vadd.f32 0.0, %v1923
    %v1925 = vpop.f32.mrb[0].mxu0
    %v1926 = vadd.f32 0.0, %v1925
    %1927 = vdwg.mxu0
    %1928 = vmatprep.subr.bf16.mxu0 %v842
    %1929 = vmatpush1.bf16.msra.mxu0 %v841
    %1930 = vmatprep.subr.bf16.mxu0 %v846
    %1931 = vmatpush1.bf16.msra.mxu0 %v845
    %1932 = vmatprep.subr.bf16.mxu0 %v850
    %1933 = vmatpush1.bf16.msra.mxu0 %v849
    %1934 = vmatprep.subr.bf16.mxu0 %v854
    %1935 = vmatpush1.bf16.msra.mxu0 %v853
    %1936 = vmatprep.subr.bf16.mxu0 %v858
    %1937 = vmatpush1.bf16.msra.mxu0 %v857
    %1938 = vmatprep.subr.bf16.mxu0 %v862
    %1939 = vmatpush1.bf16.msra.mxu0 %v861
    %1940 = vmatprep.subr.bf16.mxu0 %v866
    %1941 = vmatpush1.bf16.msra.mxu0 %v865
    %1942 = vmatprep.subr.bf16.mxu0 %v870
    %1943 = vmatpush1.bf16.msra.mxu0 %v869
    %1944 = vmatprep.subr.bf16.mxu0 0
    %1945 = vmatpush1.bf16.msra.mxu0 0
    %1946 = vmatprep.subr.bf16.mxu0 0
    %1947 = vmatpush1.bf16.msra.mxu0 0
    %1948 = vmatprep.subr.bf16.mxu0 0
    %1949 = vmatpush1.bf16.msra.mxu0 0
    %1950 = vmatprep.subr.bf16.mxu0 0
    %1951 = vmatpush1.bf16.msra.mxu0 0
    %1952 = vmatprep.subr.bf16.mxu0 0
    %1953 = vmatpush1.bf16.msra.mxu0 0
    %1954 = vmatprep.subr.bf16.mxu0 0
    %1955 = vmatpush1.bf16.msra.mxu0 0
    %1956 = vmatprep.subr.bf16.mxu0 0
    %1957 = vmatpush1.bf16.msra.mxu0 0
    %1958 = vmatprep.subr.bf16.mxu0 0
    %1959 = vmatpush1.bf16.msra.mxu0 0
    %1960 = vmatprep.mubr.bf16.mxu0 0
    %1961 = vmatmul.mubr.bf16.gmra.mrb[0].mxu0 %v1884
    %v1962 = vpop.f32.mrb[0].mxu0
    %v1963 = vadd.f32 0.0, %v1962
    %v1964 = vpop.f32.mrb[0].mxu0
    %v1965 = vadd.f32 0.0, %v1964
    %v1966 = vpop.f32.mrb[0].mxu0
    %v1967 = vadd.f32 0.0, %v1966
    %v1968 = vpop.f32.mrb[0].mxu0
    %v1969 = vadd.f32 0.0, %v1968
    %1970 = vdwg.mxu0
    %v1971 = vadd.f32 %v1876, %v1920
    %v1972 = vadd.f32 %v1877, %v1922
    %v1973 = vadd.f32 %v1878, %v1963
    %v1974 = vadd.f32 %v1879, %v1965
    %v1975 = vadd.f32 %v1880, %v1924
    %v1976 = vadd.f32 %v1881, %v1926
    %v1977 = vadd.f32 %v1882, %v1967
    %v1978 = vadd.f32 %v1883, %v1969
    %v1979 = vxor.u32 %v1971, 2147483648
    %v1980 = vxor.u32 %v1975, 2147483648
    %v1981 = vmul.f32 %v1979, 1.442695
    %v1982 = vpow.pop %v1981
    %v1983 = vmul.f32 %v1980, 1.442695
    %v1984 = vpow.pop %v1983
    %v1985 = vadd.f32 %v1982, 1.0
    %v1986 = vadd.f32 %v1984, 1.0
    %v1987 = vrcp.pop %v1985
    %v1988 = vmul.f32 1.0, %v1987
    %v1989 = vrcp.pop %v1986
    %v1990 = vmul.f32 1.0, %v1989
    %v1991 = vxor.u32 %v1972, 2147483648
    %v1992 = vxor.u32 %v1976, 2147483648
    %v1993 = vmul.f32 %v1991, 1.442695
    %v1994 = vpow.pop %v1993
    %v1995 = vmul.f32 %v1992, 1.442695
    %v1996 = vpow.pop %v1995
    %v1997 = vadd.f32 %v1994, 1.0
    %v1998 = vadd.f32 %v1996, 1.0
    %v1999 = vrcp.pop %v1997
    %v2000 = vmul.f32 1.0, %v1999
    %v2001 = vrcp.pop %v1998
    %v2002 = vmul.f32 1.0, %v2001
    %v2003 = vtanh.pop %v1973
    %v2004 = vtanh.pop %v1977
    %v2005 = vxor.u32 %v1974, 2147483648
    %v2006 = vxor.u32 %v1978, 2147483648
    %v2007 = vmul.f32 %v2005, 1.442695
    %v2008 = vpow.pop %v2007
    %v2009 = vmul.f32 %v2006, 1.442695
    %v2010 = vpow.pop %v2009
    %v2011 = vadd.f32 %v2008, 1.0
    %v2012 = vadd.f32 %v2010, 1.0
    %v2013 = vrcp.pop %v2011
    %v2014 = vmul.f32 1.0, %v2013
    %v2015 = vrcp.pop %v2012
    %v2016 = vmul.f32 1.0, %v2015
    %v2017 = vmul.f32 %v2000, %v1873
    %v2018 = vmul.f32 %v2002, %v1874
    %v2019 = vmul.f32 %v1988, %v2003
    %v2020 = vmul.f32 %v1990, %v2004
    %v2021 = vadd.f32 %v2017, %v2019
    %v2022 = vadd.f32 %v2018, %v2020
    %v2023 = vtanh.pop %v2021
    %v2024 = vtanh.pop %v2022
    %v2025 = vmul.f32 %v2014, %v2023
    %v2026 = vmul.f32 %v2016, %v2024
    %v2027 = vpack.c.bf16 %v2026, %v2025
    %s2028 = scalar_lea.vmem [#allocation3], 48
    %2029 = vst [vmem:[%s2028] sm:$0xff] %v2027
    %s2030 = sadd.s32 %s729, 6
    %p2031 = scmp.lt.s32.totalorder %s2030, 8
    %s2032 = scalar_select %p2031, 1, 0
    %v2033 = vstv %s2032
    %vm2034 = vcmp.eq.s32.totalorder %v2033, 1
    %v2035 = vsel %vm2034, %v2025, %v1871
    %v2036 = vsel %vm2034, %v2026, %v1872
    %v2037 = vsel %vm2034, %v2021, %v1873
    %v2038 = vsel %vm2034, %v2022, %v1874
    %s2039 = scalar_lea.vmem [#allocation2], 448
    %v2040 = vld [vmem:[%s2039] sm:$0xff]
    %v2041 = vld [vmem:[%s2039 + $0x8] sm:$0xff]
    %v2042 = vld [vmem:[%s2039 + $0x10] sm:$0xff]
    %v2043 = vld [vmem:[%s2039 + $0x18] sm:$0xff]
    %v2044 = vld [vmem:[%s2039 + $0x20] sm:$0xff]
    %v2045 = vld [vmem:[%s2039 + $0x28] sm:$0xff]
    %v2046 = vld [vmem:[%s2039 + $0x30] sm:$0xff]
    %v2047 = vld [vmem:[%s2039 + $0x38] sm:$0xff]
    %v2048 = vpack.c.bf16 %v2036, %v2035
    %2049 = vmatprep.subr.bf16.mxu0 %v840
    %2050 = vmatpush1.bf16.msra.mxu0 %v839
    %2051 = vmatprep.subr.bf16.mxu0 %v844
    %2052 = vmatpush1.bf16.msra.mxu0 %v843
    %2053 = vmatprep.subr.bf16.mxu0 %v848
    %2054 = vmatpush1.bf16.msra.mxu0 %v847
    %2055 = vmatprep.subr.bf16.mxu0 %v852
    %2056 = vmatpush1.bf16.msra.mxu0 %v851
    %2057 = vmatprep.subr.bf16.mxu0 %v856
    %2058 = vmatpush1.bf16.msra.mxu0 %v855
    %2059 = vmatprep.subr.bf16.mxu0 %v860
    %2060 = vmatpush1.bf16.msra.mxu0 %v859
    %2061 = vmatprep.subr.bf16.mxu0 %v864
    %2062 = vmatpush1.bf16.msra.mxu0 %v863
    %2063 = vmatprep.subr.bf16.mxu0 %v868
    %2064 = vmatpush1.bf16.msra.mxu0 %v867
    %2065 = vmatprep.subr.bf16.mxu0 0
    %2066 = vmatpush1.bf16.msra.mxu0 0
    %2067 = vmatprep.subr.bf16.mxu0 0
    %2068 = vmatpush1.bf16.msra.mxu0 0
    %2069 = vmatprep.subr.bf16.mxu0 0
    %2070 = vmatpush1.bf16.msra.mxu0 0
    %2071 = vmatprep.subr.bf16.mxu0 0
    %2072 = vmatpush1.bf16.msra.mxu0 0
    %2073 = vmatprep.subr.bf16.mxu0 0
    %2074 = vmatpush1.bf16.msra.mxu0 0
    %2075 = vmatprep.subr.bf16.mxu0 0
    %2076 = vmatpush1.bf16.msra.mxu0 0
    %2077 = vmatprep.subr.bf16.mxu0 0
    %2078 = vmatpush1.bf16.msra.mxu0 0
    %2079 = vmatprep.subr.bf16.mxu0 0
    %2080 = vmatpush1.bf16.msra.mxu0 0
    %2081 = vmatprep.mubr.bf16.mxu0 0
    %2082 = vmatmul.mubr.bf16.gmra.mrb[0].mxu0 %v2048
    %v2083 = vpop.f32.mrb[0].mxu0
    %v2084 = vadd.f32 0.0, %v2083
    %v2085 = vpop.f32.mrb[0].mxu0
    %v2086 = vadd.f32 0.0, %v2085
    %v2087 = vpop.f32.mrb[0].mxu0
    %v2088 = vadd.f32 0.0, %v2087
    %v2089 = vpop.f32.mrb[0].mxu0
    %v2090 = vadd.f32 0.0, %v2089
    %2091 = vdwg.mxu0
    %2092 = vmatprep.subr.bf16.mxu0 %v842
    %2093 = vmatpush1.bf16.msra.mxu0 %v841
    %2094 = vmatprep.subr.bf16.mxu0 %v846
    %2095 = vmatpush1.bf16.msra.mxu0 %v845
    %2096 = vmatprep.subr.bf16.mxu0 %v850
    %2097 = vmatpush1.bf16.msra.mxu0 %v849
    %2098 = vmatprep.subr.bf16.mxu0 %v854
    %2099 = vmatpush1.bf16.msra.mxu0 %v853
    %2100 = vmatprep.subr.bf16.mxu0 %v858
    %2101 = vmatpush1.bf16.msra.mxu0 %v857
    %2102 = vmatprep.subr.bf16.mxu0 %v862
    %2103 = vmatpush1.bf16.msra.mxu0 %v861
    %2104 = vmatprep.subr.bf16.mxu0 %v866
    %2105 = vmatpush1.bf16.msra.mxu0 %v865
    %2106 = vmatprep.subr.bf16.mxu0 %v870
    %2107 = vmatpush1.bf16.msra.mxu0 %v869
    %2108 = vmatprep.subr.bf16.mxu0 0
    %2109 = vmatpush1.bf16.msra.mxu0 0
    %2110 = vmatprep.subr.bf16.mxu0 0
    %2111 = vmatpush1.bf16.msra.mxu0 0
    %2112 = vmatprep.subr.bf16.mxu0 0
    %2113 = vmatpush1.bf16.msra.mxu0 0
    %2114 = vmatprep.subr.bf16.mxu0 0
    %2115 = vmatpush1.bf16.msra.mxu0 0
    %2116 = vmatprep.subr.bf16.mxu0 0
    %2117 = vmatpush1.bf16.msra.mxu0 0
    %2118 = vmatprep.subr.bf16.mxu0 0
    %2119 = vmatpush1.bf16.msra.mxu0 0
    %2120 = vmatprep.subr.bf16.mxu0 0
    %2121 = vmatpush1.bf16.msra.mxu0 0
    %2122 = vmatprep.subr.bf16.mxu0 0
    %2123 = vmatpush1.bf16.msra.mxu0 0
    %2124 = vmatprep.mubr.bf16.mxu0 0
    %2125 = vmatmul.mubr.bf16.gmra.mrb[0].mxu0 %v2048
    %v2126 = vpop.f32.mrb[0].mxu0
    %v2127 = vadd.f32 0.0, %v2126
    %v2128 = vpop.f32.mrb[0].mxu0
    %v2129 = vadd.f32 0.0, %v2128
    %v2130 = vpop.f32.mrb[0].mxu0
    %v2131 = vadd.f32 0.0, %v2130
    %v2132 = vpop.f32.mrb[0].mxu0
    %v2133 = vadd.f32 0.0, %v2132
    %2134 = vdwg.mxu0
    %v2135 = vadd.f32 %v2040, %v2084
    %v2136 = vadd.f32 %v2041, %v2086
    %v2137 = vadd.f32 %v2042, %v2127
    %v2138 = vadd.f32 %v2043, %v2129
    %v2139 = vadd.f32 %v2044, %v2088
    %v2140 = vadd.f32 %v2045, %v2090
    %v2141 = vadd.f32 %v2046, %v2131
    %v2142 = vadd.f32 %v2047, %v2133
    %v2143 = vxor.u32 %v2135, 2147483648
    %v2144 = vxor.u32 %v2139, 2147483648
    %v2145 = vmul.f32 %v2143, 1.442695
    %v2146 = vpow.pop %v2145
    %v2147 = vmul.f32 %v2144, 1.442695
    %v2148 = vpow.pop %v2147
    %v2149 = vadd.f32 %v2146, 1.0
    %v2150 = vadd.f32 %v2148, 1.0
    %v2151 = vrcp.pop %v2149
    %v2152 = vmul.f32 1.0, %v2151
    %v2153 = vrcp.pop %v2150
    %v2154 = vmul.f32 1.0, %v2153
    %v2155 = vxor.u32 %v2136, 2147483648
    %v2156 = vxor.u32 %v2140, 2147483648
    %v2157 = vmul.f32 %v2155, 1.442695
    %v2158 = vpow.pop %v2157
    %v2159 = vmul.f32 %v2156, 1.442695
    %v2160 = vpow.pop %v2159
    %v2161 = vadd.f32 %v2158, 1.0
    %v2162 = vadd.f32 %v2160, 1.0
    %v2163 = vrcp.pop %v2161
    %v2164 = vmul.f32 1.0, %v2163
    %v2165 = vrcp.pop %v2162
    %v2166 = vmul.f32 1.0, %v2165
    %v2167 = vtanh.pop %v2137
    %v2168 = vtanh.pop %v2141
    %v2169 = vxor.u32 %v2138, 2147483648
    %v2170 = vxor.u32 %v2142, 2147483648
    %v2171 = vmul.f32 %v2169, 1.442695
    %v2172 = vpow.pop %v2171
    %v2173 = vmul.f32 %v2170, 1.442695
    %v2174 = vpow.pop %v2173
    %v2175 = vadd.f32 %v2172, 1.0
    %v2176 = vadd.f32 %v2174, 1.0
    %v2177 = vrcp.pop %v2175
    %v2178 = vmul.f32 1.0, %v2177
    %v2179 = vrcp.pop %v2176
    %v2180 = vmul.f32 1.0, %v2179
    %v2181 = vmul.f32 %v2164, %v2037
    %v2182 = vmul.f32 %v2166, %v2038
    %v2183 = vmul.f32 %v2152, %v2167
    %v2184 = vmul.f32 %v2154, %v2168
    %v2185 = vadd.f32 %v2181, %v2183
    %v2186 = vadd.f32 %v2182, %v2184
    %v2187 = vtanh.pop %v2185
    %v2188 = vtanh.pop %v2186
    %v2189 = vmul.f32 %v2178, %v2187
    %v2190 = vmul.f32 %v2180, %v2188
    %v2191 = vpack.c.bf16 %v2190, %v2189
    %s2192 = scalar_lea.vmem [#allocation3], 56
    %2193 = vst [vmem:[%s2192] sm:$0xff] %v2191
    %s2194 = sadd.s32 %s729, 7
    %p2195 = scmp.lt.s32.totalorder %s2194, 8
    %s2196 = scalar_select %p2195, 1, 0
    %v2197 = vstv %s2196
    %vm2198 = vcmp.eq.s32.totalorder %v2197, 1
    %v2199 = vsel %vm2198, %v2189, %v2035
    %v2200 = vsel %vm2198, %v2190, %v2036
    %v2201 = vsel %vm2198, %v2185, %v2037
    %v2202 = vsel %vm2198, %v2186, %v2038
    %2203 = vst [vmem:[#allocation4] sm:$0xff] %v2199
    %2204 = vst [vmem:[#allocation4 + $0x8] sm:$0xff] %v2200
    %2205 = vst [vmem:[#allocation5] sm:$0xff] %v2201
    %2206 = vst [vmem:[#allocation5 + $0x8] sm:$0xff] %v2202
    // Predicated region
    $region62: #{tpu_custom_call.1} parent=1 // pred_check
      %p2207 = pneg %p117
    $region63: #{tpu_custom_call.1} parent=1 // pred_check_branch
      %2209 = sbr.rel (%p2207) target = $region65
    $region64: #{tpu_custom_call.1} parent=1 // pred_region
      %2210 = vst [vmem:[#allocation18] sm:$0xff] %v2199
      %2211 = vst [vmem:[#allocation18 + $0x8] sm:$0xff] %v2200
      %2212 = vst [vmem:[#allocation20] sm:$0xff] %v2201
      %2213 = vst [vmem:[#allocation20 + $0x8] sm:$0xff] %v2202
    $region65: #{tpu_custom_call.1} parent=1 // pred_fallthru
      _
    %v2214 = vld [vmem:[#allocation3] sm:$0xff]
    %v2215 = vld [vmem:[#allocation3 + $0x8] sm:$0xff]
    %v2216 = vld [vmem:[#allocation3 + $0x10] sm:$0xff]
    %v2217 = vld [vmem:[#allocation3 + $0x18] sm:$0xff]
    %v2218 = vld [vmem:[#allocation3 + $0x20] sm:$0xff]
    %v2219 = vld [vmem:[#allocation3 + $0x28] sm:$0xff]
    %v2220 = vld [vmem:[#allocation3 + $0x30] sm:$0xff]
    %v2221 = vld [vmem:[#allocation3 + $0x38] sm:$0xff]
    %v2222 = vld [vmem:[#allocation15] sm:$0xf]
    %v2223 = vld [vmem:[#allocation15 + $0x4] sm:$0xf]
    %v2224 = vld [vmem:[#allocation15 + $0x8] sm:$0xf]
    %v2225 = vld [vmem:[#allocation15 + $0xc] sm:$0xf]
    %v2226 = vld [vmem:[#allocation15 + $0x10] sm:$0xf]
    %v2227 = vld [vmem:[#allocation15 + $0x14] sm:$0xf]
    %v2228 = vld [vmem:[#allocation15 + $0x18] sm:$0xf]
    %v2229 = vld [vmem:[#allocation15 + $0x1c] sm:$0xf]
    %v2230 = vld [vmem:[#allocation15 + $0x20] sm:$0xf]
    %v2231 = vld [vmem:[#allocation15 + $0x24] sm:$0xf]
    %v2232 = vld [vmem:[#allocation15 + $0x28] sm:$0xf]
    %v2233 = vld [vmem:[#allocation15 + $0x2c] sm:$0xf]
    %v2234 = vld [vmem:[#allocation15 + $0x30] sm:$0xf]
    %v2235 = vld [vmem:[#allocation15 + $0x34] sm:$0xf]
    %v2236 = vld [vmem:[#allocation15 + $0x38] sm:$0xf]
    %v2237 = vld [vmem:[#allocation15 + $0x3c] sm:$0xf]
    %v2238 = vld [vmem:[%s7] sm:$0x1]
    %v2240 = vlaneseq
    %v2241 = vshrl.u32 %v2240, 7
    %v2242 = vsub.s32 0, %v2241
    %v2243 = vrot.slane %v2238, %v2242
    %v2261 = vunpack.c.l.b16 %v2222
    %v2262 = vunpack.c.l.b16 %v2223
    %v2263 = vunpack.c.l.b16 %v2224
    %v2264 = vunpack.c.l.b16 %v2225
    %v2265 = vunpack.c.l.b16 %v2226
    %v2266 = vunpack.c.l.b16 %v2227
    %v2267 = vunpack.c.l.b16 %v2228
    %v2268 = vunpack.c.l.b16 %v2229
    %v2269 = vunpack.c.l.b16 %v2230
    %v2270 = vunpack.c.l.b16 %v2231
    %v2271 = vunpack.c.l.b16 %v2232
    %v2272 = vunpack.c.l.b16 %v2233
    %v2273 = vunpack.c.l.b16 %v2234
    %v2274 = vunpack.c.l.b16 %v2235
    %v2275 = vunpack.c.l.b16 %v2236
    %v2276 = vunpack.c.l.b16 %v2237
    %v2277 = vpack.c.b16 %v2262, %v2261
    %v2278 = vpack.c.b16 %v2264, %v2263
    %v2279 = vpack.c.b16 %v2266, %v2265
    %v2280 = vpack.c.b16 %v2268, %v2267
    %v2281 = vpack.c.b16 %v2270, %v2269
    %v2282 = vpack.c.b16 %v2272, %v2271
    %v2283 = vpack.c.b16 %v2274, %v2273
    %v2284 = vpack.c.b16 %v2276, %v2275
    %2293 = vmatprep.subr.bf16.mxu0 0
    %2294 = vmatpush1.bf16.msra.mxu0 %v2277
    %2295 = vmatprep.subr.bf16.mxu0 0
    %2296 = vmatpush1.bf16.msra.mxu0 %v2278
    %2297 = vmatprep.subr.bf16.mxu0 0
    %2298 = vmatpush1.bf16.msra.mxu0 %v2279
    %2299 = vmatprep.subr.bf16.mxu0 0
    %2300 = vmatpush1.bf16.msra.mxu0 %v2280
    %2301 = vmatprep.subr.bf16.mxu0 0
    %2302 = vmatpush1.bf16.msra.mxu0 %v2281
    %2303 = vmatprep.subr.bf16.mxu0 0
    %2304 = vmatpush1.bf16.msra.mxu0 %v2282
    %2305 = vmatprep.subr.bf16.mxu0 0
    %2306 = vmatpush1.bf16.msra.mxu0 %v2283
    %2307 = vmatprep.subr.bf16.mxu0 0
    %2308 = vmatpush1.bf16.msra.mxu0 %v2284
    %2309 = vmatprep.subr.bf16.mxu0 0
    %2310 = vmatpush1.bf16.msra.mxu0 0
    %2311 = vmatprep.subr.bf16.mxu0 0
    %2312 = vmatpush1.bf16.msra.mxu0 0
    %2313 = vmatprep.subr.bf16.mxu0 0
    %2314 = vmatpush1.bf16.msra.mxu0 0
    %2315 = vmatprep.subr.bf16.mxu0 0
    %2316 = vmatpush1.bf16.msra.mxu0 0
    %2317 = vmatprep.subr.bf16.mxu0 0
    %2318 = vmatpush1.bf16.msra.mxu0 0
    %2319 = vmatprep.subr.bf16.mxu0 0
    %2320 = vmatpush1.bf16.msra.mxu0 0
    %2321 = vmatprep.subr.bf16.mxu0 0
    %2322 = vmatpush1.bf16.msra.mxu0 0
    %2323 = vmatprep.subr.bf16.mxu0 0
    %2324 = vmatpush1.bf16.msra.mxu0 0
    %2325 = vmatprep.mubr.bf16.mxu0 0
    %2326 = vmatmul.mubr.bf16.gmra.mrb[0].mxu0 %v2214
    %v2327 = vpop.f32.mrb[0].mxu0
    %v2328 = vadd.f32 %v2243, %v2327
    %v2329 = vpop.f32.mrb[0].mxu0
    %v2330 = vpop.f32.mrb[0].mxu0
    %v2331 = vadd.f32 %v2243, %v2330
    %v2332 = vpop.f32.mrb[0].mxu0
    %2333 = vmatprep.mubr.bf16.mxu0 0
    %2334 = vmatmul.mubr.bf16.gmra.mrb[0].mxu0 %v2215
    %v2335 = vpop.f32.mrb[0].mxu0
    %v2336 = vadd.f32 %v2243, %v2335
    %v2337 = vpop.f32.mrb[0].mxu0
    %v2338 = vpop.f32.mrb[0].mxu0
    %v2339 = vadd.f32 %v2243, %v2338
    %v2340 = vpop.f32.mrb[0].mxu0
    %2341 = vmatprep.mubr.bf16.mxu0 0
    %2342 = vmatmul.mubr.bf16.gmra.mrb[0].mxu0 %v2216
    %v2343 = vpop.f32.mrb[0].mxu0
    %v2344 = vadd.f32 %v2243, %v2343
    %v2345 = vpop.f32.mrb[0].mxu0
    %v2346 = vpop.f32.mrb[0].mxu0
    %v2347 = vadd.f32 %v2243, %v2346
    %v2348 = vpop.f32.mrb[0].mxu0
    %2349 = vmatprep.mubr.bf16.mxu0 0
    %2350 = vmatmul.mubr.bf16.gmra.mrb[0].mxu0 %v2217
    %v2351 = vpop.f32.mrb[0].mxu0
    %v2352 = vadd.f32 %v2243, %v2351
    %v2353 = vpop.f32.mrb[0].mxu0
    %v2354 = vpop.f32.mrb[0].mxu0
    %v2355 = vadd.f32 %v2243, %v2354
    %v2356 = vpop.f32.mrb[0].mxu0
    %2357 = vmatprep.mubr.bf16.mxu0 0
    %2358 = vmatmul.mubr.bf16.gmra.mrb[0].mxu0 %v2218
    %v2359 = vpop.f32.mrb[0].mxu0
    %v2360 = vadd.f32 %v2243, %v2359
    %v2361 = vpop.f32.mrb[0].mxu0
    %v2362 = vpop.f32.mrb[0].mxu0
    %v2363 = vadd.f32 %v2243, %v2362
    %v2364 = vpop.f32.mrb[0].mxu0
    %2365 = vmatprep.mubr.bf16.mxu0 0
    %2366 = vmatmul.mubr.bf16.gmra.mrb[0].mxu0 %v2219
    %v2367 = vpop.f32.mrb[0].mxu0
    %v2368 = vadd.f32 %v2243, %v2367
    %v2369 = vpop.f32.mrb[0].mxu0
    %v2370 = vpop.f32.mrb[0].mxu0
    %v2371 = vadd.f32 %v2243, %v2370
    %v2372 = vpop.f32.mrb[0].mxu0
    %2373 = vmatprep.mubr.bf16.mxu0 0
    %2374 = vmatmul.mubr.bf16.gmra.mrb[0].mxu0 %v2220
    %v2375 = vpop.f32.mrb[0].mxu0
    %v2376 = vadd.f32 %v2243, %v2375
    %v2377 = vpop.f32.mrb[0].mxu0
    %v2378 = vpop.f32.mrb[0].mxu0
    %v2379 = vadd.f32 %v2243, %v2378
    %v2380 = vpop.f32.mrb[0].mxu0
    %2381 = vmatprep.mubr.bf16.mxu0 0
    %2382 = vmatmul.mubr.bf16.gmra.mrb[0].mxu0 %v2221
    %v2383 = vpop.f32.mrb[0].mxu0
    %v2384 = vadd.f32 %v2243, %v2383
    %v2385 = vpop.f32.mrb[0].mxu0
    %v2386 = vpop.f32.mrb[0].mxu0
    %v2387 = vadd.f32 %v2243, %v2386
    %v2388 = vpop.f32.mrb[0].mxu0
    %2389 = vdwg.mxu0
    %2390 = vst [vmem:[#allocation17] sm:$0xff] %v2328
    %2391 = vst [vmem:[#allocation17 + $0x8] sm:$0xff] %v2331
    %2392 = vst [vmem:[#allocation17 + $0x10] sm:$0xff] %v2336
    %2393 = vst [vmem:[#allocation17 + $0x18] sm:$0xff] %v2339
    %2394 = vst [vmem:[#allocation17 + $0x20] sm:$0xff] %v2344
    %2395 = vst [vmem:[#allocation17 + $0x28] sm:$0xff] %v2347
    %2396 = vst [vmem:[#allocation17 + $0x30] sm:$0xff] %v2352
    %2397 = vst [vmem:[#allocation17 + $0x38] sm:$0xff] %v2355
    %2398 = vst [vmem:[#allocation17 + $0x40] sm:$0xff] %v2360
    %2399 = vst [vmem:[#allocation17 + $0x48] sm:$0xff] %v2363
    %2400 = vst [vmem:[#allocation17 + $0x50] sm:$0xff] %v2368
    %2401 = vst [vmem:[#allocation17 + $0x58] sm:$0xff] %v2371
    %2402 = vst [vmem:[#allocation17 + $0x60] sm:$0xff] %v2376
    %2403 = vst [vmem:[#allocation17 + $0x68] sm:$0xff] %v2379
    %2404 = vst [vmem:[#allocation17 + $0x70] sm:$0xff] %v2384
    %2405 = vst [vmem:[#allocation17 + $0x78] sm:$0xff] %v2387
    // Predicated region
    $region66: #{tpu_custom_call.1} parent=1 // pred_check
      _
    $region67: #{tpu_custom_call.1} parent=1 // pred_check_branch
      %2407 = sbr.rel (0) target = $region69
    $region68: #{tpu_custom_call.1} parent=1 // pred_region
      %s2409 = ssub.s32 2048, 2048
      %2410 = vsyncadd [#allocation8], %s2409
      %s2411 = sshll.u32 [#allocation17], 4
      %s2412 = int_to_ptr.vmem [resolvable:$true] %s2411
      %2417 = dma.vmem_to_hbm [thread:$0]  %s2412, 2048, %s8, [#allocation8], 128, 128, 8
    $region69: #{tpu_custom_call.1} parent=1 // pred_fallthru
      _
    // Predicated region
    $region70: #{tpu_custom_call.1} parent=1 // pred_check
      _
    $region71: #{tpu_custom_call.1} parent=1 // pred_check_branch
      %2419 = sbr.rel (0) target = $region73
    $region72: #{tpu_custom_call.1} parent=1 // pred_region
      %s2421 = ssub.s32 256, 256
      %2422 = vsyncadd [#allocation19], %s2421
      %s2423 = sshll.u32 [#allocation18], 4
      %s2424 = int_to_ptr.vmem [resolvable:$true] %s2423
      %2429 = dma.vmem_to_hbm [thread:$0]  %s2424, 256, %s9, [#allocation19], 128, 128, 8
    $region73: #{tpu_custom_call.1} parent=1 // pred_fallthru
      _
    // Predicated region
    $region74: #{tpu_custom_call.1} parent=1 // pred_check
      _
    $region75: #{tpu_custom_call.1} parent=1 // pred_check_branch
      %2431 = sbr.rel (0) target = $region77
    $region76: #{tpu_custom_call.1} parent=1 // pred_region
      %s2433 = ssub.s32 256, 256
      %2434 = vsyncadd [#allocation19], %s2433
      %s2435 = sshll.u32 [#allocation20], 4
      %s2436 = int_to_ptr.vmem [resolvable:$true] %s2435
      %2441 = dma.vmem_to_hbm [thread:$0]  %s2436, 256, %s10, [#allocation19], 128, 128, 8
    $region77: #{tpu_custom_call.1} parent=1 // pred_fallthru
      _
    // Predicated region
    $region78: #{tpu_custom_call.1} parent=1 // pred_check
      _
    $region79: #{tpu_custom_call.1} parent=1 // pred_check_branch
      %2443 = sbr.rel (0) target = $region81
    $region80: #{tpu_custom_call.1} parent=1 // pred_region
      %2444 = dma.done [#allocation8], 2048
    $region81: #{tpu_custom_call.1} parent=1 // pred_fallthru
      _
    // Predicated region
    $region82: #{tpu_custom_call.1} parent=1 // pred_check
      _
    $region83: #{tpu_custom_call.1} parent=1 // pred_check_branch
      %2446 = sbr.rel (0) target = $region85
    $region84: #{tpu_custom_call.1} parent=1 // pred_region
      %2447 = dma.done [#allocation19], 256
    $region85: #{tpu_custom_call.1} parent=1 // pred_fallthru
      _
    // Predicated region
    $region86: #{tpu_custom_call.1} parent=1 // pred_check
      _
    $region87: #{tpu_custom_call.1} parent=1 // pred_check_branch
      %2449 = sbr.rel (0) target = $region89
    $region88: #{tpu_custom_call.1} parent=1 // pred_region
      %2450 = dma.done [#allocation19], 256
    $region89: #{tpu_custom_call.1} parent=1 // pred_fallthru
      _
    %2451 = vsyncpa [#allocation7], 1
    %2452 = vsyncpa [#allocation10], 1
    %2453 = vsyncpa [#allocation13], 1
    %2454 = vsyncpa [#allocation16], 1
    %2455 = vsyncpa [#allocation8], 1
    %2456 = vsyncpa [#allocation19], 1

</llo_original>
